<compile_context>
chip_gen: v6e
topology: v6e:2x2x1
jax: 0.10.0
libtpu: 0.0.40
codegen_flags: <defaults>
</compile_context>

<pallas_src>
import functools
import math

import jax
import jax.numpy as jnp
from jax.experimental import pallas as pl
from jax.experimental.pallas import tpu as pltpu

NEG_INF = -1e9  # large-negative additive mask; avoids -inf + -inf -> NaN


# ----------------------------- shared math helpers ---------------------------

def _layer_norm(x, w, b, eps):
    mu = jnp.mean(x, axis=-1, keepdims=True)
    var = jnp.mean(jnp.square(x - mu), axis=-1, keepdims=True)
    return (x - mu) * jax.lax.rsqrt(var + eps) * w + b


def _allowed_mask(S, prefix_width, attn_window):
    """(S, S) boolean visibility mask, mirroring the torch buffer construction.

    Note: the attn_window branch rebuilds from a fresh causal mask, silently
    discarding prefix_width -- same behavior as the torch __init__.
    """
    rows = jax.lax.broadcasted_iota(jnp.int32, (S, S), 0)
    cols = jax.lax.broadcasted_iota(jnp.int32, (S, S), 1)
    allowed = cols <= rows                                    # causal
    if prefix_width:
        assert prefix_width >= 1
        allowed = jnp.logical_or(allowed, cols < prefix_width + 1)
    if attn_window and attn_window > 0:
        allowed = cols <= rows
        blocked = (rows >= attn_window + 1) & (cols >= 1) & (cols <= rows - attn_window)
        allowed = jnp.logical_and(allowed, jnp.logical_not(blocked))
    return allowed


# --------------------------------- kernel ------------------------------------

def decoder_kernel(x_ref, attn_add_ref,
                   ln1_w_ref, ln1_b_ref,
                   c_attn_w_ref, c_attn_b_ref,
                   c_proj_w_ref, c_proj_b_ref,
                   ln2_w_ref, ln2_b_ref,
                   fc_w_ref, fc_b_ref,
                   mlp_proj_w_ref, mlp_proj_b_ref,
                   lnf_w_ref, lnf_b_ref,
                   out_ref,
                   bias_ref, ctx_ref,
                   *, batch, seq, num_heads, eps, prefix_width, attn_window):
    layer = pl.program_id(0)
    n_layers = pl.num_programs(0)
    B, S, H = batch, seq, num_heads

    @pl.when(layer == 0)
    def _():
        # seed the resident residual stream (out VMEM block, constant index)
        out_ref[...] = x_ref[...]
        # build the (B, S, S) additive bias ONCE per forward, not per layer
        allowed = _allowed_mask(S, prefix_width, attn_window)           # (S, S)
        bias_ref[...] = jnp.where(allowed[None, :, :], attn_add_ref[...], NEG_INF)

    x = out_ref[...]                                  # (B*S, D) f32 residual stream
    D = x.shape[-1]
    dh = D // H
    scale = 1.0 / math.sqrt(dh)

    # ---- ln_1 + fused QKV (Conv1D: y = x @ W + b), batch-folded M = B*S ----
    hn = _layer_norm(x, ln1_w_ref[0], ln1_b_ref[0], eps)
    qkv = jnp.dot(hn.astype(jnp.bfloat16), c_attn_w_ref[0],
                  preferred_element_type=jnp.float32) + c_attn_b_ref[0]
    q2 = qkv[:, 0 * D:1 * D] * scale        # fold 1/sqrt(dh) into q (small tensor)
    k2 = qkv[:, 1 * D:2 * D]
    v2 = qkv[:, 2 * D:3 * D]

    # ---- attention core: per batch element, all heads in one 3-D contraction
    for b in range(B):   # static unroll (B is a compile-time constant)
        lo, hi = b * S, (b + 1) * S
        qb = pltpu.einshape("shd->hsd", q2[lo:hi].reshape(S, H, dh).astype(jnp.bfloat16))
        kb = pltpu.einshape("shd->hsd", k2[lo:hi].reshape(S, H, dh).astype(jnp.bfloat16))
        vb = pltpu.einshape("shd->hsd", v2[lo:hi].reshape(S, H, dh).astype(jnp.bfloat16))
        s = jnp.einsum('hqd,hkd->hqk', qb, kb,
                       preferred_element_type=jnp.float32)
        s = s + bias_ref[b][None]                               # (H, S, S)
        m = jnp.max(s, axis=-1, keepdims=True)
        e = jnp.exp(s - m)
        p = e * pl.reciprocal(jnp.sum(e, axis=-1, keepdims=True), approx=True)
        c = jnp.einsum('hqk,hkd->hqd', p.astype(jnp.bfloat16), vb,
                       preferred_element_type=jnp.float32)
        ctx_ref[lo:hi, :] = pltpu.einshape("hsd->shd", c).reshape(S, D)

    # output projection at full M = B*S occupancy
    attn_out = jnp.dot(ctx_ref[...].astype(jnp.bfloat16), c_proj_w_ref[0],
                       preferred_element_type=jnp.float32) + c_proj_b_ref[0]
    x = x + attn_out

    # ---- ln_2 + MLP ----
    h2 = _layer_norm(x, ln2_w_ref[0], ln2_b_ref[0], eps)
    ff = jnp.dot(h2.astype(jnp.bfloat16), fc_w_ref[0],
                 preferred_element_type=jnp.float32) + fc_b_ref[0]
    ff = jax.nn.gelu(ff, approximate=True)
    ff = jnp.dot(ff.astype(jnp.bfloat16), mlp_proj_w_ref[0],
                 preferred_element_type=jnp.float32) + mlp_proj_b_ref[0]
    x = x + ff

    @pl.when(layer < n_layers - 1)
    def _():
        out_ref[...] = x                               # keep residual resident

    @pl.when(layer == n_layers - 1)
    def _():
        # fused final LayerNorm; single HBM writeback at end of grid
        out_ref[...] = _layer_norm(x, lnf_w_ref[...], lnf_b_ref[...], eps
                                   ).astype(out_ref.dtype)


# ------------------------------ pallas wrapper --------------------------------

def bert_ar_decoder_forward(input_embedding, attention_mask, params, *,
                            num_heads, eps, prefix_width=None, attn_window=None):
    """attention_mask is a 0/1 pad mask (B, S); converted to an additive mask."""
    B, S, D = input_embedding.shape
    L = params["c_attn_w"].shape[0]
    I = params["fc_w"].shape[-1]

    attn_add = ((1.0 - attention_mask.astype(jnp.float32)) * NEG_INF).reshape(B, 1, S)
    x2d = input_embedding.astype(jnp.float32).reshape(B * S, D)

    kernel = functools.partial(decoder_kernel, batch=B, seq=S, num_heads=num_heads,
                               eps=eps, prefix_width=prefix_width,
                               attn_window=attn_window)

    def per_layer(shape):
        return pl.BlockSpec(shape, lambda l: (l, 0, 0))

    def shared2(shape):
        return pl.BlockSpec(shape, lambda l: (0, 0))

    def shared3(shape):
        return pl.BlockSpec(shape, lambda l: (0, 0, 0))

    in_specs = [
        shared2((B * S, D)),                                   # x (embedding)
        shared3((B, 1, S)),                                    # additive pad mask
        per_layer((1, 1, D)), per_layer((1, 1, D)),            # ln_1 w, b
        per_layer((1, D, 3 * D)), per_layer((1, 1, 3 * D)),    # c_attn w, b
        per_layer((1, D, D)), per_layer((1, 1, D)),            # attn c_proj w, b
        per_layer((1, 1, D)), per_layer((1, 1, D)),            # ln_2 w, b
        per_layer((1, D, I)), per_layer((1, 1, I)),            # mlp c_fc w, b
        per_layer((1, I, D)), per_layer((1, 1, D)),            # mlp c_proj w, b
        shared2((1, D)), shared2((1, D)),                      # final LayerNorm w, b
    ]

    out = pl.pallas_call(
        kernel,
        out_shape=jax.ShapeDtypeStruct((B * S, D), jnp.float32),
        grid=(L,),
        in_specs=in_specs,
        out_specs=shared2((B * S, D)),                         # resident residual stream
        scratch_shapes=[
            pltpu.VMEM((B, S, S), jnp.float32),                # additive bias (built once)
            pltpu.VMEM((B * S, D), jnp.float32),               # per-layer attention context
        ],
        input_output_aliases={0: 0},                           # reuse the activation buffer
        compiler_params=pltpu.CompilerParams(
            dimension_semantics=("arbitrary",),
            vmem_limit_bytes=48 * 1024 * 1024),
    )(x2d, attn_add,
      params["ln1_w"], params["ln1_b"],
      params["c_attn_w"], params["c_attn_b"],
      params["c_proj_w"], params["c_proj_b"],
      params["ln2_w"], params["ln2_b"],
      params["fc_w"], params["fc_b"],
      params["mlp_proj_w"], params["mlp_proj_b"],
      params["lnf_w"], params["lnf_b"])
    return out.reshape(B, S, D)


# --------------------------- params / reference -------------------------------

def init_params(key, n_layers, D, I, init_range=0.02):
    keys = jax.random.split(key, 4 * n_layers)
    c_attn_w, c_proj_w, fc_w, mlp_proj_w = [], [], [], []
    for li in range(n_layers):
        k0, k1, k2, k3 = keys[4 * li:4 * li + 4]
        c_attn_w.append(init_range * jax.random.normal(k0, (D, 3 * D), jnp.float32))
        c_proj_w.append((init_range / math.sqrt(2 * n_layers))
                        * jax.random.normal(k1, (D, D), jnp.float32))
        fc_w.append(init_range * jax.random.normal(k2, (D, I), jnp.float32))
        mlp_proj_w.append((init_range / math.sqrt(2 * n_layers))
                          * jax.random.normal(k3, (I, D), jnp.float32))
    L = n_layers
    return {
        "ln1_w": jnp.ones((L, 1, D), jnp.float32),
        "ln1_b": jnp.zeros((L, 1, D), jnp.float32),
        "c_attn_w": jnp.stack(c_attn_w).astype(jnp.bfloat16),
        "c_attn_b": jnp.zeros((L, 1, 3 * D), jnp.float32),
        "c_proj_w": jnp.stack(c_proj_w).astype(jnp.bfloat16),
        "c_proj_b": jnp.zeros((L, 1, D), jnp.float32),
        "ln2_w": jnp.ones((L, 1, D), jnp.float32),
        "ln2_b": jnp.zeros((L, 1, D), jnp.float32),
        "fc_w": jnp.stack(fc_w).astype(jnp.bfloat16),
        "fc_b": jnp.zeros((L, 1, I), jnp.float32),
        "mlp_proj_w": jnp.stack(mlp_proj_w).astype(jnp.bfloat16),
        "mlp_proj_b": jnp.zeros((L, 1, D), jnp.float32),
        "lnf_w": jnp.ones((1, D), jnp.float32),
        "lnf_b": jnp.zeros((1, D), jnp.float32),
    }


def reference_forward(input_embedding, attention_mask, params, *, num_heads, eps,
                      prefix_width=None, attn_window=None):
    """Pure-JAX reference with the same bf16-matmul / f32-accumulate recipe."""
    B, S, D = input_embedding.shape
    L = params["c_attn_w"].shape[0]
    H = num_heads
    dh = D // H
    scale = 1.0 / math.sqrt(dh)
    attn_add = ((1.0 - attention_mask.astype(jnp.float32)) * NEG_INF).reshape(B, 1, S)
    allowed = _allowed_mask(S, prefix_width, attn_window)
    bias = jnp.where(allowed[None, :, :], attn_add, NEG_INF)      # (B, S, S)
    x = input_embedding.astype(jnp.float32).reshape(B * S, D)
    for l in range(L):
        hn = _layer_norm(x, params["ln1_w"][l], params["ln1_b"][l], eps)
        qkv = jnp.dot(hn.astype(jnp.bfloat16), params["c_attn_w"][l],
                      preferred_element_type=jnp.float32) + params["c_attn_b"][l]
        q = (qkv[:, :D] * scale).reshape(B, S, H, dh).astype(jnp.bfloat16)
        k = qkv[:, D:2 * D].reshape(B, S, H, dh).astype(jnp.bfloat16)
        v = qkv[:, 2 * D:].reshape(B, S, H, dh).astype(jnp.bfloat16)
        s = jnp.einsum('bqhd,bkhd->bhqk', q, k,
                       preferred_element_type=jnp.float32) + bias[:, None]
        p = jax.nn.softmax(s, axis=-1)
        ctx = jnp.einsum('bhqk,bkhd->bqhd', p.astype(jnp.bfloat16), v,
                         preferred_element_type=jnp.float32).reshape(B * S, D)
        attn_out = jnp.dot(ctx.astype(jnp.bfloat16), params["c_proj_w"][l],
                           preferred_element_type=jnp.float32) + params["c_proj_b"][l]
        x = x + attn_out
        h2 = _layer_norm(x, params["ln2_w"][l], params["ln2_b"][l], eps)
        ff = jnp.dot(h2.astype(jnp.bfloat16), params["fc_w"][l],
                     preferred_element_type=jnp.float32) + params["fc_b"][l]
        ff = jax.nn.gelu(ff, approximate=True)
        ff = jnp.dot(ff.astype(jnp.bfloat16), params["mlp_proj_w"][l],
                     preferred_element_type=jnp.float32) + params["mlp_proj_b"][l]
        x = x + ff
    x = _layer_norm(x, params["lnf_w"], params["lnf_b"], eps)
    return x.reshape(B, S, D)


# ----------------------------------- main -------------------------------------

if __name__ == "__main__":
    B, S, D, H = 2, 16, 128, 4        # batch, seq, hidden (lane-dense), heads
    I = 4 * D                         # GPT2 MLP inner dim
    N_LAYERS = 2
    EPS = 1e-12                       # BertConfig.layer_norm_eps default

    key = jax.random.PRNGKey(0)
    k_in, k_param = jax.random.split(key)
    input_embedding = jax.random.normal(k_in, (B, S, D), dtype=jnp.float32)
    attention_mask = jnp.ones((B, S), dtype=jnp.float32)
    attention_mask = attention_mask.at[1, -3:].set(0.0)   # some padded keys

    params = init_params(k_param, N_LAYERS, D, I)

    # reference first (the kernel aliases / may donate its activation buffer)
    ref = jax.block_until_ready(
        reference_forward(input_embedding, attention_mask, params,
                          num_heads=H, eps=EPS))

    out = bert_ar_decoder_forward(input_embedding, attention_mask, params,
                                  num_heads=H, eps=EPS,
                                  prefix_width=None, attn_window=None)
    out = jax.block_until_ready(out)

    assert out.shape == (B, S, D)
    assert bool(jnp.all(jnp.isfinite(out)))
    max_err = float(jnp.max(jnp.abs(out - ref)))
    assert max_err < 5e-2, f"mismatch vs pure-JAX reference: max abs err {max_err}"
    print("KERNEL_OK")
</pallas_src>

<mosaic_0001>
module attributes {stable_mosaic.version = 11 : i64} {
  func.func @decoder_kernel(%arg0: i32, %arg1: memref<32x128xf32, #tpu.memory_space<vmem>>, %arg2: memref<2x1x16xf32, #tpu.memory_space<vmem>>, %arg3: memref<1x1x128xf32, #tpu.memory_space<vmem>>, %arg4: memref<1x1x128xf32, #tpu.memory_space<vmem>>, %arg5: memref<1x128x384xbf16, #tpu.memory_space<vmem>>, %arg6: memref<1x1x384xf32, #tpu.memory_space<vmem>>, %arg7: memref<1x128x128xbf16, #tpu.memory_space<vmem>>, %arg8: memref<1x1x128xf32, #tpu.memory_space<vmem>>, %arg9: memref<1x1x128xf32, #tpu.memory_space<vmem>>, %arg10: memref<1x1x128xf32, #tpu.memory_space<vmem>>, %arg11: memref<1x128x512xbf16, #tpu.memory_space<vmem>>, %arg12: memref<1x1x512xf32, #tpu.memory_space<vmem>>, %arg13: memref<1x512x128xbf16, #tpu.memory_space<vmem>>, %arg14: memref<1x1x128xf32, #tpu.memory_space<vmem>>, %arg15: memref<1x128xf32, #tpu.memory_space<vmem>>, %arg16: memref<1x128xf32, #tpu.memory_space<vmem>>, %arg17: memref<32x128xf32, #tpu.memory_space<vmem>>, %arg18: memref<2x16x16xf32, #tpu.memory_space<vmem>>, %arg19: memref<32x128xf32, #tpu.memory_space<vmem>>) attributes {dimension_semantics = [#tpu.dimension_semantics<arbitrary>], iteration_bounds = array<i64: 2>, scalar_prefetch = 0 : i64, scratch_operands = 2 : i64, tpu.core_type = #tpu.core_type<tc>, window_params = [{pipeline_mode = #tpu.pipeline_mode<synchronous>, transform_indices = @transform_0, window_bounds = array<i64: 32, 128>}, {pipeline_mode = #tpu.pipeline_mode<synchronous>, transform_indices = @transform_1, window_bounds = array<i64: 2, 1, 16>}, {transform_indices = @transform_2, window_bounds = array<i64: 1, 1, 128>}, {transform_indices = @transform_3, window_bounds = array<i64: 1, 1, 128>}, {transform_indices = @transform_4, window_bounds = array<i64: 1, 128, 384>}, {transform_indices = @transform_5, window_bounds = array<i64: 1, 1, 384>}, {transform_indices = @transform_6, window_bounds = array<i64: 1, 128, 128>}, {transform_indices = @transform_7, window_bounds = array<i64: 1, 1, 128>}, {transform_indices = @transform_8, window_bounds = array<i64: 1, 1, 128>}, {transform_indices = @transform_9, window_bounds = array<i64: 1, 1, 128>}, {transform_indices = @transform_10, window_bounds = array<i64: 1, 128, 512>}, {transform_indices = @transform_11, window_bounds = array<i64: 1, 1, 512>}, {transform_indices = @transform_12, window_bounds = array<i64: 1, 512, 128>}, {transform_indices = @transform_13, window_bounds = array<i64: 1, 1, 128>}, {pipeline_mode = #tpu.pipeline_mode<synchronous>, transform_indices = @transform_14, window_bounds = array<i64: 1, 128>}, {pipeline_mode = #tpu.pipeline_mode<synchronous>, transform_indices = @transform_15, window_bounds = array<i64: 1, 128>}, {pipeline_mode = #tpu.pipeline_mode<synchronous>, transform_indices = @transform_16, window_bounds = array<i64: 32, 128>}]} {
    %c0_i32 = arith.constant 0 : i32
    %0 = arith.cmpi eq, %arg0, %c0_i32 : i32
    %1 = arith.extui %0 : i1 to i32
    %c0_i32_0 = arith.constant 0 : i32
    %2 = arith.cmpi ne, %1, %c0_i32_0 : i32
    scf.if %2 {
      %c0_77 = arith.constant 0 : index
      %c0_78 = arith.constant 0 : index
      %181 = vector.load %arg1[%c0_77, %c0_78] : memref<32x128xf32, #tpu.memory_space<vmem>>, vector<32x128xf32>
      %c0_79 = arith.constant 0 : index
      %c0_80 = arith.constant 0 : index
      %182 = vector.load %arg17[%c0_79, %c0_80] : memref<32x128xf32, #tpu.memory_space<vmem>>, vector<32x128xf32>
      tpu.vector_store %arg17[%c0_79, %c0_80], %181 {strides = array<i32>} : memref<32x128xf32, #tpu.memory_space<vmem>>, vector<32x128xf32>,
      %183 = tpu.iota {dimensions = array<i32: 0>} : vector<16x16xi32>
      %184 = tpu.iota {dimensions = array<i32: 1>} : vector<16x16xi32>
      %185 = arith.cmpi sle, %184, %183 : vector<16x16xi32>
      %186 = vector.shape_cast %185 : vector<16x16xi1> to vector<1x16x16xi1>
      %c0_81 = arith.constant 0 : index
      %c0_82 = arith.constant 0 : index
      %c0_83 = arith.constant 0 : index
      %187 = vector.load %arg2[%c0_81, %c0_82, %c0_83] : memref<2x1x16xf32, #tpu.memory_space<vmem>>, vector<2x1x16xf32>
      %cst_84 = arith.constant -1.000000e+09 : f32
      %188 = vector.shape_cast %186 : vector<1x16x16xi1> to vector<1x16x16xi1>
      %189 = vector.broadcast %188 : vector<1x16x16xi1> to vector<2x16x16xi1>
      %190 = vector.shape_cast %187 : vector<2x1x16xf32> to vector<2x1x16xf32>
      %191 = vector.broadcast %190 : vector<2x1x16xf32> to vector<2x16x16xf32>
      %192 = vector.broadcast %cst_84 : f32 to vector<2x16x16xf32>
      %193 = arith.select %189, %191, %192 : vector<2x16x16xi1>, vector<2x16x16xf32>
      %c0_85 = arith.constant 0 : index
      %c0_86 = arith.constant 0 : index
      %c0_87 = arith.constant 0 : index
      %194 = vector.load %arg18[%c0_85, %c0_86, %c0_87] : memref<2x16x16xf32, #tpu.memory_space<vmem>>, vector<2x16x16xf32>
      tpu.vector_store %arg18[%c0_85, %c0_86, %c0_87], %193 {strides = array<i32>} : memref<2x16x16xf32, #tpu.memory_space<vmem>>, vector<2x16x16xf32>,
    } else {
    }
    %c0 = arith.constant 0 : index
    %c0_1 = arith.constant 0 : index
    %3 = vector.load %arg17[%c0, %c0_1] : memref<32x128xf32, #tpu.memory_space<vmem>>, vector<32x128xf32>
    %c0_2 = arith.constant 0 : index
    %c0_3 = arith.constant 0 : index
    %c0_4 = arith.constant 0 : index
    %4 = vector.load %arg3[%c0_2, %c0_3, %c0_4] : memref<1x1x128xf32, #tpu.memory_space<vmem>>, vector<1x1x128xf32>
    %5 = vector.shape_cast %4 : vector<1x1x128xf32> to vector<1x128xf32>
    %c0_5 = arith.constant 0 : index
    %c0_6 = arith.constant 0 : index
    %c0_7 = arith.constant 0 : index
    %6 = vector.load %arg4[%c0_5, %c0_6, %c0_7] : memref<1x1x128xf32, #tpu.memory_space<vmem>>, vector<1x1x128xf32>
    %7 = vector.shape_cast %6 : vector<1x1x128xf32> to vector<1x128xf32>
    %cst = arith.constant dense<0.000000e+00> : vector<32xf32>
    %8 = vector.multi_reduction <add>, %3, %cst [1] : vector<32x128xf32> to vector<32xf32>
    %9 = vector.shape_cast %8 : vector<32xf32> to vector<32x1xf32>
    %cst_8 = arith.constant 1.280000e+02 : f32
    %10 = vector.broadcast %cst_8 : f32 to vector<32x1xf32>
    %11 = arith.divf %9, %10 : vector<32x1xf32>
    %12 = vector.broadcast %11 : vector<32x1xf32> to vector<32x128xf32>
    %13 = arith.subf %3, %12 : vector<32x128xf32>
    %14 = arith.mulf %13, %13 : vector<32x128xf32>
    %cst_9 = arith.constant dense<0.000000e+00> : vector<32xf32>
    %15 = vector.multi_reduction <add>, %14, %cst_9 [1] : vector<32x128xf32> to vector<32xf32>
    %16 = vector.shape_cast %15 : vector<32xf32> to vector<32x1xf32>
    %cst_10 = arith.constant 1.280000e+02 : f32
    %17 = vector.broadcast %cst_10 : f32 to vector<32x1xf32>
    %18 = arith.divf %16, %17 : vector<32x1xf32>
    %19 = vector.broadcast %11 : vector<32x1xf32> to vector<32x128xf32>
    %20 = arith.subf %3, %19 : vector<32x128xf32>
    %cst_11 = arith.constant 9.99999996E-13 : f32
    %21 = vector.broadcast %cst_11 : f32 to vector<32x1xf32>
    %22 = arith.addf %18, %21 : vector<32x1xf32>
    %23 = math.rsqrt %22 : vector<32x1xf32>
    %24 = vector.broadcast %23 : vector<32x1xf32> to vector<32x128xf32>
    %25 = arith.mulf %20, %24 : vector<32x128xf32>
    %26 = vector.broadcast %5 : vector<1x128xf32> to vector<32x128xf32>
    %27 = arith.mulf %25, %26 : vector<32x128xf32>
    %28 = vector.broadcast %7 : vector<1x128xf32> to vector<32x128xf32>
    %29 = arith.addf %27, %28 : vector<32x128xf32>
    %30 = arith.truncf %29 : vector<32x128xf32> to vector<32x128xbf16>
    %c0_12 = arith.constant 0 : index
    %c0_13 = arith.constant 0 : index
    %c0_14 = arith.constant 0 : index
    %31 = vector.load %arg5[%c0_12, %c0_13, %c0_14] : memref<1x128x384xbf16, #tpu.memory_space<vmem>>, vector<1x128x384xbf16>
    %32 = vector.shape_cast %31 : vector<1x128x384xbf16> to vector<128x384xbf16>
    %cst_15 = arith.constant dense<0.000000e+00> : vector<32x384xf32>
    %33 = tpu.matmul %30, %32, %cst_15 {dimension_numbers = #tpu.dot_dimension_numbers<[1], [0], [0], [1], [0, 0, 1, 1], [], []>} : vector<32x128xbf16>, vector<128x384xbf16>, vector<32x384xf32> -> vector<32x384xf32>
    %c0_16 = arith.constant 0 : index
    %c0_17 = arith.constant 0 : index
    %c0_18 = arith.constant 0 : index
    %34 = vector.load %arg6[%c0_16, %c0_17, %c0_18] : memref<1x1x384xf32, #tpu.memory_space<vmem>>, vector<1x1x384xf32>
    %35 = vector.shape_cast %34 : vector<1x1x384xf32> to vector<1x384xf32>
    %36 = vector.broadcast %35 : vector<1x384xf32> to vector<32x384xf32>
    %37 = arith.addf %33, %36 : vector<32x384xf32>
    %38 = vector.extract_strided_slice %37 {offsets = [0, 0], sizes = [32, 128], strides = [1, 1]} : vector<32x384xf32> to vector<32x128xf32>
    %cst_19 = arith.constant 0.176776692 : f32
    %39 = vector.broadcast %cst_19 : f32 to vector<32x128xf32>
    %40 = arith.mulf %38, %39 : vector<32x128xf32>
    %41 = vector.extract_strided_slice %37 {offsets = [0, 128], sizes = [32, 128], strides = [1, 1]} : vector<32x384xf32> to vector<32x128xf32>
    %42 = vector.extract_strided_slice %37 {offsets = [0, 256], sizes = [32, 128], strides = [1, 1]} : vector<32x384xf32> to vector<32x128xf32>
    %43 = vector.extract_strided_slice %40 {offsets = [0, 0], sizes = [16, 128], strides = [1, 1]} : vector<32x128xf32> to vector<16x128xf32>
    %44 = vector.shape_cast %43 : vector<16x128xf32> to vector<16x4x32xf32>
    %45 = arith.truncf %44 : vector<16x4x32xf32> to vector<16x4x32xbf16>
    %46 = tpu.transpose %45, [1, 0, 2] : vector<16x4x32xbf16> -> vector<4x16x32xbf16>
    %47 = vector.extract_strided_slice %41 {offsets = [0, 0], sizes = [16, 128], strides = [1, 1]} : vector<32x128xf32> to vector<16x128xf32>
    %48 = vector.shape_cast %47 : vector<16x128xf32> to vector<16x4x32xf32>
    %49 = arith.truncf %48 : vector<16x4x32xf32> to vector<16x4x32xbf16>
    %50 = tpu.transpose %49, [1, 0, 2] : vector<16x4x32xbf16> -> vector<4x16x32xbf16>
    %51 = vector.extract_strided_slice %42 {offsets = [0, 0], sizes = [16, 128], strides = [1, 1]} : vector<32x128xf32> to vector<16x128xf32>
    %52 = vector.shape_cast %51 : vector<16x128xf32> to vector<16x4x32xf32>
    %53 = arith.truncf %52 : vector<16x4x32xf32> to vector<16x4x32xbf16>
    %54 = tpu.transpose %53, [1, 0, 2] : vector<16x4x32xbf16> -> vector<4x16x32xbf16>
    "tpu.trace_start"() <{level = 10 : i32, message = "hqd,hkd->hqk"}> : () -> ()
    %cst_20 = arith.constant dense<0.000000e+00> : vector<4x16x16xf32>
    %55 = tpu.matmul %46, %50, %cst_20 {dimension_numbers = #tpu.dot_dimension_numbers<[2], [2], [1], [1], [0, 0, 0, 1, 1, 1], [0], [0]>} : vector<4x16x32xbf16>, vector<4x16x32xbf16>, vector<4x16x16xf32> -> vector<4x16x16xf32>
    "tpu.trace_stop"() : () -> ()
    %c0_21 = arith.constant 0 : index
    %c0_22 = arith.constant 0 : index
    %c0_23 = arith.constant 0 : index
    %56 = vector.load %arg18[%c0_21, %c0_22, %c0_23] : memref<2x16x16xf32, #tpu.memory_space<vmem>>, vector<1x16x16xf32>
    %57 = vector.shape_cast %56 : vector<1x16x16xf32> to vector<16x16xf32>
    %58 = vector.shape_cast %57 : vector<16x16xf32> to vector<1x16x16xf32>
    %59 = vector.broadcast %58 : vector<1x16x16xf32> to vector<4x16x16xf32>
    %60 = arith.addf %55, %59 : vector<4x16x16xf32>
    %cst_24 = arith.constant dense<0xFF800000> : vector<4x16xf32>
    %61 = vector.multi_reduction <maximumf>, %60, %cst_24 [2] : vector<4x16x16xf32> to vector<4x16xf32>
    %62 = vector.shape_cast %61 : vector<4x16xf32> to vector<4x16x1xf32>
    %63 = vector.broadcast %62 : vector<4x16x1xf32> to vector<4x16x16xf32>
    %64 = arith.subf %60, %63 : vector<4x16x16xf32>
    %65 = math.exp %64 : vector<4x16x16xf32>
    %cst_25 = arith.constant dense<0.000000e+00> : vector<4x16xf32>
    %66 = vector.multi_reduction <add>, %65, %cst_25 [2] : vector<4x16x16xf32> to vector<4x16xf32>
    %67 = vector.shape_cast %66 : vector<4x16xf32> to vector<4x16x1xf32>
    %68 = tpu.reciprocal %67 {approx = true} : vector<4x16x1xf32> -> vector<4x16x1xf32>
    %69 = vector.broadcast %68 : vector<4x16x1xf32> to vector<4x16x16xf32>
    %70 = arith.mulf %65, %69 : vector<4x16x16xf32>
    %71 = arith.truncf %70 : vector<4x16x16xf32> to vector<4x16x16xbf16>
    "tpu.trace_start"() <{level = 10 : i32, message = "hqk,hkd->hqd"}> : () -> ()
    %cst_26 = arith.constant dense<0.000000e+00> : vector<4x16x32xf32>
    %72 = tpu.matmul %71, %54, %cst_26 {dimension_numbers = #tpu.dot_dimension_numbers<[2], [1], [1], [2], [0, 0, 0, 1, 1, 2], [0], [0]>} : vector<4x16x16xbf16>, vector<4x16x32xbf16>, vector<4x16x32xf32> -> vector<4x16x32xf32>
    "tpu.trace_stop"() : () -> ()
    %73 = tpu.transpose %72, [1, 0, 2] : vector<4x16x32xf32> -> vector<16x4x32xf32>
    %74 = vector.shape_cast %73 : vector<16x4x32xf32> to vector<16x128xf32>
    %c0_27 = arith.constant 0 : index
    %c0_28 = arith.constant 0 : index
    %75 = vector.load %arg19[%c0_27, %c0_28] : memref<32x128xf32, #tpu.memory_space<vmem>>, vector<16x128xf32>
    tpu.vector_store %arg19[%c0_27, %c0_28], %74 {strides = array<i32>} : memref<32x128xf32, #tpu.memory_space<vmem>>, vector<16x128xf32>,
    %76 = vector.extract_strided_slice %40 {offsets = [16, 0], sizes = [16, 128], strides = [1, 1]} : vector<32x128xf32> to vector<16x128xf32>
    %77 = vector.shape_cast %76 : vector<16x128xf32> to vector<16x4x32xf32>
    %78 = arith.truncf %77 : vector<16x4x32xf32> to vector<16x4x32xbf16>
    %79 = tpu.transpose %78, [1, 0, 2] : vector<16x4x32xbf16> -> vector<4x16x32xbf16>
    %80 = vector.extract_strided_slice %41 {offsets = [16, 0], sizes = [16, 128], strides = [1, 1]} : vector<32x128xf32> to vector<16x128xf32>
    %81 = vector.shape_cast %80 : vector<16x128xf32> to vector<16x4x32xf32>
    %82 = arith.truncf %81 : vector<16x4x32xf32> to vector<16x4x32xbf16>
    %83 = tpu.transpose %82, [1, 0, 2] : vector<16x4x32xbf16> -> vector<4x16x32xbf16>
    %84 = vector.extract_strided_slice %42 {offsets = [16, 0], sizes = [16, 128], strides = [1, 1]} : vector<32x128xf32> to vector<16x128xf32>
    %85 = vector.shape_cast %84 : vector<16x128xf32> to vector<16x4x32xf32>
    %86 = arith.truncf %85 : vector<16x4x32xf32> to vector<16x4x32xbf16>
    %87 = tpu.transpose %86, [1, 0, 2] : vector<16x4x32xbf16> -> vector<4x16x32xbf16>
    "tpu.trace_start"() <{level = 10 : i32, message = "hqd,hkd->hqk"}> : () -> ()
    %cst_29 = arith.constant dense<0.000000e+00> : vector<4x16x16xf32>
    %88 = tpu.matmul %79, %83, %cst_29 {dimension_numbers = #tpu.dot_dimension_numbers<[2], [2], [1], [1], [0, 0, 0, 1, 1, 1], [0], [0]>} : vector<4x16x32xbf16>, vector<4x16x32xbf16>, vector<4x16x16xf32> -> vector<4x16x16xf32>
    "tpu.trace_stop"() : () -> ()
    %c1 = arith.constant 1 : index
    %c0_30 = arith.constant 0 : index
    %c0_31 = arith.constant 0 : index
    %89 = vector.load %arg18[%c1, %c0_30, %c0_31] : memref<2x16x16xf32, #tpu.memory_space<vmem>>, vector<1x16x16xf32>
    %90 = vector.shape_cast %89 : vector<1x16x16xf32> to vector<16x16xf32>
    %91 = vector.shape_cast %90 : vector<16x16xf32> to vector<1x16x16xf32>
    %92 = vector.broadcast %91 : vector<1x16x16xf32> to vector<4x16x16xf32>
    %93 = arith.addf %88, %92 : vector<4x16x16xf32>
    %cst_32 = arith.constant dense<0xFF800000> : vector<4x16xf32>
    %94 = vector.multi_reduction <maximumf>, %93, %cst_32 [2] : vector<4x16x16xf32> to vector<4x16xf32>
    %95 = vector.shape_cast %94 : vector<4x16xf32> to vector<4x16x1xf32>
    %96 = vector.broadcast %95 : vector<4x16x1xf32> to vector<4x16x16xf32>
    %97 = arith.subf %93, %96 : vector<4x16x16xf32>
    %98 = math.exp %97 : vector<4x16x16xf32>
    %cst_33 = arith.constant dense<0.000000e+00> : vector<4x16xf32>
    %99 = vector.multi_reduction <add>, %98, %cst_33 [2] : vector<4x16x16xf32> to vector<4x16xf32>
    %100 = vector.shape_cast %99 : vector<4x16xf32> to vector<4x16x1xf32>
    %101 = tpu.reciprocal %100 {approx = true} : vector<4x16x1xf32> -> vector<4x16x1xf32>
    %102 = vector.broadcast %101 : vector<4x16x1xf32> to vector<4x16x16xf32>
    %103 = arith.mulf %98, %102 : vector<4x16x16xf32>
    %104 = arith.truncf %103 : vector<4x16x16xf32> to vector<4x16x16xbf16>
    "tpu.trace_start"() <{level = 10 : i32, message = "hqk,hkd->hqd"}> : () -> ()
    %cst_34 = arith.constant dense<0.000000e+00> : vector<4x16x32xf32>
    %105 = tpu.matmul %104, %87, %cst_34 {dimension_numbers = #tpu.dot_dimension_numbers<[2], [1], [1], [2], [0, 0, 0, 1, 1, 2], [0], [0]>} : vector<4x16x16xbf16>, vector<4x16x32xbf16>, vector<4x16x32xf32> -> vector<4x16x32xf32>
    "tpu.trace_stop"() : () -> ()
    %106 = tpu.transpose %105, [1, 0, 2] : vector<4x16x32xf32> -> vector<16x4x32xf32>
    %107 = vector.shape_cast %106 : vector<16x4x32xf32> to vector<16x128xf32>
    %c16 = arith.constant 16 : index
    %c0_35 = arith.constant 0 : index
    %108 = vector.load %arg19[%c16, %c0_35] : memref<32x128xf32, #tpu.memory_space<vmem>>, vector<16x128xf32>
    tpu.vector_store %arg19[%c16, %c0_35], %107 {strides = array<i32>} : memref<32x128xf32, #tpu.memory_space<vmem>>, vector<16x128xf32>,
    %c0_36 = arith.constant 0 : index
    %c0_37 = arith.constant 0 : index
    %109 = vector.load %arg19[%c0_36, %c0_37] : memref<32x128xf32, #tpu.memory_space<vmem>>, vector<32x128xf32>
    %110 = arith.truncf %109 : vector<32x128xf32> to vector<32x128xbf16>
    %c0_38 = arith.constant 0 : index
    %c0_39 = arith.constant 0 : index
    %c0_40 = arith.constant 0 : index
    %111 = vector.load %arg7[%c0_38, %c0_39, %c0_40] : memref<1x128x128xbf16, #tpu.memory_space<vmem>>, vector<1x128x128xbf16>
    %112 = vector.shape_cast %111 : vector<1x128x128xbf16> to vector<128x128xbf16>
    %cst_41 = arith.constant dense<0.000000e+00> : vector<32x128xf32>
    %113 = tpu.matmul %110, %112, %cst_41 {dimension_numbers = #tpu.dot_dimension_numbers<[1], [0], [0], [1], [0, 0, 1, 1], [], []>} : vector<32x128xbf16>, vector<128x128xbf16>, vector<32x128xf32> -> vector<32x128xf32>
    %c0_42 = arith.constant 0 : index
    %c0_43 = arith.constant 0 : index
    %c0_44 = arith.constant 0 : index
    %114 = vector.load %arg8[%c0_42, %c0_43, %c0_44] : memref<1x1x128xf32, #tpu.memory_space<vmem>>, vector<1x1x128xf32>
    %115 = vector.shape_cast %114 : vector<1x1x128xf32> to vector<1x128xf32>
    %116 = vector.broadcast %115 : vector<1x128xf32> to vector<32x128xf32>
    %117 = arith.addf %113, %116 : vector<32x128xf32>
    %118 = arith.addf %3, %117 : vector<32x128xf32>
    %c0_45 = arith.constant 0 : index
    %c0_46 = arith.constant 0 : index
    %c0_47 = arith.constant 0 : index
    %119 = vector.load %arg9[%c0_45, %c0_46, %c0_47] : memref<1x1x128xf32, #tpu.memory_space<vmem>>, vector<1x1x128xf32>
    %120 = vector.shape_cast %119 : vector<1x1x128xf32> to vector<1x128xf32>
    %c0_48 = arith.constant 0 : index
    %c0_49 = arith.constant 0 : index
    %c0_50 = arith.constant 0 : index
    %121 = vector.load %arg10[%c0_48, %c0_49, %c0_50] : memref<1x1x128xf32, #tpu.memory_space<vmem>>, vector<1x1x128xf32>
    %122 = vector.shape_cast %121 : vector<1x1x128xf32> to vector<1x128xf32>
    %cst_51 = arith.constant dense<0.000000e+00> : vector<32xf32>
    %123 = vector.multi_reduction <add>, %118, %cst_51 [1] : vector<32x128xf32> to vector<32xf32>
    %124 = vector.shape_cast %123 : vector<32xf32> to vector<32x1xf32>
    %cst_52 = arith.constant 1.280000e+02 : f32
    %125 = vector.broadcast %cst_52 : f32 to vector<32x1xf32>
    %126 = arith.divf %124, %125 : vector<32x1xf32>
    %127 = vector.broadcast %126 : vector<32x1xf32> to vector<32x128xf32>
    %128 = arith.subf %118, %127 : vector<32x128xf32>
    %129 = arith.mulf %128, %128 : vector<32x128xf32>
    %cst_53 = arith.constant dense<0.000000e+00> : vector<32xf32>
    %130 = vector.multi_reduction <add>, %129, %cst_53 [1] : vector<32x128xf32> to vector<32xf32>
    %131 = vector.shape_cast %130 : vector<32xf32> to vector<32x1xf32>
    %cst_54 = arith.constant 1.280000e+02 : f32
    %132 = vector.broadcast %cst_54 : f32 to vector<32x1xf32>
    %133 = arith.divf %131, %132 : vector<32x1xf32>
    %134 = vector.broadcast %126 : vector<32x1xf32> to vector<32x128xf32>
    %135 = arith.subf %118, %134 : vector<32x128xf32>
    %cst_55 = arith.constant 9.99999996E-13 : f32
    %136 = vector.broadcast %cst_55 : f32 to vector<32x1xf32>
    %137 = arith.addf %133, %136 : vector<32x1xf32>
    %138 = math.rsqrt %137 : vector<32x1xf32>
    %139 = vector.broadcast %138 : vector<32x1xf32> to vector<32x128xf32>
    %140 = arith.mulf %135, %139 : vector<32x128xf32>
    %141 = vector.broadcast %120 : vector<1x128xf32> to vector<32x128xf32>
    %142 = arith.mulf %140, %141 : vector<32x128xf32>
    %143 = vector.broadcast %122 : vector<1x128xf32> to vector<32x128xf32>
    %144 = arith.addf %142, %143 : vector<32x128xf32>
    %145 = arith.truncf %144 : vector<32x128xf32> to vector<32x128xbf16>
    %c0_56 = arith.constant 0 : index
    %c0_57 = arith.constant 0 : index
    %c0_58 = arith.constant 0 : index
    %146 = vector.load %arg11[%c0_56, %c0_57, %c0_58] : memref<1x128x512xbf16, #tpu.memory_space<vmem>>, vector<1x128x512xbf16>
    %147 = vector.shape_cast %146 : vector<1x128x512xbf16> to vector<128x512xbf16>
    %cst_59 = arith.constant dense<0.000000e+00> : vector<32x512xf32>
    %148 = tpu.matmul %145, %147, %cst_59 {dimension_numbers = #tpu.dot_dimension_numbers<[1], [0], [0], [1], [0, 0, 1, 1], [], []>} : vector<32x128xbf16>, vector<128x512xbf16>, vector<32x512xf32> -> vector<32x512xf32>
    %c0_60 = arith.constant 0 : index
    %c0_61 = arith.constant 0 : index
    %c0_62 = arith.constant 0 : index
    %149 = vector.load %arg12[%c0_60, %c0_61, %c0_62] : memref<1x1x512xf32, #tpu.memory_space<vmem>>, vector<1x1x512xf32>
    %150 = vector.shape_cast %149 : vector<1x1x512xf32> to vector<1x512xf32>
    %151 = vector.broadcast %150 : vector<1x512xf32> to vector<32x512xf32>
    %152 = arith.addf %148, %151 : vector<32x512xf32>
    %153 = arith.mulf %152, %152 : vector<32x512xf32>
    %154 = arith.mulf %152, %153 : vector<32x512xf32>
    %cst_63 = arith.constant 4.471500e-02 : f32
    %155 = vector.broadcast %cst_63 : f32 to vector<32x512xf32>
    %156 = arith.mulf %155, %154 : vector<32x512xf32>
    %157 = arith.addf %152, %156 : vector<32x512xf32>
    %cst_64 = arith.constant 0.797884583 : f32
    %158 = vector.broadcast %cst_64 : f32 to vector<32x512xf32>
    %159 = arith.mulf %158, %157 : vector<32x512xf32>
    %160 = math.tanh %159 : vector<32x512xf32>
    %cst_65 = arith.constant 1.000000e+00 : f32
    %161 = vector.broadcast %cst_65 : f32 to vector<32x512xf32>
    %162 = arith.addf %161, %160 : vector<32x512xf32>
    %cst_66 = arith.constant 5.000000e-01 : f32
    %163 = vector.broadcast %cst_66 : f32 to vector<32x512xf32>
    %164 = arith.mulf %163, %162 : vector<32x512xf32>
    %165 = arith.mulf %152, %164 : vector<32x512xf32>
    %166 = arith.truncf %165 : vector<32x512xf32> to vector<32x512xbf16>
    %c0_67 = arith.constant 0 : index
    %c0_68 = arith.constant 0 : index
    %c0_69 = arith.constant 0 : index
    %167 = vector.load %arg13[%c0_67, %c0_68, %c0_69] : memref<1x512x128xbf16, #tpu.memory_space<vmem>>, vector<1x512x128xbf16>
    %168 = vector.shape_cast %167 : vector<1x512x128xbf16> to vector<512x128xbf16>
    %cst_70 = arith.constant dense<0.000000e+00> : vector<32x128xf32>
    %169 = tpu.matmul %166, %168, %cst_70 {dimension_numbers = #tpu.dot_dimension_numbers<[1], [0], [0], [1], [0, 0, 1, 1], [], []>} : vector<32x512xbf16>, vector<512x128xbf16>, vector<32x128xf32> -> vector<32x128xf32>
    %c0_71 = arith.constant 0 : index
    %c0_72 = arith.constant 0 : index
    %c0_73 = arith.constant 0 : index
    %170 = vector.load %arg14[%c0_71, %c0_72, %c0_73] : memref<1x1x128xf32, #tpu.memory_space<vmem>>, vector<1x1x128xf32>
    %171 = vector.shape_cast %170 : vector<1x1x128xf32> to vector<1x128xf32>
    %172 = vector.broadcast %171 : vector<1x128xf32> to vector<32x128xf32>
    %173 = arith.addf %169, %172 : vector<32x128xf32>
    %174 = arith.addf %118, %173 : vector<32x128xf32>
    %c1_i32 = arith.constant 1 : i32
    %175 = arith.cmpi slt, %arg0, %c1_i32 : i32
    %176 = arith.extui %175 : i1 to i32
    %c0_i32_74 = arith.constant 0 : i32
    %177 = arith.cmpi ne, %176, %c0_i32_74 : i32
    scf.if %177 {
      %c0_77 = arith.constant 0 : index
      %c0_78 = arith.constant 0 : index
      %181 = vector.load %arg17[%c0_77, %c0_78] : memref<32x128xf32, #tpu.memory_space<vmem>>, vector<32x128xf32>
      tpu.vector_store %arg17[%c0_77, %c0_78], %174 {strides = array<i32>} : memref<32x128xf32, #tpu.memory_space<vmem>>, vector<32x128xf32>,
    } else {
    }
    %c1_i32_75 = arith.constant 1 : i32
    %178 = arith.cmpi eq, %arg0, %c1_i32_75 : i32
    %179 = arith.extui %178 : i1 to i32
    %c0_i32_76 = arith.constant 0 : i32
    %180 = arith.cmpi ne, %179, %c0_i32_76 : i32
    scf.if %180 {
      %c0_77 = arith.constant 0 : index
      %c0_78 = arith.constant 0 : index
      %181 = vector.load %arg15[%c0_77, %c0_78] : memref<1x128xf32, #tpu.memory_space<vmem>>, vector<1x128xf32>
      %c0_79 = arith.constant 0 : index
      %c0_80 = arith.constant 0 : index
      %182 = vector.load %arg16[%c0_79, %c0_80] : memref<1x128xf32, #tpu.memory_space<vmem>>, vector<1x128xf32>
      %cst_81 = arith.constant dense<0.000000e+00> : vector<32xf32>
      %183 = vector.multi_reduction <add>, %174, %cst_81 [1] : vector<32x128xf32> to vector<32xf32>
      %184 = vector.shape_cast %183 : vector<32xf32> to vector<32x1xf32>
      %cst_82 = arith.constant 1.280000e+02 : f32
      %185 = vector.broadcast %cst_82 : f32 to vector<32x1xf32>
      %186 = arith.divf %184, %185 : vector<32x1xf32>
      %187 = vector.broadcast %186 : vector<32x1xf32> to vector<32x128xf32>
      %188 = arith.subf %174, %187 : vector<32x128xf32>
      %189 = arith.mulf %188, %188 : vector<32x128xf32>
      %cst_83 = arith.constant dense<0.000000e+00> : vector<32xf32>
      %190 = vector.multi_reduction <add>, %189, %cst_83 [1] : vector<32x128xf32> to vector<32xf32>
      %191 = vector.shape_cast %190 : vector<32xf32> to vector<32x1xf32>
      %cst_84 = arith.constant 1.280000e+02 : f32
      %192 = vector.broadcast %cst_84 : f32 to vector<32x1xf32>
      %193 = arith.divf %191, %192 : vector<32x1xf32>
      %194 = vector.broadcast %186 : vector<32x1xf32> to vector<32x128xf32>
      %195 = arith.subf %174, %194 : vector<32x128xf32>
      %cst_85 = arith.constant 9.99999996E-13 : f32
      %196 = vector.broadcast %cst_85 : f32 to vector<32x1xf32>
      %197 = arith.addf %193, %196 : vector<32x1xf32>
      %198 = math.rsqrt %197 : vector<32x1xf32>
      %199 = vector.broadcast %198 : vector<32x1xf32> to vector<32x128xf32>
      %200 = arith.mulf %195, %199 : vector<32x128xf32>
      %201 = vector.broadcast %181 : vector<1x128xf32> to vector<32x128xf32>
      %202 = arith.mulf %200, %201 : vector<32x128xf32>
      %203 = vector.broadcast %182 : vector<1x128xf32> to vector<32x128xf32>
      %204 = arith.addf %202, %203 : vector<32x128xf32>
      %c0_86 = arith.constant 0 : index
      %c0_87 = arith.constant 0 : index
      %205 = vector.load %arg17[%c0_86, %c0_87] : memref<32x128xf32, #tpu.memory_space<vmem>>, vector<32x128xf32>
      tpu.vector_store %arg17[%c0_86, %c0_87], %204 {strides = array<i32>} : memref<32x128xf32, #tpu.memory_space<vmem>>, vector<32x128xf32>,
    } else {
    }
    return
  }
  func.func @transform_0(%arg0: i32) -> (i32, i32) {
    %c0_i32 = arith.constant 0 : i32
    %c0_i32_0 = arith.constant 0 : i32
    %c0_i32_1 = arith.constant 0 : i32
    return %c0_i32, %c0_i32_0 : i32, i32
  }
  func.func @transform_1(%arg0: i32) -> (i32, i32, i32) {
    %c0_i32 = arith.constant 0 : i32
    %c0_i32_0 = arith.constant 0 : i32
    %c0_i32_1 = arith.constant 0 : i32
    %c0_i32_2 = arith.constant 0 : i32
    return %c0_i32, %c0_i32_0, %c0_i32_1 : i32, i32, i32
  }
  func.func @transform_2(%arg0: i32) -> (i32, i32, i32) {
    %c0_i32 = arith.constant 0 : i32
    %c0_i32_0 = arith.constant 0 : i32
    %c0_i32_1 = arith.constant 0 : i32
    return %arg0, %c0_i32, %c0_i32_0 : i32, i32, i32
  }
  func.func @transform_3(%arg0: i32) -> (i32, i32, i32) {
    %c0_i32 = arith.constant 0 : i32
    %c0_i32_0 = arith.constant 0 : i32
    %c0_i32_1 = arith.constant 0 : i32
    return %arg0, %c0_i32, %c0_i32_0 : i32, i32, i32
  }
  func.func @transform_4(%arg0: i32) -> (i32, i32, i32) {
    %c0_i32 = arith.constant 0 : i32
    %c0_i32_0 = arith.constant 0 : i32
    %c0_i32_1 = arith.constant 0 : i32
    return %arg0, %c0_i32, %c0_i32_0 : i32, i32, i32
  }
  func.func @transform_5(%arg0: i32) -> (i32, i32, i32) {
    %c0_i32 = arith.constant 0 : i32
    %c0_i32_0 = arith.constant 0 : i32
    %c0_i32_1 = arith.constant 0 : i32
    return %arg0, %c0_i32, %c0_i32_0 : i32, i32, i32
  }
  func.func @transform_6(%arg0: i32) -> (i32, i32, i32) {
    %c0_i32 = arith.constant 0 : i32
    %c0_i32_0 = arith.constant 0 : i32
    %c0_i32_1 = arith.constant 0 : i32
    return %arg0, %c0_i32, %c0_i32_0 : i32, i32, i32
  }
  func.func @transform_7(%arg0: i32) -> (i32, i32, i32) {
    %c0_i32 = arith.constant 0 : i32
    %c0_i32_0 = arith.constant 0 : i32
    %c0_i32_1 = arith.constant 0 : i32
    return %arg0, %c0_i32, %c0_i32_0 : i32, i32, i32
  }
  func.func @transform_8(%arg0: i32) -> (i32, i32, i32) {
    %c0_i32 = arith.constant 0 : i32
    %c0_i32_0 = arith.constant 0 : i32
    %c0_i32_1 = arith.constant 0 : i32
    return %arg0, %c0_i32, %c0_i32_0 : i32, i32, i32
  }
  func.func @transform_9(%arg0: i32) -> (i32, i32, i32) {
    %c0_i32 = arith.constant 0 : i32
    %c0_i32_0 = arith.constant 0 : i32
    %c0_i32_1 = arith.constant 0 : i32
    return %arg0, %c0_i32, %c0_i32_0 : i32, i32, i32
  }
  func.func @transform_10(%arg0: i32) -> (i32, i32, i32) {
    %c0_i32 = arith.constant 0 : i32
    %c0_i32_0 = arith.constant 0 : i32
    %c0_i32_1 = arith.constant 0 : i32
    return %arg0, %c0_i32, %c0_i32_0 : i32, i32, i32
  }
  func.func @transform_11(%arg0: i32) -> (i32, i32, i32) {
    %c0_i32 = arith.constant 0 : i32
    %c0_i32_0 = arith.constant 0 : i32
    %c0_i32_1 = arith.constant 0 : i32
    return %arg0, %c0_i32, %c0_i32_0 : i32, i32, i32
  }
  func.func @transform_12(%arg0: i32) -> (i32, i32, i32) {
    %c0_i32 = arith.constant 0 : i32
    %c0_i32_0 = arith.constant 0 : i32
    %c0_i32_1 = arith.constant 0 : i32
    return %arg0, %c0_i32, %c0_i32_0 : i32, i32, i32
  }
  func.func @transform_13(%arg0: i32) -> (i32, i32, i32) {
    %c0_i32 = arith.constant 0 : i32
    %c0_i32_0 = arith.constant 0 : i32
    %c0_i32_1 = arith.constant 0 : i32
    return %arg0, %c0_i32, %c0_i32_0 : i32, i32, i32
  }
  func.func @transform_14(%arg0: i32) -> (i32, i32) {
    %c0_i32 = arith.constant 0 : i32
    %c0_i32_0 = arith.constant 0 : i32
    %c0_i32_1 = arith.constant 0 : i32
    return %c0_i32, %c0_i32_0 : i32, i32
  }
  func.func @transform_15(%arg0: i32) -> (i32, i32) {
    %c0_i32 = arith.constant 0 : i32
    %c0_i32_0 = arith.constant 0 : i32
    %c0_i32_1 = arith.constant 0 : i32
    return %c0_i32, %c0_i32_0 : i32, i32
  }
  func.func @transform_16(%arg0: i32) -> (i32, i32) {
    %c0_i32 = arith.constant 0 : i32
    %c0_i32_0 = arith.constant 0 : i32
    %c0_i32_1 = arith.constant 0 : i32
    return %c0_i32, %c0_i32_0 : i32, i32
  }
}

</mosaic_0001>

<llo_original>
// kernel: tpu_custom_call.1
$region0: #{tpu_custom_call.1}
  #allocation0 [shape = 'u32[]', space=smem, size = 0x4, offset = 0x4, fixed_abs, tag = 'smem constant byte address 0x4 - core index']
  #allocation1 [shape = 'u32[144,128]{1,0:T(1,128)}', space=vmem, size = 0x12000, scoped, tag = 'internal scratch']
  #allocation2 [shape = 'f32[2,16,16]{2,1,0:T(8,128)}', space=vmem, size = 0x4000, scoped, tag = 'scratch operand']
  #allocation3 [shape = 'f32[32,128]{1,0:T(8,128)}', space=vmem, size = 0x4000, scoped, tag = 'scratch operand']
  %s0 = inlined_call_operand.hbm [shape: f32[32,128], index: 0, kind: input, shape index: {}, may-alias: {0,16}]
  %s1 = inlined_call_operand.vmem [shape: f32[2,1,16], index: 1, kind: input, shape index: {}]
  %s2 = inlined_call_operand.vmem [shape: f32[2,1,128], index: 2, kind: input, shape index: {}]
  %s3 = inlined_call_operand.vmem [shape: f32[2,1,128], index: 3, kind: input, shape index: {}]
  %s4 = inlined_call_operand.hbm [shape: bf16[2,128,384], index: 4, kind: input, shape index: {}]
  %s5 = inlined_call_operand.vmem [shape: f32[2,1,384], index: 5, kind: input, shape index: {}]
  %s6 = inlined_call_operand.hbm [shape: bf16[2,128,128], index: 6, kind: input, shape index: {}]
  %s7 = inlined_call_operand.vmem [shape: f32[2,1,128], index: 7, kind: input, shape index: {}]
  %s8 = inlined_call_operand.vmem [shape: f32[2,1,128], index: 8, kind: input, shape index: {}]
  %s9 = inlined_call_operand.vmem [shape: f32[2,1,128], index: 9, kind: input, shape index: {}]
  %s10 = inlined_call_operand.hbm [shape: bf16[2,128,512], index: 10, kind: input, shape index: {}]
  %s11 = inlined_call_operand.vmem [shape: f32[2,1,512], index: 11, kind: input, shape index: {}]
  %s12 = inlined_call_operand.hbm [shape: bf16[2,512,128], index: 12, kind: input, shape index: {}]
  %s13 = inlined_call_operand.vmem [shape: f32[2,1,128], index: 13, kind: input, shape index: {}]
  %s14 = inlined_call_operand.vmem [shape: f32[1,128], index: 14, kind: input, shape index: {}]
  %s15 = inlined_call_operand.vmem [shape: f32[1,128], index: 15, kind: input, shape index: {}]
  %s16 = inlined_call_operand.hbm [shape: f32[32,128], index: 16, kind: output, shape index: {}, may-alias: {0,16}]
  %s17 = sld [smem:[#allocation0]]
  $region129: #{tpu_custom_call.1} parent=0
    _
  %s19 = ssub.s32 1, %s17
  %s20 = scalar_select 0, %s19, %s17
  $region1: #{tpu_custom_call.1} parent=0
    #allocation4 [shape = 'u8[16384]{0}', space=vmem, size = 0x4000, scoped, tag = 'input window, operand 0, single buffered']
    #allocation5 [shape = 's32[2]{0}', space=sflag, size = 0x8, scoped, tag = 'scoped memory for tpu_custom_call.1']
    #allocation6 [shape = 's32[2]{0}', space=sflag, size = 0x8, scoped, tag = 'scoped memory for tpu_custom_call.1']
    #allocation7 [shape = 'u8[196608]{0}', space=vmem, size = 0x30000, scoped, tag = 'input window, operand 4']
    #allocation8 [shape = 's32[2]{0}', space=sflag, size = 0x8, scoped, tag = 'scoped memory for tpu_custom_call.1']
    #allocation9 [shape = 'u8[65536]{0}', space=vmem, size = 0x10000, scoped, tag = 'input window, operand 6']
    #allocation10 [shape = 'u8[262144]{0}', space=vmem, size = 0x40000, scoped, tag = 'input window, operand 10']
    #allocation11 [shape = 's32[2]{0}', space=sflag, size = 0x8, scoped, tag = 'scoped memory for tpu_custom_call.1']
    #allocation12 [shape = 'u8[262144]{0}', space=vmem, size = 0x40000, scoped, tag = 'input window, operand 12']
    #allocation13 [shape = 'u8[16384]{0}', space=vmem, size = 0x4000, scoped, tag = 'output window, operand 0, single buffered']
    %21 = vsyncpa [#allocation5], 0
    %22 = vsyncpa [#allocation8], 0
    %s23 = scalar_lea.sflag [#allocation8], 1
    %24 = vsyncpa %s23, 0
    %25 = vsyncpa [#allocation11], 0
    %s26 = scalar_lea.sflag [#allocation11], 1
    %27 = vsyncpa %s26, 0
    %28 = vsyncpa [#allocation6], 0
    loop: start=0, step=1, limit=4
    $region2: #{tpu_custom_call.1} parent=1 // loop_pre_header
      _
    $region3: #{tpu_custom_call.1} parent=1 // loop_header
      %s30 = sphi 0, %s34
      %p31 = scmp.ge.s32.totalorder %s30, 4
      %s38 = sphi 0, %s38
      %s40 = sphi 0, %s38
      %s41 = sphi 0, %s40
      %s55 = sphi 0, %s41
      %s59 = sphi 0, %s59
      %s61 = sphi 0, %s59
      %s62 = sphi 0, %s61
      %s76 = sphi 0, %s62
      %s82 = sphi 0, %s84
      %s85 = sphi 0, %s82
      %s86 = sphi 0, %s85
      %s102 = sphi 0, %s86
      %s108 = sphi 0, %s110
      %s111 = sphi 0, %s108
      %s112 = sphi 0, %s111
      %s128 = sphi 0, %s112
      %s134 = sphi 0, %s136
      %s137 = sphi 0, %s134
      %s138 = sphi 0, %s137
      %s154 = sphi 0, %s138
      %s160 = sphi 0, %s162
      %s163 = sphi 0, %s160
      %s164 = sphi 0, %s163
      %s180 = sphi 0, %s164
      %s186 = sphi 0, %s188
      %s189 = sphi 0, %s186
      %s190 = sphi 0, %s189
      %s206 = sphi 0, %s190
      %s212 = sphi 0, %s214
      %s215 = sphi 0, %s212
      %s216 = sphi 0, %s215
      %s232 = sphi 0, %s216
      %s238 = sphi 0, %s240
      %s241 = sphi 0, %s238
      %s242 = sphi 0, %s241
      %s258 = sphi 0, %s242
      %s264 = sphi 0, %s266
      %s267 = sphi 0, %s264
      %s268 = sphi 0, %s267
      %s284 = sphi 0, %s268
      %s290 = sphi 0, %s292
      %s293 = sphi 0, %s290
      %s294 = sphi 0, %s293
      %s310 = sphi 0, %s294
      %s316 = sphi 0, %s318
      %s319 = sphi 0, %s316
      %s320 = sphi 0, %s319
      %s336 = sphi 0, %s320
      %s342 = sphi 0, %s344
      %s345 = sphi 0, %s342
      %s346 = sphi 0, %s345
      %s362 = sphi 0, %s346
      %s368 = sphi 0, %s370
      %s371 = sphi 0, %s368
      %s372 = sphi 0, %s371
      %s388 = sphi 0, %s372
      %s392 = sphi 0, %s392
      %s394 = sphi 0, %s392
      %s395 = sphi 0, %s394
      %s409 = sphi 0, %s395
      %s413 = sphi 0, %s413
      %s415 = sphi 0, %s413
      %s416 = sphi 0, %s415
      %s430 = sphi 0, %s416
      %s434 = sphi 0, %s434
      %s436 = sphi 0, %s434
      %s437 = sphi 0, %s436
      %s451 = sphi 0, %s437
    $region4: #{tpu_custom_call.1} parent=1 // loop_header_branch
      %33 = sbr.rel (%p31) target = $region8
    $region5: #{tpu_custom_call.1} parent=1 // loop_body
      %s35 = ssub.s32 %s30, 1
      %s36 = ssub.s32 %s30, 2
      %s37 = sadd.s32 %s30, 1
      %s39 = sadd.s32 %s38, 1
      %p42 = scmp.eq.s32.totalorder %s30, 1
      %p43 = scmp.ne.s32.totalorder %s38, %s40
      %p44 = scmp.eq.s32.totalorder %s30, 0
      %p45 = por %p43, %p44
      %p46 = scmp.ne.s32.totalorder %s38, %s40
      %p47 = scmp.eq.s32.totalorder %s35, 1
      %p48 = por %p46, %p47
      %p49 = scmp.ne.s32.totalorder %s40, %s41
      %p50 = scmp.eq.s32.totalorder %s35, 0
      %p51 = por %p49, %p50
      %p52 = scmp.ne.s32.totalorder %s40, %s41
      %p53 = scmp.eq.s32.totalorder %s36, 1
      %p54 = por %p52, %p53
      %p56 = scmp.ne.s32.totalorder %s41, %s55
      %p57 = scmp.eq.s32.totalorder %s36, 0
      %p58 = por %p56, %p57
      %s60 = sadd.s32 %s59, 1
      %p63 = scmp.eq.s32.totalorder %s30, 1
      %p64 = scmp.ne.s32.totalorder %s59, %s61
      %p65 = scmp.eq.s32.totalorder %s30, 0
      %p66 = por %p64, %p65
      %p67 = scmp.ne.s32.totalorder %s59, %s61
      %p68 = scmp.eq.s32.totalorder %s35, 1
      %p69 = por %p67, %p68
      %p70 = scmp.ne.s32.totalorder %s61, %s62
      %p71 = scmp.eq.s32.totalorder %s35, 0
      %p72 = por %p70, %p71
      %p73 = scmp.ne.s32.totalorder %s61, %s62
      %p74 = scmp.eq.s32.totalorder %s36, 1
      %p75 = por %p73, %p74
      %p77 = scmp.ne.s32.totalorder %s62, %s76
      %p78 = scmp.eq.s32.totalorder %s36, 0
      %p79 = por %p77, %p78
      %s80 = ssub.s32 %s30, %s37
      %p81 = scmp.eq.s32.totalorder %s80, 0
      %s83 = sadd.s32 %s82, 1
      %s84 = scalar_select %p81, %s82, %s83
      %p87 = pneg %p81
      %p88 = scmp.eq.s32.totalorder %s30, 1
      %p89 = por %p87, %p88
      %p90 = scmp.ne.s32.totalorder %s82, %s85
      %p91 = scmp.eq.s32.totalorder %s30, 0
      %p92 = por %p90, %p91
      %p93 = scmp.ne.s32.totalorder %s82, %s85
      %p94 = scmp.eq.s32.totalorder %s35, 1
      %p95 = por %p93, %p94
      %p96 = scmp.ne.s32.totalorder %s85, %s86
      %p97 = scmp.eq.s32.totalorder %s35, 0
      %p98 = por %p96, %p97
      %p99 = scmp.ne.s32.totalorder %s85, %s86
      %p100 = scmp.eq.s32.totalorder %s36, 1
      %p101 = por %p99, %p100
      %p103 = scmp.ne.s32.totalorder %s86, %s102
      %p104 = scmp.eq.s32.totalorder %s36, 0
      %p105 = por %p103, %p104
      %s106 = ssub.s32 %s30, %s37
      %p107 = scmp.eq.s32.totalorder %s106, 0
      %s109 = sadd.s32 %s108, 1
      %s110 = scalar_select %p107, %s108, %s109
      %p113 = pneg %p107
      %p114 = scmp.eq.s32.totalorder %s30, 1
      %p115 = por %p113, %p114
      %p116 = scmp.ne.s32.totalorder %s108, %s111
      %p117 = scmp.eq.s32.totalorder %s30, 0
      %p118 = por %p116, %p117
      %p119 = scmp.ne.s32.totalorder %s108, %s111
      %p120 = scmp.eq.s32.totalorder %s35, 1
      %p121 = por %p119, %p120
      %p122 = scmp.ne.s32.totalorder %s111, %s112
      %p123 = scmp.eq.s32.totalorder %s35, 0
      %p124 = por %p122, %p123
      %p125 = scmp.ne.s32.totalorder %s111, %s112
      %p126 = scmp.eq.s32.totalorder %s36, 1
      %p127 = por %p125, %p126
      %p129 = scmp.ne.s32.totalorder %s112, %s128
      %p130 = scmp.eq.s32.totalorder %s36, 0
      %p131 = por %p129, %p130
      %s132 = ssub.s32 %s30, %s37
      %p133 = scmp.eq.s32.totalorder %s132, 0
      %s135 = sadd.s32 %s134, 1
      %s136 = scalar_select %p133, %s134, %s135
      %p139 = pneg %p133
      %p140 = scmp.eq.s32.totalorder %s30, 1
      %p141 = por %p139, %p140
      %p142 = scmp.ne.s32.totalorder %s134, %s137
      %p143 = scmp.eq.s32.totalorder %s30, 0
      %p144 = por %p142, %p143
      %p145 = scmp.ne.s32.totalorder %s134, %s137
      %p146 = scmp.eq.s32.totalorder %s35, 1
      %p147 = por %p145, %p146
      %p148 = scmp.ne.s32.totalorder %s137, %s138
      %p149 = scmp.eq.s32.totalorder %s35, 0
      %p150 = por %p148, %p149
      %p151 = scmp.ne.s32.totalorder %s137, %s138
      %p152 = scmp.eq.s32.totalorder %s36, 1
      %p153 = por %p151, %p152
      %p155 = scmp.ne.s32.totalorder %s138, %s154
      %p156 = scmp.eq.s32.totalorder %s36, 0
      %p157 = por %p155, %p156
      %s158 = ssub.s32 %s30, %s37
      %p159 = scmp.eq.s32.totalorder %s158, 0
      %s161 = sadd.s32 %s160, 1
      %s162 = scalar_select %p159, %s160, %s161
      %p165 = pneg %p159
      %p166 = scmp.eq.s32.totalorder %s30, 1
      %p167 = por %p165, %p166
      %p168 = scmp.ne.s32.totalorder %s160, %s163
      %p169 = scmp.eq.s32.totalorder %s30, 0
      %p170 = por %p168, %p169
      %p171 = scmp.ne.s32.totalorder %s160, %s163
      %p172 = scmp.eq.s32.totalorder %s35, 1
      %p173 = por %p171, %p172
      %p174 = scmp.ne.s32.totalorder %s163, %s164
      %p175 = scmp.eq.s32.totalorder %s35, 0
      %p176 = por %p174, %p175
      %p177 = scmp.ne.s32.totalorder %s163, %s164
      %p178 = scmp.eq.s32.totalorder %s36, 1
      %p179 = por %p177, %p178
      %p181 = scmp.ne.s32.totalorder %s164, %s180
      %p182 = scmp.eq.s32.totalorder %s36, 0
      %p183 = por %p181, %p182
      %s184 = ssub.s32 %s30, %s37
      %p185 = scmp.eq.s32.totalorder %s184, 0
      %s187 = sadd.s32 %s186, 1
      %s188 = scalar_select %p185, %s186, %s187
      %p191 = pneg %p185
      %p192 = scmp.eq.s32.totalorder %s30, 1
      %p193 = por %p191, %p192
      %p194 = scmp.ne.s32.totalorder %s186, %s189
      %p195 = scmp.eq.s32.totalorder %s30, 0
      %p196 = por %p194, %p195
      %p197 = scmp.ne.s32.totalorder %s186, %s189
      %p198 = scmp.eq.s32.totalorder %s35, 1
      %p199 = por %p197, %p198
      %p200 = scmp.ne.s32.totalorder %s189, %s190
      %p201 = scmp.eq.s32.totalorder %s35, 0
      %p202 = por %p200, %p201
      %p203 = scmp.ne.s32.totalorder %s189, %s190
      %p204 = scmp.eq.s32.totalorder %s36, 1
      %p205 = por %p203, %p204
      %p207 = scmp.ne.s32.totalorder %s190, %s206
      %p208 = scmp.eq.s32.totalorder %s36, 0
      %p209 = por %p207, %p208
      %s210 = ssub.s32 %s30, %s37
      %p211 = scmp.eq.s32.totalorder %s210, 0
      %s213 = sadd.s32 %s212, 1
      %s214 = scalar_select %p211, %s212, %s213
      %p217 = pneg %p211
      %p218 = scmp.eq.s32.totalorder %s30, 1
      %p219 = por %p217, %p218
      %p220 = scmp.ne.s32.totalorder %s212, %s215
      %p221 = scmp.eq.s32.totalorder %s30, 0
      %p222 = por %p220, %p221
      %p223 = scmp.ne.s32.totalorder %s212, %s215
      %p224 = scmp.eq.s32.totalorder %s35, 1
      %p225 = por %p223, %p224
      %p226 = scmp.ne.s32.totalorder %s215, %s216
      %p227 = scmp.eq.s32.totalorder %s35, 0
      %p228 = por %p226, %p227
      %p229 = scmp.ne.s32.totalorder %s215, %s216
      %p230 = scmp.eq.s32.totalorder %s36, 1
      %p231 = por %p229, %p230
      %p233 = scmp.ne.s32.totalorder %s216, %s232
      %p234 = scmp.eq.s32.totalorder %s36, 0
      %p235 = por %p233, %p234
      %s236 = ssub.s32 %s30, %s37
      %p237 = scmp.eq.s32.totalorder %s236, 0
      %s239 = sadd.s32 %s238, 1
      %s240 = scalar_select %p237, %s238, %s239
      %p243 = pneg %p237
      %p244 = scmp.eq.s32.totalorder %s30, 1
      %p245 = por %p243, %p244
      %p246 = scmp.ne.s32.totalorder %s238, %s241
      %p247 = scmp.eq.s32.totalorder %s30, 0
      %p248 = por %p246, %p247
      %p249 = scmp.ne.s32.totalorder %s238, %s241
      %p250 = scmp.eq.s32.totalorder %s35, 1
      %p251 = por %p249, %p250
      %p252 = scmp.ne.s32.totalorder %s241, %s242
      %p253 = scmp.eq.s32.totalorder %s35, 0
      %p254 = por %p252, %p253
      %p255 = scmp.ne.s32.totalorder %s241, %s242
      %p256 = scmp.eq.s32.totalorder %s36, 1
      %p257 = por %p255, %p256
      %p259 = scmp.ne.s32.totalorder %s242, %s258
      %p260 = scmp.eq.s32.totalorder %s36, 0
      %p261 = por %p259, %p260
      %s262 = ssub.s32 %s30, %s37
      %p263 = scmp.eq.s32.totalorder %s262, 0
      %s265 = sadd.s32 %s264, 1
      %s266 = scalar_select %p263, %s264, %s265
      %p269 = pneg %p263
      %p270 = scmp.eq.s32.totalorder %s30, 1
      %p271 = por %p269, %p270
      %p272 = scmp.ne.s32.totalorder %s264, %s267
      %p273 = scmp.eq.s32.totalorder %s30, 0
      %p274 = por %p272, %p273
      %p275 = scmp.ne.s32.totalorder %s264, %s267
      %p276 = scmp.eq.s32.totalorder %s35, 1
      %p277 = por %p275, %p276
      %p278 = scmp.ne.s32.totalorder %s267, %s268
      %p279 = scmp.eq.s32.totalorder %s35, 0
      %p280 = por %p278, %p279
      %p281 = scmp.ne.s32.totalorder %s267, %s268
      %p282 = scmp.eq.s32.totalorder %s36, 1
      %p283 = por %p281, %p282
      %p285 = scmp.ne.s32.totalorder %s268, %s284
      %p286 = scmp.eq.s32.totalorder %s36, 0
      %p287 = por %p285, %p286
      %s288 = ssub.s32 %s30, %s37
      %p289 = scmp.eq.s32.totalorder %s288, 0
      %s291 = sadd.s32 %s290, 1
      %s292 = scalar_select %p289, %s290, %s291
      %p295 = pneg %p289
      %p296 = scmp.eq.s32.totalorder %s30, 1
      %p297 = por %p295, %p296
      %p298 = scmp.ne.s32.totalorder %s290, %s293
      %p299 = scmp.eq.s32.totalorder %s30, 0
      %p300 = por %p298, %p299
      %p301 = scmp.ne.s32.totalorder %s290, %s293
      %p302 = scmp.eq.s32.totalorder %s35, 1
      %p303 = por %p301, %p302
      %p304 = scmp.ne.s32.totalorder %s293, %s294
      %p305 = scmp.eq.s32.totalorder %s35, 0
      %p306 = por %p304, %p305
      %p307 = scmp.ne.s32.totalorder %s293, %s294
      %p308 = scmp.eq.s32.totalorder %s36, 1
      %p309 = por %p307, %p308
      %p311 = scmp.ne.s32.totalorder %s294, %s310
      %p312 = scmp.eq.s32.totalorder %s36, 0
      %p313 = por %p311, %p312
      %s314 = ssub.s32 %s30, %s37
      %p315 = scmp.eq.s32.totalorder %s314, 0
      %s317 = sadd.s32 %s316, 1
      %s318 = scalar_select %p315, %s316, %s317
      %p321 = pneg %p315
      %p322 = scmp.eq.s32.totalorder %s30, 1
      %p323 = por %p321, %p322
      %p324 = scmp.ne.s32.totalorder %s316, %s319
      %p325 = scmp.eq.s32.totalorder %s30, 0
      %p326 = por %p324, %p325
      %p327 = scmp.ne.s32.totalorder %s316, %s319
      %p328 = scmp.eq.s32.totalorder %s35, 1
      %p329 = por %p327, %p328
      %p330 = scmp.ne.s32.totalorder %s319, %s320
      %p331 = scmp.eq.s32.totalorder %s35, 0
      %p332 = por %p330, %p331
      %p333 = scmp.ne.s32.totalorder %s319, %s320
      %p334 = scmp.eq.s32.totalorder %s36, 1
      %p335 = por %p333, %p334
      %p337 = scmp.ne.s32.totalorder %s320, %s336
      %p338 = scmp.eq.s32.totalorder %s36, 0
      %p339 = por %p337, %p338
      %s340 = ssub.s32 %s30, %s37
      %p341 = scmp.eq.s32.totalorder %s340, 0
      %s343 = sadd.s32 %s342, 1
      %s344 = scalar_select %p341, %s342, %s343
      %p347 = pneg %p341
      %p348 = scmp.eq.s32.totalorder %s30, 1
      %p349 = por %p347, %p348
      %p350 = scmp.ne.s32.totalorder %s342, %s345
      %p351 = scmp.eq.s32.totalorder %s30, 0
      %p352 = por %p350, %p351
      %p353 = scmp.ne.s32.totalorder %s342, %s345
      %p354 = scmp.eq.s32.totalorder %s35, 1
      %p355 = por %p353, %p354
      %p356 = scmp.ne.s32.totalorder %s345, %s346
      %p357 = scmp.eq.s32.totalorder %s35, 0
      %p358 = por %p356, %p357
      %p359 = scmp.ne.s32.totalorder %s345, %s346
      %p360 = scmp.eq.s32.totalorder %s36, 1
      %p361 = por %p359, %p360
      %p363 = scmp.ne.s32.totalorder %s346, %s362
      %p364 = scmp.eq.s32.totalorder %s36, 0
      %p365 = por %p363, %p364
      %s366 = ssub.s32 %s30, %s37
      %p367 = scmp.eq.s32.totalorder %s366, 0
      %s369 = sadd.s32 %s368, 1
      %s370 = scalar_select %p367, %s368, %s369
      %p373 = pneg %p367
      %p374 = scmp.eq.s32.totalorder %s30, 1
      %p375 = por %p373, %p374
      %p376 = scmp.ne.s32.totalorder %s368, %s371
      %p377 = scmp.eq.s32.totalorder %s30, 0
      %p378 = por %p376, %p377
      %p379 = scmp.ne.s32.totalorder %s368, %s371
      %p380 = scmp.eq.s32.totalorder %s35, 1
      %p381 = por %p379, %p380
      %p382 = scmp.ne.s32.totalorder %s371, %s372
      %p383 = scmp.eq.s32.totalorder %s35, 0
      %p384 = por %p382, %p383
      %p385 = scmp.ne.s32.totalorder %s371, %s372
      %p386 = scmp.eq.s32.totalorder %s36, 1
      %p387 = por %p385, %p386
      %p389 = scmp.ne.s32.totalorder %s372, %s388
      %p390 = scmp.eq.s32.totalorder %s36, 0
      %p391 = por %p389, %p390
      %s393 = sadd.s32 %s392, 1
      %p396 = scmp.eq.s32.totalorder %s30, 1
      %p397 = scmp.ne.s32.totalorder %s392, %s394
      %p398 = scmp.eq.s32.totalorder %s30, 0
      %p399 = por %p397, %p398
      %p400 = scmp.ne.s32.totalorder %s392, %s394
      %p401 = scmp.eq.s32.totalorder %s35, 1
      %p402 = por %p400, %p401
      %p403 = scmp.ne.s32.totalorder %s394, %s395
      %p404 = scmp.eq.s32.totalorder %s35, 0
      %p405 = por %p403, %p404
      %p406 = scmp.ne.s32.totalorder %s394, %s395
      %p407 = scmp.eq.s32.totalorder %s36, 1
      %p408 = por %p406, %p407
      %p410 = scmp.ne.s32.totalorder %s395, %s409
      %p411 = scmp.eq.s32.totalorder %s36, 0
      %p412 = por %p410, %p411
      %s414 = sadd.s32 %s413, 1
      %p417 = scmp.eq.s32.totalorder %s30, 1
      %p418 = scmp.ne.s32.totalorder %s413, %s415
      %p419 = scmp.eq.s32.totalorder %s30, 0
      %p420 = por %p418, %p419
      %p421 = scmp.ne.s32.totalorder %s413, %s415
      %p422 = scmp.eq.s32.totalorder %s35, 1
      %p423 = por %p421, %p422
      %p424 = scmp.ne.s32.totalorder %s415, %s416
      %p425 = scmp.eq.s32.totalorder %s35, 0
      %p426 = por %p424, %p425
      %p427 = scmp.ne.s32.totalorder %s415, %s416
      %p428 = scmp.eq.s32.totalorder %s36, 1
      %p429 = por %p427, %p428
      %p431 = scmp.ne.s32.totalorder %s416, %s430
      %p432 = scmp.eq.s32.totalorder %s36, 0
      %p433 = por %p431, %p432
      %s435 = sadd.s32 %s434, 1
      %p438 = scmp.eq.s32.totalorder %s30, 1
      %p439 = scmp.ne.s32.totalorder %s434, %s436
      %p440 = scmp.eq.s32.totalorder %s30, 0
      %p441 = por %p439, %p440
      %p442 = scmp.ne.s32.totalorder %s434, %s436
      %p443 = scmp.eq.s32.totalorder %s35, 1
      %p444 = por %p442, %p443
      %p445 = scmp.ne.s32.totalorder %s436, %s437
      %p446 = scmp.eq.s32.totalorder %s35, 0
      %p447 = por %p445, %p446
      %p448 = scmp.ne.s32.totalorder %s436, %s437
      %p449 = scmp.eq.s32.totalorder %s36, 1
      %p450 = por %p448, %p449
      %p452 = scmp.ne.s32.totalorder %s437, %s451
      %p453 = scmp.eq.s32.totalorder %s36, 0
      %p454 = por %p452, %p453
      %p455 = scmp.le.s32.totalorder 1, %s30
      %p456 = scmp.lt.s32.totalorder %s30, 3
      %p457 = pnand %p455, %p456
      %p458 = pneg %p457
      // Predicated region
      $region9: #{tpu_custom_call.1} parent=5 // pred_check
        _
      $region10: #{tpu_custom_call.1} parent=5 // pred_check_branch
        %460 = sbr.rel (%p457) target = $region12
      $region11: #{tpu_custom_call.1} parent=5 // pred_region
        %s461 = ssub.s32 %s30, 1
        // Predicated region
        $region13: #{tpu_custom_call.1} parent=11 // pred_check
          %p462 = pneg %p51
        $region14: #{tpu_custom_call.1} parent=11 // pred_check_branch
          %464 = sbr.rel (%p462) target = $region16
        $region15: #{tpu_custom_call.1} parent=11 // pred_region
          %s466 = ssub.s32 512, 512
          %467 = vsyncadd [#allocation5], %s466
          %s468 = sshll.u32 [#allocation4], 4
          %s469 = int_to_ptr.vmem [resolvable:$true] %s468
          %474 = dma.hbm_to_vmem [thread:$0]  %s0, 512, %s469, [#allocation5], 128, 128, 8
        $region16: #{tpu_custom_call.1} parent=11 // pred_fallthru
          _
        // Predicated region
        $region17: #{tpu_custom_call.1} parent=11 // pred_check
          %p475 = pneg %p72
        $region18: #{tpu_custom_call.1} parent=11 // pred_check_branch
          %477 = sbr.rel (%p475) target = $region20
        $region19: #{tpu_custom_call.1} parent=11 // pred_region
          _
        $region20: #{tpu_custom_call.1} parent=11 // pred_fallthru
          _
        // Predicated region
        $region21: #{tpu_custom_call.1} parent=11 // pred_check
          %p478 = pneg %p405
        $region22: #{tpu_custom_call.1} parent=11 // pred_check_branch
          %480 = sbr.rel (%p478) target = $region24
        $region23: #{tpu_custom_call.1} parent=11 // pred_region
          _
        $region24: #{tpu_custom_call.1} parent=11 // pred_fallthru
          _
        // Predicated region
        $region25: #{tpu_custom_call.1} parent=11 // pred_check
          %p481 = pneg %p426
        $region26: #{tpu_custom_call.1} parent=11 // pred_check_branch
          %483 = sbr.rel (%p481) target = $region28
        $region27: #{tpu_custom_call.1} parent=11 // pred_region
          _
        $region28: #{tpu_custom_call.1} parent=11 // pred_fallthru
          _
      $region12: #{tpu_custom_call.1} parent=5 // pred_fallthru
        _
      %p484 = scmp.lt.s32.totalorder %s30, 2
      // Predicated region
      $region29: #{tpu_custom_call.1} parent=5 // pred_check
        %p485 = pneg %p484
      $region30: #{tpu_custom_call.1} parent=5 // pred_check_branch
        %487 = sbr.rel (%p485) target = $region32
      $region31: #{tpu_custom_call.1} parent=5 // pred_region
        // Predicated region
        $region33: #{tpu_custom_call.1} parent=31 // pred_check
          %p488 = pneg %p92
        $region34: #{tpu_custom_call.1} parent=31 // pred_check_branch
          %490 = sbr.rel (%p488) target = $region36
        $region35: #{tpu_custom_call.1} parent=31 // pred_region
          %p491 = scmp.lt.s32.totalorder %s30, 1
          %s492 = scalar_select %p491, %s30, 1
          %s493 = scalar_lea.vmem %s2, %s492
        $region36: #{tpu_custom_call.1} parent=31 // pred_fallthru
          _
        // Predicated region
        $region37: #{tpu_custom_call.1} parent=31 // pred_check
          %p494 = pneg %p118
        $region38: #{tpu_custom_call.1} parent=31 // pred_check_branch
          %496 = sbr.rel (%p494) target = $region40
        $region39: #{tpu_custom_call.1} parent=31 // pred_region
          %p497 = scmp.lt.s32.totalorder %s30, 1
          %s498 = scalar_select %p497, %s30, 1
          %s499 = scalar_lea.vmem %s3, %s498
        $region40: #{tpu_custom_call.1} parent=31 // pred_fallthru
          _
        // Predicated region
        $region41: #{tpu_custom_call.1} parent=31 // pred_check
          %p500 = pneg %p144
        $region42: #{tpu_custom_call.1} parent=31 // pred_check_branch
          %502 = sbr.rel (%p500) target = $region44
        $region43: #{tpu_custom_call.1} parent=31 // pred_region
          %s503 = sand.u32 %s30, 1
          %s504 = scalar_lea.sflag [#allocation8], %s503
          %s505 = sand.u32 %s134, 1
          %s506 = smul.addr %s505, 192
          %s507 = scalar_lea.vmem [#allocation7], %s506
          %s509 = ssub.s32 3072, 3072
          %510 = vsyncadd %s504, %s509
          %s511 = smul.addr %s30, 48
          %s512 = smul.addr %s511, 64
          %s513 = scalar_lea.hbm %s4, %s512
          %s514 = sshll.u32 %s507, 4
          %s515 = int_to_ptr.vmem [resolvable:$true] %s514
          %520 = dma.hbm_to_vmem [thread:$0]  %s513, 3072, %s515, %s504, 192, 192, 12
        $region44: #{tpu_custom_call.1} parent=31 // pred_fallthru
          _
        // Predicated region
        $region45: #{tpu_custom_call.1} parent=31 // pred_check
          %p521 = pneg %p170
        $region46: #{tpu_custom_call.1} parent=31 // pred_check_branch
          %523 = sbr.rel (%p521) target = $region48
        $region47: #{tpu_custom_call.1} parent=31 // pred_region
          %p524 = scmp.lt.s32.totalorder %s30, 1
          %s525 = scalar_select %p524, %s30, 1
          %s526 = smul.addr %s525, 3
          %s527 = scalar_lea.vmem %s5, %s526
        $region48: #{tpu_custom_call.1} parent=31 // pred_fallthru
          _
        // Predicated region
        $region49: #{tpu_custom_call.1} parent=31 // pred_check
          %p528 = pneg %p196
        $region50: #{tpu_custom_call.1} parent=31 // pred_check_branch
          %530 = sbr.rel (%p528) target = $region52
        $region51: #{tpu_custom_call.1} parent=31 // pred_region
          %s531 = sand.u32 %s30, 1
          %s532 = scalar_lea.sflag [#allocation8], %s531
          %s533 = sand.u32 %s186, 1
          %s534 = smul.addr %s533, 64
          %s535 = scalar_lea.vmem [#allocation9], %s534
          %s537 = ssub.s32 1024, 1024
          %538 = vsyncadd %s532, %s537
          %s539 = smul.addr %s30, 16
          %s540 = smul.addr %s539, 64
          %s541 = scalar_lea.hbm %s6, %s540
          %s542 = sshll.u32 %s535, 4
          %s543 = int_to_ptr.vmem [resolvable:$true] %s542
          %548 = dma.hbm_to_vmem [thread:$0]  %s541, 1024, %s543, %s532, 64, 64, 4
        $region52: #{tpu_custom_call.1} parent=31 // pred_fallthru
          _
        // Predicated region
        $region53: #{tpu_custom_call.1} parent=31 // pred_check
          %p549 = pneg %p222
        $region54: #{tpu_custom_call.1} parent=31 // pred_check_branch
          %551 = sbr.rel (%p549) target = $region56
        $region55: #{tpu_custom_call.1} parent=31 // pred_region
          %p552 = scmp.lt.s32.totalorder %s30, 1
          %s553 = scalar_select %p552, %s30, 1
          %s554 = scalar_lea.vmem %s7, %s553
        $region56: #{tpu_custom_call.1} parent=31 // pred_fallthru
          _
        // Predicated region
        $region57: #{tpu_custom_call.1} parent=31 // pred_check
          %p555 = pneg %p248
        $region58: #{tpu_custom_call.1} parent=31 // pred_check_branch
          %557 = sbr.rel (%p555) target = $region60
        $region59: #{tpu_custom_call.1} parent=31 // pred_region
          %p558 = scmp.lt.s32.totalorder %s30, 1
          %s559 = scalar_select %p558, %s30, 1
          %s560 = scalar_lea.vmem %s8, %s559
        $region60: #{tpu_custom_call.1} parent=31 // pred_fallthru
          _
        // Predicated region
        $region61: #{tpu_custom_call.1} parent=31 // pred_check
          %p561 = pneg %p274
        $region62: #{tpu_custom_call.1} parent=31 // pred_check_branch
          %563 = sbr.rel (%p561) target = $region64
        $region63: #{tpu_custom_call.1} parent=31 // pred_region
          %p564 = scmp.lt.s32.totalorder %s30, 1
          %s565 = scalar_select %p564, %s30, 1
          %s566 = scalar_lea.vmem %s9, %s565
        $region64: #{tpu_custom_call.1} parent=31 // pred_fallthru
          _
        // Predicated region
        $region65: #{tpu_custom_call.1} parent=31 // pred_check
          %p567 = pneg %p300
        $region66: #{tpu_custom_call.1} parent=31 // pred_check_branch
          %569 = sbr.rel (%p567) target = $region68
        $region67: #{tpu_custom_call.1} parent=31 // pred_region
          %s570 = sand.u32 %s30, 1
          %s571 = scalar_lea.sflag [#allocation11], %s570
          %s572 = sand.u32 %s290, 1
          %s573 = smul.addr %s572, 256
          %s574 = scalar_lea.vmem [#allocation10], %s573
          %s576 = ssub.s32 4096, 4096
          %577 = vsyncadd %s571, %s576
          %s578 = smul.addr %s30, 64
          %s579 = smul.addr %s578, 64
          %s580 = scalar_lea.hbm %s10, %s579
          %s581 = sshll.u32 %s574, 4
          %s582 = int_to_ptr.vmem [resolvable:$true] %s581
          %587 = dma.hbm_to_vmem [thread:$0]  %s580, 4096, %s582, %s571, 256, 256, 16
        $region68: #{tpu_custom_call.1} parent=31 // pred_fallthru
          _
        // Predicated region
        $region69: #{tpu_custom_call.1} parent=31 // pred_check
          %p588 = pneg %p326
        $region70: #{tpu_custom_call.1} parent=31 // pred_check_branch
          %590 = sbr.rel (%p588) target = $region72
        $region71: #{tpu_custom_call.1} parent=31 // pred_region
          %p591 = scmp.lt.s32.totalorder %s30, 1
          %s592 = scalar_select %p591, %s30, 1
          %s593 = smul.addr %s592, 4
          %s594 = scalar_lea.vmem %s11, %s593
        $region72: #{tpu_custom_call.1} parent=31 // pred_fallthru
          _
        // Predicated region
        $region73: #{tpu_custom_call.1} parent=31 // pred_check
          %p595 = pneg %p352
        $region74: #{tpu_custom_call.1} parent=31 // pred_check_branch
          %597 = sbr.rel (%p595) target = $region76
        $region75: #{tpu_custom_call.1} parent=31 // pred_region
          %s598 = sand.u32 %s30, 1
          %s599 = scalar_lea.sflag [#allocation11], %s598
          %s600 = sand.u32 %s342, 1
          %s601 = smul.addr %s600, 256
          %s602 = scalar_lea.vmem [#allocation12], %s601
          %s604 = ssub.s32 4096, 4096
          %605 = vsyncadd %s599, %s604
          %s606 = smul.addr %s30, 64
          %s607 = smul.addr %s606, 64
          %s608 = scalar_lea.hbm %s12, %s607
          %s609 = sshll.u32 %s602, 4
          %s610 = int_to_ptr.vmem [resolvable:$true] %s609
          %615 = dma.hbm_to_vmem [thread:$0]  %s608, 4096, %s610, %s599, 64, 64, 4
        $region76: #{tpu_custom_call.1} parent=31 // pred_fallthru
          _
        // Predicated region
        $region77: #{tpu_custom_call.1} parent=31 // pred_check
          %p616 = pneg %p378
        $region78: #{tpu_custom_call.1} parent=31 // pred_check_branch
          %618 = sbr.rel (%p616) target = $region80
        $region79: #{tpu_custom_call.1} parent=31 // pred_region
          %p619 = scmp.lt.s32.totalorder %s30, 1
          %s620 = scalar_select %p619, %s30, 1
          %s621 = scalar_lea.vmem %s13, %s620
        $region80: #{tpu_custom_call.1} parent=31 // pred_fallthru
          _
      $region32: #{tpu_custom_call.1} parent=5 // pred_fallthru
        _
      %p622 = scmp.le.s32.totalorder 1, %s30
      %p623 = scmp.lt.s32.totalorder %s30, 3
      %p624 = pnand %p622, %p623
      %p625 = pneg %p624
      // Predicated region
      $region81: #{tpu_custom_call.1} parent=5 // pred_check
        _
      $region82: #{tpu_custom_call.1} parent=5 // pred_check_branch
        %627 = sbr.rel (%p624) target = $region84
      $region83: #{tpu_custom_call.1} parent=5 // pred_region
        %s628 = ssub.s32 %s30, 1
        // Predicated region
        $region85: #{tpu_custom_call.1} parent=83 // pred_check
          %p629 = pneg %p51
        $region86: #{tpu_custom_call.1} parent=83 // pred_check_branch
          %631 = sbr.rel (%p629) target = $region88
        $region87: #{tpu_custom_call.1} parent=83 // pred_region
          %632 = dma.done [#allocation5], 512
        $region88: #{tpu_custom_call.1} parent=83 // pred_fallthru
          _
        %s633 = sand.u32 %s35, 1
        %s634 = scalar_lea.sflag [#allocation8], %s633
        %s635 = sand.u32 %s137, 1
        %s636 = smul.addr %s635, 192
        %s637 = scalar_lea.vmem [#allocation7], %s636
        // Predicated region
        $region89: #{tpu_custom_call.1} parent=83 // pred_check
          %p638 = pneg %p150
        $region90: #{tpu_custom_call.1} parent=83 // pred_check_branch
          %640 = sbr.rel (%p638) target = $region92
        $region91: #{tpu_custom_call.1} parent=83 // pred_region
          %641 = dma.done %s634, 3072
        $region92: #{tpu_custom_call.1} parent=83 // pred_fallthru
          _
        %s642 = sand.u32 %s35, 1
        %s643 = scalar_lea.sflag [#allocation8], %s642
        %s644 = sand.u32 %s189, 1
        %s645 = smul.addr %s644, 64
        %s646 = scalar_lea.vmem [#allocation9], %s645
        // Predicated region
        $region93: #{tpu_custom_call.1} parent=83 // pred_check
          %p647 = pneg %p202
        $region94: #{tpu_custom_call.1} parent=83 // pred_check_branch
          %649 = sbr.rel (%p647) target = $region96
        $region95: #{tpu_custom_call.1} parent=83 // pred_region
          %650 = dma.done %s643, 1024
        $region96: #{tpu_custom_call.1} parent=83 // pred_fallthru
          _
        %s651 = sand.u32 %s35, 1
        %s652 = scalar_lea.sflag [#allocation11], %s651
        %s653 = sand.u32 %s293, 1
        %s654 = smul.addr %s653, 256
        %s655 = scalar_lea.vmem [#allocation10], %s654
        // Predicated region
        $region97: #{tpu_custom_call.1} parent=83 // pred_check
          %p656 = pneg %p306
        $region98: #{tpu_custom_call.1} parent=83 // pred_check_branch
          %658 = sbr.rel (%p656) target = $region100
        $region99: #{tpu_custom_call.1} parent=83 // pred_region
          %659 = dma.done %s652, 4096
        $region100: #{tpu_custom_call.1} parent=83 // pred_fallthru
          _
        %s660 = sand.u32 %s35, 1
        %s661 = scalar_lea.sflag [#allocation11], %s660
        %s662 = sand.u32 %s345, 1
        %s663 = smul.addr %s662, 256
        %s664 = scalar_lea.vmem [#allocation12], %s663
        // Predicated region
        $region101: #{tpu_custom_call.1} parent=83 // pred_check
          %p665 = pneg %p358
        $region102: #{tpu_custom_call.1} parent=83 // pred_check_branch
          %667 = sbr.rel (%p665) target = $region104
        $region103: #{tpu_custom_call.1} parent=83 // pred_region
          %668 = dma.done %s661, 4096
        $region104: #{tpu_custom_call.1} parent=83 // pred_fallthru
          _
        %p669 = pneg %p51
        %p670 = pneg %p48
        %p671 = pneg %p72
        %p672 = pneg %p69
        %p673 = scmp.lt.s32.totalorder %s35, 1
        %s674 = scalar_select %p673, %s35, 1
        %s675 = scalar_lea.vmem %s2, %s674
        %p676 = pneg %p98
        %p677 = pneg %p95
        %p678 = scmp.lt.s32.totalorder %s35, 1
        %s679 = scalar_select %p678, %s35, 1
        %s680 = scalar_lea.vmem %s3, %s679
        %p681 = pneg %p124
        %p682 = pneg %p121
        %s683 = sand.u32 %s35, 1
        %s684 = scalar_lea.sflag [#allocation8], %s683
        %s685 = sand.u32 %s137, 1
        %s686 = smul.addr %s685, 192
        %s687 = scalar_lea.vmem [#allocation7], %s686
        %p688 = pneg %p150
        %p689 = pneg %p147
        %p690 = scmp.lt.s32.totalorder %s35, 1
        %s691 = scalar_select %p690, %s35, 1
        %s692 = smul.addr %s691, 3
        %s693 = scalar_lea.vmem %s5, %s692
        %p694 = pneg %p176
        %p695 = pneg %p173
        %s696 = sand.u32 %s35, 1
        %s697 = scalar_lea.sflag [#allocation8], %s696
        %s698 = sand.u32 %s189, 1
        %s699 = smul.addr %s698, 64
        %s700 = scalar_lea.vmem [#allocation9], %s699
        %p701 = pneg %p202
        %p702 = pneg %p199
        %p703 = scmp.lt.s32.totalorder %s35, 1
        %s704 = scalar_select %p703, %s35, 1
        %s705 = scalar_lea.vmem %s7, %s704
        %p706 = pneg %p228
        %p707 = pneg %p225
        %p708 = scmp.lt.s32.totalorder %s35, 1
        %s709 = scalar_select %p708, %s35, 1
        %s710 = scalar_lea.vmem %s8, %s709
        %p711 = pneg %p254
        %p712 = pneg %p251
        %p713 = scmp.lt.s32.totalorder %s35, 1
        %s714 = scalar_select %p713, %s35, 1
        %s715 = scalar_lea.vmem %s9, %s714
        %p716 = pneg %p280
        %p717 = pneg %p277
        %s718 = sand.u32 %s35, 1
        %s719 = scalar_lea.sflag [#allocation11], %s718
        %s720 = sand.u32 %s293, 1
        %s721 = smul.addr %s720, 256
        %s722 = scalar_lea.vmem [#allocation10], %s721
        %p723 = pneg %p306
        %p724 = pneg %p303
        %p725 = scmp.lt.s32.totalorder %s35, 1
        %s726 = scalar_select %p725, %s35, 1
        %s727 = smul.addr %s726, 4
        %s728 = scalar_lea.vmem %s11, %s727
        %p729 = pneg %p332
        %p730 = pneg %p329
        %s731 = sand.u32 %s35, 1
        %s732 = scalar_lea.sflag [#allocation11], %s731
        %s733 = sand.u32 %s345, 1
        %s734 = smul.addr %s733, 256
        %s735 = scalar_lea.vmem [#allocation12], %s734
        %p736 = pneg %p358
        %p737 = pneg %p355
        %p738 = scmp.lt.s32.totalorder %s35, 1
        %s739 = scalar_select %p738, %s35, 1
        %s740 = scalar_lea.vmem %s13, %s739
        %p741 = pneg %p384
        %p742 = pneg %p381
        %p743 = pneg %p405
        %p744 = pneg %p402
        %p745 = pneg %p426
        %p746 = pneg %p423
        %p747 = pneg %p447
        %p748 = pneg %p444
        %p749 = scmp.lt.s32.totalorder %s35, 1
        %s750 = scalar_select %p749, %s35, 1
        %s751 = scalar_lea.vmem %s2, %s750
        %p752 = scmp.lt.s32.totalorder %s35, 1
        %s753 = scalar_select %p752, %s35, 1
        %s754 = scalar_lea.vmem %s3, %s753
        %p755 = scmp.lt.s32.totalorder %s35, 1
        %s756 = scalar_select %p755, %s35, 1
        %s757 = smul.addr %s756, 3
        %s758 = scalar_lea.vmem %s5, %s757
        %p759 = scmp.lt.s32.totalorder %s35, 1
        %s760 = scalar_select %p759, %s35, 1
        %s761 = scalar_lea.vmem %s7, %s760
        %p762 = scmp.lt.s32.totalorder %s35, 1
        %s763 = scalar_select %p762, %s35, 1
        %s764 = scalar_lea.vmem %s8, %s763
        %p765 = scmp.lt.s32.totalorder %s35, 1
        %s766 = scalar_select %p765, %s35, 1
        %s767 = scalar_lea.vmem %s9, %s766
        %p768 = scmp.lt.s32.totalorder %s35, 1
        %s769 = scalar_select %p768, %s35, 1
        %s770 = smul.addr %s769, 4
        %s771 = scalar_lea.vmem %s11, %s770
        %p772 = scmp.lt.s32.totalorder %s35, 1
        %s773 = scalar_select %p772, %s35, 1
        %s774 = scalar_lea.vmem %s13, %s773
        %p776 = scmp.eq.s32.totalorder %s35, 0
        // Predicated region
        $region105: #{tpu_custom_call.1} parent=83 // pred_check
          %p777 = pneg %p776
        $region106: #{tpu_custom_call.1} parent=83 // pred_check_branch
          %779 = sbr.rel (%p777) target = $region108
        $region107: #{tpu_custom_call.1} parent=83 // pred_region
          %v780 = vld [vmem:[#allocation4] sm:$0xff]
          %v781 = vld [vmem:[#allocation4 + $0x8] sm:$0xff]
          %v782 = vld [vmem:[#allocation4 + $0x10] sm:$0xff]
          %v783 = vld [vmem:[#allocation4 + $0x18] sm:$0xff]
          %784 = vst [vmem:[#allocation13] sm:$0xff] %v780
          %785 = vst [vmem:[#allocation13 + $0x8] sm:$0xff] %v781
          %786 = vst [vmem:[#allocation13 + $0x10] sm:$0xff] %v782
          %787 = vst [vmem:[#allocation13 + $0x18] sm:$0xff] %v783
          %v788 = vlaneseq
          %v789 = vshrl.u32 %v788, 7
          %v790 = vadd.s32 %v789, 8
          %v791 = vlaneseq
          %v792 = vand.u32 %v791, 127
          %vm793 = vcmp.le.s32.totalorder %v792, %v789
          %vm794 = vcmp.le.s32.totalorder %v792, %v790
          %v795 = vld [vmem:[%s1] sm:$0x1]
          %v796 = vld [vmem:[%s1 + $0x1] sm:$0x1]
          %v797 = vsel %vm793, 1, 0
          %v798 = vsel %vm794, 1, 0
          %vm799 = vcmp.eq.s32.totalorder %v797, 1
          %vm800 = vcmp.eq.s32.totalorder %v798, 1
          %v803 = vlaneseq
          %v804 = vshrl.u32 %v803, 7
          %v805 = vsub.s32 0, %v804
          %v806 = vrot.slane %v795, %v805
          %v807 = vlaneseq
          %v808 = vshrl.u32 %v807, 7
          %v809 = vsub.s32 0, %v808
          %v810 = vrot.slane %v796, %v809
          %v813 = vsel %vm799, %v806, -1e+09
          %v814 = vsel %vm800, %v806, -1e+09
          %v815 = vsel %vm799, %v810, -1e+09
          %v816 = vsel %vm800, %v810, -1e+09
          %vm817 = vcmask 130048
          %818 = vst.msk [vmem:[#allocation2] sm:$0xff] %vm817, %v813
          %819 = vst.msk [vmem:[#allocation2 + $0x8] sm:$0xff] %vm817, %v814
          %820 = vst.msk [vmem:[#allocation2 + $0x10] sm:$0xff] %vm817, %v815
          %821 = vst.msk [vmem:[#allocation2 + $0x18] sm:$0xff] %vm817, %v816
        $region108: #{tpu_custom_call.1} parent=83 // pred_fallthru
          _
        %v822 = vld [vmem:[#allocation13] sm:$0xff]
        %v823 = vld [vmem:[#allocation13 + $0x8] sm:$0xff]
        %v824 = vld [vmem:[#allocation13 + $0x10] sm:$0xff]
        %v825 = vld [vmem:[#allocation13 + $0x18] sm:$0xff]
        %v826 = vld [vmem:[%s751] sm:$0x1]
        %v827 = vld [vmem:[%s754] sm:$0x1]
        %828 = vadd.xlane.f32.xlu0 %v822
        %v829 = vpop.xlane.xlu0 %828
        %830 = vadd.xlane.f32.xlu0 %v823
        %v831 = vpop.xlane.xlu0 %830
        %832 = vadd.xlane.f32.xlu0 %v824
        %v833 = vpop.xlane.xlu0 %832
        %834 = vadd.xlane.f32.xlu0 %v825
        %v835 = vpop.xlane.xlu0 %834
        %v836 = vrcp.pop 128.0
        %v837 = vmul.f32 %v829, %v836
        %v838 = vmul.f32 %v831, %v836
        %v839 = vmul.f32 %v833, %v836
        %v840 = vmul.f32 %v835, %v836
        %v841 = vsub.f32 %v822, %v837
        %v842 = vsub.f32 %v823, %v838
        %v843 = vsub.f32 %v824, %v839
        %v844 = vsub.f32 %v825, %v840
        %v845 = vmul.f32 %v841, %v841
        %v846 = vmul.f32 %v842, %v842
        %v847 = vmul.f32 %v843, %v843
        %v848 = vmul.f32 %v844, %v844
        %849 = vadd.xlane.f32.xlu0 %v845
        %v850 = vpop.xlane.xlu0 %849
        %851 = vadd.xlane.f32.xlu0 %v846
        %v852 = vpop.xlane.xlu0 %851
        %853 = vadd.xlane.f32.xlu0 %v847
        %v854 = vpop.xlane.xlu0 %853
        %855 = vadd.xlane.f32.xlu0 %v848
        %v856 = vpop.xlane.xlu0 %855
        %v857 = vmul.f32 %v850, %v836
        %v858 = vmul.f32 %v852, %v836
        %v859 = vmul.f32 %v854, %v836
        %v860 = vmul.f32 %v856, %v836
        %v861 = vadd.f32 %v857, 1e-12
        %v862 = vadd.f32 %v858, 1e-12
        %v863 = vadd.f32 %v859, 1e-12
        %v864 = vadd.f32 %v860, 1e-12
        %v865 = vrsqrt.pop %v861
        %v866 = vrsqrt.pop %v862
        %v867 = vrsqrt.pop %v863
        %v868 = vrsqrt.pop %v864
        %v869 = vmul.f32 %v841, %v865
        %v870 = vmul.f32 %v842, %v866
        %v871 = vmul.f32 %v843, %v867
        %v872 = vmul.f32 %v844, %v868
        %v874 = vlaneseq
        %v875 = vshrl.u32 %v874, 7
        %v876 = vsub.s32 0, %v875
        %v877 = vrot.slane %v826, %v876
        %v879 = vmul.f32 %v869, %v877
        %v880 = vmul.f32 %v870, %v877
        %v881 = vmul.f32 %v871, %v877
        %v882 = vmul.f32 %v872, %v877
        %v884 = vlaneseq
        %v885 = vshrl.u32 %v884, 7
        %v886 = vsub.s32 0, %v885
        %v887 = vrot.slane %v827, %v886
        %v889 = vadd.f32 %v879, %v887
        %v890 = vadd.f32 %v880, %v887
        %v891 = vadd.f32 %v881, %v887
        %v892 = vadd.f32 %v882, %v887
        %v893 = vpack.c.bf16 %v890, %v889
        %v894 = vpack.c.bf16 %v892, %v891
        %v895 = vld [vmem:[%s637] sm:$0xff]
        %v896 = vld [vmem:[%s637 + $0x8] sm:$0xf]
        %v897 = vld [vmem:[%s637 + $0xc] sm:$0xff]
        %v898 = vld [vmem:[%s637 + $0x14] sm:$0xf]
        %v899 = vld [vmem:[%s637 + $0x18] sm:$0xff]
        %v900 = vld [vmem:[%s637 + $0x20] sm:$0xf]
        %v901 = vld [vmem:[%s637 + $0x24] sm:$0xff]
        %v902 = vld [vmem:[%s637 + $0x2c] sm:$0xf]
        %v903 = vld [vmem:[%s637 + $0x30] sm:$0xff]
        %v904 = vld [vmem:[%s637 + $0x38] sm:$0xf]
        %v905 = vld [vmem:[%s637 + $0x3c] sm:$0xff]
        %v906 = vld [vmem:[%s637 + $0x44] sm:$0xf]
        %v907 = vld [vmem:[%s637 + $0x48] sm:$0xff]
        %v908 = vld [vmem:[%s637 + $0x50] sm:$0xf]
        %v909 = vld [vmem:[%s637 + $0x54] sm:$0xff]
        %v910 = vld [vmem:[%s637 + $0x5c] sm:$0xf]
        %v911 = vld [vmem:[%s637 + $0x60] sm:$0xff]
        %v912 = vld [vmem:[%s637 + $0x68] sm:$0xf]
        %v913 = vld [vmem:[%s637 + $0x6c] sm:$0xff]
        %v914 = vld [vmem:[%s637 + $0x74] sm:$0xf]
        %v915 = vld [vmem:[%s637 + $0x78] sm:$0xff]
        %v916 = vld [vmem:[%s637 + $0x80] sm:$0xf]
        %v917 = vld [vmem:[%s637 + $0x84] sm:$0xff]
        %v918 = vld [vmem:[%s637 + $0x8c] sm:$0xf]
        %v919 = vld [vmem:[%s637 + $0x90] sm:$0xff]
        %v920 = vld [vmem:[%s637 + $0x98] sm:$0xf]
        %v921 = vld [vmem:[%s637 + $0x9c] sm:$0xff]
        %v922 = vld [vmem:[%s637 + $0xa4] sm:$0xf]
        %v923 = vld [vmem:[%s637 + $0xa8] sm:$0xff]
        %v924 = vld [vmem:[%s637 + $0xb0] sm:$0xf]
        %v925 = vld [vmem:[%s637 + $0xb4] sm:$0xff]
        %v926 = vld [vmem:[%s637 + $0xbc] sm:$0xf]
        %v927 = vld [vmem:[%s758] sm:$0x7]
        %v929 = vlaneseq
        %v930 = vshrl.u32 %v929, 7
        %v931 = vsub.s32 0, %v930
        %v932 = vrot.slane %v927, %v931
        %v933 = vlaneseq
        %v934 = vshrl.u32 %v933, 7
        %v935 = vsub.s32 1, %v934
        %v936 = vrot.slane %v927, %v935
        %v937 = vlaneseq
        %v938 = vshrl.u32 %v937, 7
        %v939 = vsub.s32 2, %v938
        %v940 = vrot.slane %v927, %v939
        %v976 = vunpack.c.l.b16 %v895
        %v977 = vunpack.c.h.b16 %v895
        %v978 = vunpack.c.l.b16 %v896
        %v979 = vunpack.c.l.b16 %v897
        %v980 = vunpack.c.h.b16 %v897
        %v981 = vunpack.c.l.b16 %v898
        %v982 = vunpack.c.l.b16 %v899
        %v983 = vunpack.c.h.b16 %v899
        %v984 = vunpack.c.l.b16 %v900
        %v985 = vunpack.c.l.b16 %v901
        %v986 = vunpack.c.h.b16 %v901
        %v987 = vunpack.c.l.b16 %v902
        %v988 = vunpack.c.l.b16 %v903
        %v989 = vunpack.c.h.b16 %v903
        %v990 = vunpack.c.l.b16 %v904
        %v991 = vunpack.c.l.b16 %v905
        %v992 = vunpack.c.h.b16 %v905
        %v993 = vunpack.c.l.b16 %v906
        %v994 = vunpack.c.l.b16 %v907
        %v995 = vunpack.c.h.b16 %v907
        %v996 = vunpack.c.l.b16 %v908
        %v997 = vunpack.c.l.b16 %v909
        %v998 = vunpack.c.h.b16 %v909
        %v999 = vunpack.c.l.b16 %v910
        %v1000 = vunpack.c.l.b16 %v911
        %v1001 = vunpack.c.h.b16 %v911
        %v1002 = vunpack.c.l.b16 %v912
        %v1003 = vunpack.c.l.b16 %v913
        %v1004 = vunpack.c.h.b16 %v913
        %v1005 = vunpack.c.l.b16 %v914
        %v1006 = vunpack.c.l.b16 %v915
        %v1007 = vunpack.c.h.b16 %v915
        %v1008 = vunpack.c.l.b16 %v916
        %v1009 = vunpack.c.l.b16 %v917
        %v1010 = vunpack.c.h.b16 %v917
        %v1011 = vunpack.c.l.b16 %v918
        %v1012 = vunpack.c.l.b16 %v919
        %v1013 = vunpack.c.h.b16 %v919
        %v1014 = vunpack.c.l.b16 %v920
        %v1015 = vunpack.c.l.b16 %v921
        %v1016 = vunpack.c.h.b16 %v921
        %v1017 = vunpack.c.l.b16 %v922
        %v1018 = vunpack.c.l.b16 %v923
        %v1019 = vunpack.c.h.b16 %v923
        %v1020 = vunpack.c.l.b16 %v924
        %v1021 = vunpack.c.l.b16 %v925
        %v1022 = vunpack.c.h.b16 %v925
        %v1023 = vunpack.c.l.b16 %v926
        %v1024 = vpack.c.b16 %v979, %v976
        %v1025 = vpack.c.b16 %v980, %v977
        %v1026 = vpack.c.b16 %v981, %v978
        %v1027 = vpack.c.b16 %v985, %v982
        %v1028 = vpack.c.b16 %v986, %v983
        %v1029 = vpack.c.b16 %v987, %v984
        %v1030 = vpack.c.b16 %v991, %v988
        %v1031 = vpack.c.b16 %v992, %v989
        %v1032 = vpack.c.b16 %v993, %v990
        %v1033 = vpack.c.b16 %v997, %v994
        %v1034 = vpack.c.b16 %v998, %v995
        %v1035 = vpack.c.b16 %v999, %v996
        %v1036 = vpack.c.b16 %v1003, %v1000
        %v1037 = vpack.c.b16 %v1004, %v1001
        %v1038 = vpack.c.b16 %v1005, %v1002
        %v1039 = vpack.c.b16 %v1009, %v1006
        %v1040 = vpack.c.b16 %v1010, %v1007
        %v1041 = vpack.c.b16 %v1011, %v1008
        %v1042 = vpack.c.b16 %v1015, %v1012
        %v1043 = vpack.c.b16 %v1016, %v1013
        %v1044 = vpack.c.b16 %v1017, %v1014
        %v1045 = vpack.c.b16 %v1021, %v1018
        %v1046 = vpack.c.b16 %v1022, %v1019
        %v1047 = vpack.c.b16 %v1023, %v1020
        %1072 = vmatprep.subr.bf16.mxu0 %v1046
        %1073 = vmatpush1.bf16.msra.mxu0 %v1045
        %1074 = vmatprep.subr.bf16.mxu0 %v1043
        %1075 = vmatpush1.bf16.msra.mxu0 %v1042
        %1076 = vmatprep.subr.bf16.mxu0 %v1040
        %1077 = vmatpush1.bf16.msra.mxu0 %v1039
        %1078 = vmatprep.subr.bf16.mxu0 %v1037
        %1079 = vmatpush1.bf16.msra.mxu0 %v1036
        %1080 = vmatprep.subr.bf16.mxu0 %v1034
        %1081 = vmatpush1.bf16.msra.mxu0 %v1033
        %1082 = vmatprep.subr.bf16.mxu0 %v1031
        %1083 = vmatpush1.bf16.msra.mxu0 %v1030
        %1084 = vmatprep.subr.bf16.mxu0 %v1028
        %1085 = vmatpush1.bf16.msra.mxu0 %v1027
        %1086 = vmatprep.subr.bf16.mxu0 %v1025
        %1087 = vmatpush1.bf16.msra.mxu0 %v1024
        %1088 = vmatprep.subr.bf16.mxu0 0
        %1089 = vmatpush2.bf16.msra.mxu0 0
        %1090 = vmatprep.subr.bf16.mxu0 0
        %1091 = vmatpush2.bf16.msra.mxu0 0
        %1092 = vmatprep.subr.bf16.mxu0 0
        %1093 = vmatpush2.bf16.msra.mxu0 0
        %1094 = vmatprep.subr.bf16.mxu0 0
        %1095 = vmatpush2.bf16.msra.mxu0 0
        %1096 = vmatprep.subr.bf16.mxu0 0
        %1097 = vmatpush2.bf16.msra.mxu0 0
        %1098 = vmatprep.subr.bf16.mxu0 0
        %1099 = vmatpush2.bf16.msra.mxu0 0
        %1100 = vmatprep.subr.bf16.mxu0 0
        %1101 = vmatpush2.bf16.msra.mxu0 0
        %1102 = vmatprep.subr.bf16.mxu0 0
        %1103 = vmatpush2.bf16.msra.mxu0 0
        %1104 = vmatprep.mubr.bf16.mxu0 0
        %1105 = vmatmul.mubr.bf16.gmra.mxu0 %v893
        %v1106 = vpop.f32.mrf.mxu0
        %v1107 = vadd.f32 %v932, %v1106
        %v1108 = vpop.f32.mrf.mxu0
        %v1109 = vadd.f32 %v936, %v1108
        %v1110 = vpop.f32.mrf.mxu0
        %v1111 = vadd.f32 %v932, %v1110
        %v1112 = vpop.f32.mrf.mxu0
        %v1113 = vadd.f32 %v936, %v1112
        %1114 = vmatprep.mubr.bf16.mxu0 0
        %1115 = vmatmul.mubr.bf16.gmra.mxu0 %v894
        %v1116 = vpop.f32.mrf.mxu0
        %v1117 = vadd.f32 %v932, %v1116
        %v1118 = vpop.f32.mrf.mxu0
        %v1119 = vadd.f32 %v936, %v1118
        %v1120 = vpop.f32.mrf.mxu0
        %v1121 = vadd.f32 %v932, %v1120
        %v1122 = vpop.f32.mrf.mxu0
        %v1123 = vadd.f32 %v936, %v1122
        %1124 = vdwg.mxu0
        %1125 = vmatprep.subr.bf16.mxu0 0
        %1126 = vmatpush1.bf16.msra.mxu0 %v1047
        %1127 = vmatprep.subr.bf16.mxu0 0
        %1128 = vmatpush1.bf16.msra.mxu0 %v1044
        %1129 = vmatprep.subr.bf16.mxu0 0
        %1130 = vmatpush1.bf16.msra.mxu0 %v1041
        %1131 = vmatprep.subr.bf16.mxu0 0
        %1132 = vmatpush1.bf16.msra.mxu0 %v1038
        %1133 = vmatprep.subr.bf16.mxu0 0
        %1134 = vmatpush1.bf16.msra.mxu0 %v1035
        %1135 = vmatprep.subr.bf16.mxu0 0
        %1136 = vmatpush1.bf16.msra.mxu0 %v1032
        %1137 = vmatprep.subr.bf16.mxu0 0
        %1138 = vmatpush1.bf16.msra.mxu0 %v1029
        %1139 = vmatprep.subr.bf16.mxu0 0
        %1140 = vmatpush1.bf16.msra.mxu0 %v1026
        %1141 = vmatprep.subr.bf16.mxu0 0
        %1142 = vmatpush2.bf16.msra.mxu0 0
        %1143 = vmatprep.subr.bf16.mxu0 0
        %1144 = vmatpush2.bf16.msra.mxu0 0
        %1145 = vmatprep.subr.bf16.mxu0 0
        %1146 = vmatpush2.bf16.msra.mxu0 0
        %1147 = vmatprep.subr.bf16.mxu0 0
        %1148 = vmatpush2.bf16.msra.mxu0 0
        %1149 = vmatprep.subr.bf16.mxu0 0
        %1150 = vmatpush2.bf16.msra.mxu0 0
        %1151 = vmatprep.subr.bf16.mxu0 0
        %1152 = vmatpush2.bf16.msra.mxu0 0
        %1153 = vmatprep.subr.bf16.mxu0 0
        %1154 = vmatpush2.bf16.msra.mxu0 0
        %1155 = vmatprep.subr.bf16.mxu0 0
        %1156 = vmatpush2.bf16.msra.mxu0 0
        %1157 = vmatprep.mubr.bf16.mxu0 0
        %1158 = vmatmul.mubr.bf16.gmra.mxu0 %v893
        %v1159 = vpop.f32.mrf.mxu0
        %v1160 = vadd.f32 %v940, %v1159
        %v1161 = vpop.f32.mrf.mxu0
        %v1162 = vpop.f32.mrf.mxu0
        %v1163 = vadd.f32 %v940, %v1162
        %v1164 = vpop.f32.mrf.mxu0
        %1165 = vmatprep.mubr.bf16.mxu0 0
        %1166 = vmatmul.mubr.bf16.gmra.mxu0 %v894
        %v1167 = vpop.f32.mrf.mxu0
        %v1168 = vadd.f32 %v940, %v1167
        %v1169 = vpop.f32.mrf.mxu0
        %v1170 = vpop.f32.mrf.mxu0
        %v1171 = vadd.f32 %v940, %v1170
        %v1172 = vpop.f32.mrf.mxu0
        %1173 = vdwg.mxu0
        %v1174 = vmul.f32 %v1107, 0.17677669
        %v1175 = vmul.f32 %v1111, 0.17677669
        %v1176 = vmul.f32 %v1117, 0.17677669
        %v1177 = vmul.f32 %v1121, 0.17677669
        %1180 = vrot.lane.b32.xlu0 %v1174, 96
        %v1181 = vpop.permute.xlu0 %1180
        %1182 = vrot.lane.b32.xlu0 %v1175, 96
        %v1183 = vpop.permute.xlu0 %1182
        %1186 = vrot.lane.b32.xlu0 %v1174, 64
        %v1187 = vpop.permute.xlu0 %1186
        %1188 = vrot.lane.b32.xlu0 %v1175, 64
        %v1189 = vpop.permute.xlu0 %1188
        %1192 = vrot.lane.b32.xlu0 %v1174, 32
        %v1193 = vpop.permute.xlu0 %1192
        %1194 = vrot.lane.b32.xlu0 %v1175, 32
        %v1195 = vpop.permute.xlu0 %1194
        %v1198 = vcombine.low %v1174, %v1187
        %v1199 = vcombine.high %v1174, %v1187
        %v1201 = vunpack.c.l.s4 1983009808
        %v1202 = vunpack.c.0.s8 %v1201
        %v1203 = vlaneseq
        %v1204 = vshrl.u32 %v1203, 7
        %v1205 = vsub.s32 %v1202, %v1204
        %v1206 = vrot.slane %v1198, %v1205
        %v1208 = vunpack.c.l.s4 1983009808
        %v1209 = vunpack.c.0.s8 %v1208
        %v1210 = vlaneseq
        %v1211 = vshrl.u32 %v1210, 7
        %v1212 = vsub.s32 %v1209, %v1211
        %v1213 = vrot.slane %v1199, %v1212
        %v1214 = vcombine.low %v1181, %v1193
        %v1215 = vcombine.high %v1181, %v1193
        %v1217 = vunpack.c.l.s4 1983009808
        %v1218 = vunpack.c.0.s8 %v1217
        %v1219 = vlaneseq
        %v1220 = vshrl.u32 %v1219, 7
        %v1221 = vsub.s32 %v1218, %v1220
        %v1222 = vrot.slane %v1214, %v1221
        %v1224 = vunpack.c.l.s4 1983009808
        %v1225 = vunpack.c.0.s8 %v1224
        %v1226 = vlaneseq
        %v1227 = vshrl.u32 %v1226, 7
        %v1228 = vsub.s32 %v1225, %v1227
        %v1229 = vrot.slane %v1215, %v1228
        %v1230 = vcombine.low %v1206, %v1222
        %v1231 = vcombine.high %v1206, %v1222
        %v1233 = vunpack.c.l.s4 1934713408
        %v1234 = vunpack.c.0.s8 %v1233
        %v1235 = vlaneseq
        %v1236 = vshrl.u32 %v1235, 7
        %v1237 = vsub.s32 %v1234, %v1236
        %v1238 = vrot.slane %v1230, %v1237
        %v1240 = vunpack.c.l.s4 1934713408
        %v1241 = vunpack.c.0.s8 %v1240
        %v1242 = vlaneseq
        %v1243 = vshrl.u32 %v1242, 7
        %v1244 = vsub.s32 %v1241, %v1243
        %v1245 = vrot.slane %v1231, %v1244
        %v1246 = vcombine.low %v1213, %v1229
        %v1247 = vcombine.high %v1213, %v1229
        %v1249 = vunpack.c.l.s4 1934713408
        %v1250 = vunpack.c.0.s8 %v1249
        %v1251 = vlaneseq
        %v1252 = vshrl.u32 %v1251, 7
        %v1253 = vsub.s32 %v1250, %v1252
        %v1254 = vrot.slane %v1246, %v1253
        %v1256 = vunpack.c.l.s4 1934713408
        %v1257 = vunpack.c.0.s8 %v1256
        %v1258 = vlaneseq
        %v1259 = vshrl.u32 %v1258, 7
        %v1260 = vsub.s32 %v1257, %v1259
        %v1261 = vrot.slane %v1247, %v1260
        %v1262 = vcombine.high %v1238, 0.0
        %v1263 = vcombine.high %v1245, 0.0
        %v1264 = vcombine.high %v1254, 0.0
        %v1265 = vcombine.high %v1261, 0.0
        %v1266 = vcombine.low %v1175, %v1189
        %v1267 = vcombine.high %v1175, %v1189
        %v1269 = vunpack.c.l.s4 1983009808
        %v1270 = vunpack.c.0.s8 %v1269
        %v1271 = vlaneseq
        %v1272 = vshrl.u32 %v1271, 7
        %v1273 = vsub.s32 %v1270, %v1272
        %v1274 = vrot.slane %v1266, %v1273
        %v1276 = vunpack.c.l.s4 1983009808
        %v1277 = vunpack.c.0.s8 %v1276
        %v1278 = vlaneseq
        %v1279 = vshrl.u32 %v1278, 7
        %v1280 = vsub.s32 %v1277, %v1279
        %v1281 = vrot.slane %v1267, %v1280
        %v1282 = vcombine.low %v1183, %v1195
        %v1283 = vcombine.high %v1183, %v1195
        %v1285 = vunpack.c.l.s4 1983009808
        %v1286 = vunpack.c.0.s8 %v1285
        %v1287 = vlaneseq
        %v1288 = vshrl.u32 %v1287, 7
        %v1289 = vsub.s32 %v1286, %v1288
        %v1290 = vrot.slane %v1282, %v1289
        %v1292 = vunpack.c.l.s4 1983009808
        %v1293 = vunpack.c.0.s8 %v1292
        %v1294 = vlaneseq
        %v1295 = vshrl.u32 %v1294, 7
        %v1296 = vsub.s32 %v1293, %v1295
        %v1297 = vrot.slane %v1283, %v1296
        %v1298 = vcombine.low %v1274, %v1290
        %v1299 = vcombine.high %v1274, %v1290
        %v1301 = vunpack.c.l.s4 1934713408
        %v1302 = vunpack.c.0.s8 %v1301
        %v1303 = vlaneseq
        %v1304 = vshrl.u32 %v1303, 7
        %v1305 = vsub.s32 %v1302, %v1304
        %v1306 = vrot.slane %v1298, %v1305
        %v1308 = vunpack.c.l.s4 1934713408
        %v1309 = vunpack.c.0.s8 %v1308
        %v1310 = vlaneseq
        %v1311 = vshrl.u32 %v1310, 7
        %v1312 = vsub.s32 %v1309, %v1311
        %v1313 = vrot.slane %v1299, %v1312
        %v1314 = vcombine.low %v1281, %v1297
        %v1315 = vcombine.high %v1281, %v1297
        %v1317 = vunpack.c.l.s4 1934713408
        %v1318 = vunpack.c.0.s8 %v1317
        %v1319 = vlaneseq
        %v1320 = vshrl.u32 %v1319, 7
        %v1321 = vsub.s32 %v1318, %v1320
        %v1322 = vrot.slane %v1314, %v1321
        %v1324 = vunpack.c.l.s4 1934713408
        %v1325 = vunpack.c.0.s8 %v1324
        %v1326 = vlaneseq
        %v1327 = vshrl.u32 %v1326, 7
        %v1328 = vsub.s32 %v1325, %v1327
        %v1329 = vrot.slane %v1315, %v1328
        %v1330 = vcombine.high %v1306, 0.0
        %v1331 = vcombine.high %v1313, 0.0
        %v1332 = vcombine.high %v1322, 0.0
        %v1333 = vcombine.high %v1329, 0.0
        %v1334 = vpack.c.bf16 %v1238, %v1238
        %v1335 = vpack.c.bf16 %v1262, %v1262
        %v1336 = vpack.c.bf16 %v1245, %v1245
        %v1337 = vpack.c.bf16 %v1263, %v1263
        %v1338 = vpack.c.bf16 %v1254, %v1254
        %v1339 = vpack.c.bf16 %v1264, %v1264
        %v1340 = vpack.c.bf16 %v1261, %v1261
        %v1341 = vpack.c.bf16 %v1265, %v1265
        %v1342 = vpack.c.bf16 %v1306, %v1306
        %v1343 = vpack.c.bf16 %v1330, %v1330
        %v1344 = vpack.c.bf16 %v1313, %v1313
        %v1345 = vpack.c.bf16 %v1331, %v1331
        %v1346 = vpack.c.bf16 %v1322, %v1322
        %v1347 = vpack.c.bf16 %v1332, %v1332
        %v1348 = vpack.c.bf16 %v1329, %v1329
        %v1349 = vpack.c.bf16 %v1333, %v1333
        %v1350 = vcombine.low %v1334, %v1338
        %v1352 = vunpack.c.l.s4 1983009808
        %v1353 = vunpack.c.0.s8 %v1352
        %v1354 = vlaneseq
        %v1355 = vshrl.u32 %v1354, 7
        %v1356 = vsub.s32 %v1353, %v1355
        %v1357 = vrot.slane %v1350, %v1356
        %v1358 = vcombine.low %v1336, %v1340
        %v1360 = vunpack.c.l.s4 1983009808
        %v1361 = vunpack.c.0.s8 %v1360
        %v1362 = vlaneseq
        %v1363 = vshrl.u32 %v1362, 7
        %v1364 = vsub.s32 %v1361, %v1363
        %v1365 = vrot.slane %v1358, %v1364
        %v1366 = vcombine.low %v1342, %v1346
        %v1368 = vunpack.c.l.s4 1983009808
        %v1369 = vunpack.c.0.s8 %v1368
        %v1370 = vlaneseq
        %v1371 = vshrl.u32 %v1370, 7
        %v1372 = vsub.s32 %v1369, %v1371
        %v1373 = vrot.slane %v1366, %v1372
        %v1374 = vcombine.low %v1344, %v1348
        %v1376 = vunpack.c.l.s4 1983009808
        %v1377 = vunpack.c.0.s8 %v1376
        %v1378 = vlaneseq
        %v1379 = vshrl.u32 %v1378, 7
        %v1380 = vsub.s32 %v1377, %v1379
        %v1381 = vrot.slane %v1374, %v1380
        %v1382 = vcombine.low %v1357, %v1365
        %v1384 = vunpack.c.l.s4 1934713408
        %v1385 = vunpack.c.0.s8 %v1384
        %v1386 = vlaneseq
        %v1387 = vshrl.u32 %v1386, 7
        %v1388 = vsub.s32 %v1385, %v1387
        %v1389 = vrot.slane %v1382, %v1388
        %v1390 = vcombine.low %v1373, %v1381
        %v1392 = vunpack.c.l.s4 1934713408
        %v1393 = vunpack.c.0.s8 %v1392
        %v1394 = vlaneseq
        %v1395 = vshrl.u32 %v1394, 7
        %v1396 = vsub.s32 %v1393, %v1395
        %v1397 = vrot.slane %v1390, %v1396
        %v1398 = vcombine.low %v1389, %v1397
        %v1399 = vcombine.high %v1389, %v1397
        %v1400 = vcombine.low %v1335, %v1339
        %v1402 = vunpack.c.l.s4 1983009808
        %v1403 = vunpack.c.0.s8 %v1402
        %v1404 = vlaneseq
        %v1405 = vshrl.u32 %v1404, 7
        %v1406 = vsub.s32 %v1403, %v1405
        %v1407 = vrot.slane %v1400, %v1406
        %v1408 = vcombine.low %v1337, %v1341
        %v1410 = vunpack.c.l.s4 1983009808
        %v1411 = vunpack.c.0.s8 %v1410
        %v1412 = vlaneseq
        %v1413 = vshrl.u32 %v1412, 7
        %v1414 = vsub.s32 %v1411, %v1413
        %v1415 = vrot.slane %v1408, %v1414
        %v1416 = vcombine.low %v1343, %v1347
        %v1418 = vunpack.c.l.s4 1983009808
        %v1419 = vunpack.c.0.s8 %v1418
        %v1420 = vlaneseq
        %v1421 = vshrl.u32 %v1420, 7
        %v1422 = vsub.s32 %v1419, %v1421
        %v1423 = vrot.slane %v1416, %v1422
        %v1424 = vcombine.low %v1345, %v1349
        %v1426 = vunpack.c.l.s4 1983009808
        %v1427 = vunpack.c.0.s8 %v1426
        %v1428 = vlaneseq
        %v1429 = vshrl.u32 %v1428, 7
        %v1430 = vsub.s32 %v1427, %v1429
        %v1431 = vrot.slane %v1424, %v1430
        %v1432 = vcombine.low %v1407, %v1415
        %v1434 = vunpack.c.l.s4 1934713408
        %v1435 = vunpack.c.0.s8 %v1434
        %v1436 = vlaneseq
        %v1437 = vshrl.u32 %v1436, 7
        %v1438 = vsub.s32 %v1435, %v1437
        %v1439 = vrot.slane %v1432, %v1438
        %v1440 = vcombine.low %v1423, %v1431
        %v1442 = vunpack.c.l.s4 1934713408
        %v1443 = vunpack.c.0.s8 %v1442
        %v1444 = vlaneseq
        %v1445 = vshrl.u32 %v1444, 7
        %v1446 = vsub.s32 %v1443, %v1445
        %v1447 = vrot.slane %v1440, %v1446
        %v1448 = vcombine.low %v1439, %v1447
        %v1449 = vcombine.high %v1439, %v1447
        %v1452 = vpack.i.b16 %v1448, %v1398
        %v1453 = vshrl.u32 %v1398, 16
        %v1454 = vshrl.u32 %v1448, 16
        %v1455 = vpack.i.b16 %v1454, %v1453
        %v1458 = vpack.i.b16 %v1449, %v1399
        %v1459 = vshrl.u32 %v1399, 16
        %v1460 = vshrl.u32 %v1449, 16
        %v1461 = vpack.i.b16 %v1460, %v1459
        %1464 = vrot.lane.b32.xlu0 %v1109, 96
        %v1465 = vpop.permute.xlu0 %1464
        %1466 = vrot.lane.b32.xlu0 %v1113, 96
        %v1467 = vpop.permute.xlu0 %1466
        %1470 = vrot.lane.b32.xlu0 %v1109, 64
        %v1471 = vpop.permute.xlu0 %1470
        %1472 = vrot.lane.b32.xlu0 %v1113, 64
        %v1473 = vpop.permute.xlu0 %1472
        %1476 = vrot.lane.b32.xlu0 %v1109, 32
        %v1477 = vpop.permute.xlu0 %1476
        %1478 = vrot.lane.b32.xlu0 %v1113, 32
        %v1479 = vpop.permute.xlu0 %1478
        %v1482 = vcombine.low %v1109, %v1471
        %v1483 = vcombine.high %v1109, %v1471
        %v1485 = vunpack.c.l.s4 1983009808
        %v1486 = vunpack.c.0.s8 %v1485
        %v1487 = vlaneseq
        %v1488 = vshrl.u32 %v1487, 7
        %v1489 = vsub.s32 %v1486, %v1488
        %v1490 = vrot.slane %v1482, %v1489
        %v1492 = vunpack.c.l.s4 1983009808
        %v1493 = vunpack.c.0.s8 %v1492
        %v1494 = vlaneseq
        %v1495 = vshrl.u32 %v1494, 7
        %v1496 = vsub.s32 %v1493, %v1495
        %v1497 = vrot.slane %v1483, %v1496
        %v1498 = vcombine.low %v1465, %v1477
        %v1499 = vcombine.high %v1465, %v1477
        %v1501 = vunpack.c.l.s4 1983009808
        %v1502 = vunpack.c.0.s8 %v1501
        %v1503 = vlaneseq
        %v1504 = vshrl.u32 %v1503, 7
        %v1505 = vsub.s32 %v1502, %v1504
        %v1506 = vrot.slane %v1498, %v1505
        %v1508 = vunpack.c.l.s4 1983009808
        %v1509 = vunpack.c.0.s8 %v1508
        %v1510 = vlaneseq
        %v1511 = vshrl.u32 %v1510, 7
        %v1512 = vsub.s32 %v1509, %v1511
        %v1513 = vrot.slane %v1499, %v1512
        %v1514 = vcombine.low %v1490, %v1506
        %v1515 = vcombine.high %v1490, %v1506
        %v1517 = vunpack.c.l.s4 1934713408
        %v1518 = vunpack.c.0.s8 %v1517
        %v1519 = vlaneseq
        %v1520 = vshrl.u32 %v1519, 7
        %v1521 = vsub.s32 %v1518, %v1520
        %v1522 = vrot.slane %v1514, %v1521
        %v1524 = vunpack.c.l.s4 1934713408
        %v1525 = vunpack.c.0.s8 %v1524
        %v1526 = vlaneseq
        %v1527 = vshrl.u32 %v1526, 7
        %v1528 = vsub.s32 %v1525, %v1527
        %v1529 = vrot.slane %v1515, %v1528
        %v1530 = vcombine.low %v1497, %v1513
        %v1531 = vcombine.high %v1497, %v1513
        %v1533 = vunpack.c.l.s4 1934713408
        %v1534 = vunpack.c.0.s8 %v1533
        %v1535 = vlaneseq
        %v1536 = vshrl.u32 %v1535, 7
        %v1537 = vsub.s32 %v1534, %v1536
        %v1538 = vrot.slane %v1530, %v1537
        %v1540 = vunpack.c.l.s4 1934713408
        %v1541 = vunpack.c.0.s8 %v1540
        %v1542 = vlaneseq
        %v1543 = vshrl.u32 %v1542, 7
        %v1544 = vsub.s32 %v1541, %v1543
        %v1545 = vrot.slane %v1531, %v1544
        %v1546 = vcombine.high %v1522, 0.0
        %v1547 = vcombine.high %v1529, 0.0
        %v1548 = vcombine.high %v1538, 0.0
        %v1549 = vcombine.high %v1545, 0.0
        %v1550 = vcombine.low %v1113, %v1473
        %v1551 = vcombine.high %v1113, %v1473
        %v1553 = vunpack.c.l.s4 1983009808
        %v1554 = vunpack.c.0.s8 %v1553
        %v1555 = vlaneseq
        %v1556 = vshrl.u32 %v1555, 7
        %v1557 = vsub.s32 %v1554, %v1556
        %v1558 = vrot.slane %v1550, %v1557
        %v1560 = vunpack.c.l.s4 1983009808
        %v1561 = vunpack.c.0.s8 %v1560
        %v1562 = vlaneseq
        %v1563 = vshrl.u32 %v1562, 7
        %v1564 = vsub.s32 %v1561, %v1563
        %v1565 = vrot.slane %v1551, %v1564
        %v1566 = vcombine.low %v1467, %v1479
        %v1567 = vcombine.high %v1467, %v1479
        %v1569 = vunpack.c.l.s4 1983009808
        %v1570 = vunpack.c.0.s8 %v1569
        %v1571 = vlaneseq
        %v1572 = vshrl.u32 %v1571, 7
        %v1573 = vsub.s32 %v1570, %v1572
        %v1574 = vrot.slane %v1566, %v1573
        %v1576 = vunpack.c.l.s4 1983009808
        %v1577 = vunpack.c.0.s8 %v1576
        %v1578 = vlaneseq
        %v1579 = vshrl.u32 %v1578, 7
        %v1580 = vsub.s32 %v1577, %v1579
        %v1581 = vrot.slane %v1567, %v1580
        %v1582 = vcombine.low %v1558, %v1574
        %v1583 = vcombine.high %v1558, %v1574
        %v1585 = vunpack.c.l.s4 1934713408
        %v1586 = vunpack.c.0.s8 %v1585
        %v1587 = vlaneseq
        %v1588 = vshrl.u32 %v1587, 7
        %v1589 = vsub.s32 %v1586, %v1588
        %v1590 = vrot.slane %v1582, %v1589
        %v1592 = vunpack.c.l.s4 1934713408
        %v1593 = vunpack.c.0.s8 %v1592
        %v1594 = vlaneseq
        %v1595 = vshrl.u32 %v1594, 7
        %v1596 = vsub.s32 %v1593, %v1595
        %v1597 = vrot.slane %v1583, %v1596
        %v1598 = vcombine.low %v1565, %v1581
        %v1599 = vcombine.high %v1565, %v1581
        %v1601 = vunpack.c.l.s4 1934713408
        %v1602 = vunpack.c.0.s8 %v1601
        %v1603 = vlaneseq
        %v1604 = vshrl.u32 %v1603, 7
        %v1605 = vsub.s32 %v1602, %v1604
        %v1606 = vrot.slane %v1598, %v1605
        %v1608 = vunpack.c.l.s4 1934713408
        %v1609 = vunpack.c.0.s8 %v1608
        %v1610 = vlaneseq
        %v1611 = vshrl.u32 %v1610, 7
        %v1612 = vsub.s32 %v1609, %v1611
        %v1613 = vrot.slane %v1599, %v1612
        %v1614 = vcombine.high %v1590, 0.0
        %v1615 = vcombine.high %v1597, 0.0
        %v1616 = vcombine.high %v1606, 0.0
        %v1617 = vcombine.high %v1613, 0.0
        %v1618 = vpack.c.bf16 %v1522, %v1522
        %v1619 = vpack.c.bf16 %v1546, %v1546
        %v1620 = vpack.c.bf16 %v1529, %v1529
        %v1621 = vpack.c.bf16 %v1547, %v1547
        %v1622 = vpack.c.bf16 %v1538, %v1538
        %v1623 = vpack.c.bf16 %v1548, %v1548
        %v1624 = vpack.c.bf16 %v1545, %v1545
        %v1625 = vpack.c.bf16 %v1549, %v1549
        %v1626 = vpack.c.bf16 %v1590, %v1590
        %v1627 = vpack.c.bf16 %v1614, %v1614
        %v1628 = vpack.c.bf16 %v1597, %v1597
        %v1629 = vpack.c.bf16 %v1615, %v1615
        %v1630 = vpack.c.bf16 %v1606, %v1606
        %v1631 = vpack.c.bf16 %v1616, %v1616
        %v1632 = vpack.c.bf16 %v1613, %v1613
        %v1633 = vpack.c.bf16 %v1617, %v1617
        %v1634 = vcombine.low %v1618, %v1622
        %v1636 = vunpack.c.l.s4 1983009808
        %v1637 = vunpack.c.0.s8 %v1636
        %v1638 = vlaneseq
        %v1639 = vshrl.u32 %v1638, 7
        %v1640 = vsub.s32 %v1637, %v1639
        %v1641 = vrot.slane %v1634, %v1640
        %v1642 = vcombine.low %v1620, %v1624
        %v1644 = vunpack.c.l.s4 1983009808
        %v1645 = vunpack.c.0.s8 %v1644
        %v1646 = vlaneseq
        %v1647 = vshrl.u32 %v1646, 7
        %v1648 = vsub.s32 %v1645, %v1647
        %v1649 = vrot.slane %v1642, %v1648
        %v1650 = vcombine.low %v1626, %v1630
        %v1652 = vunpack.c.l.s4 1983009808
        %v1653 = vunpack.c.0.s8 %v1652
        %v1654 = vlaneseq
        %v1655 = vshrl.u32 %v1654, 7
        %v1656 = vsub.s32 %v1653, %v1655
        %v1657 = vrot.slane %v1650, %v1656
        %v1658 = vcombine.low %v1628, %v1632
        %v1660 = vunpack.c.l.s4 1983009808
        %v1661 = vunpack.c.0.s8 %v1660
        %v1662 = vlaneseq
        %v1663 = vshrl.u32 %v1662, 7
        %v1664 = vsub.s32 %v1661, %v1663
        %v1665 = vrot.slane %v1658, %v1664
        %v1666 = vcombine.low %v1641, %v1649
        %v1668 = vunpack.c.l.s4 1934713408
        %v1669 = vunpack.c.0.s8 %v1668
        %v1670 = vlaneseq
        %v1671 = vshrl.u32 %v1670, 7
        %v1672 = vsub.s32 %v1669, %v1671
        %v1673 = vrot.slane %v1666, %v1672
        %v1674 = vcombine.low %v1657, %v1665
        %v1676 = vunpack.c.l.s4 1934713408
        %v1677 = vunpack.c.0.s8 %v1676
        %v1678 = vlaneseq
        %v1679 = vshrl.u32 %v1678, 7
        %v1680 = vsub.s32 %v1677, %v1679
        %v1681 = vrot.slane %v1674, %v1680
        %v1682 = vcombine.low %v1673, %v1681
        %v1683 = vcombine.high %v1673, %v1681
        %v1684 = vcombine.low %v1619, %v1623
        %v1686 = vunpack.c.l.s4 1983009808
        %v1687 = vunpack.c.0.s8 %v1686
        %v1688 = vlaneseq
        %v1689 = vshrl.u32 %v1688, 7
        %v1690 = vsub.s32 %v1687, %v1689
        %v1691 = vrot.slane %v1684, %v1690
        %v1692 = vcombine.low %v1621, %v1625
        %v1694 = vunpack.c.l.s4 1983009808
        %v1695 = vunpack.c.0.s8 %v1694
        %v1696 = vlaneseq
        %v1697 = vshrl.u32 %v1696, 7
        %v1698 = vsub.s32 %v1695, %v1697
        %v1699 = vrot.slane %v1692, %v1698
        %v1700 = vcombine.low %v1627, %v1631
        %v1702 = vunpack.c.l.s4 1983009808
        %v1703 = vunpack.c.0.s8 %v1702
        %v1704 = vlaneseq
        %v1705 = vshrl.u32 %v1704, 7
        %v1706 = vsub.s32 %v1703, %v1705
        %v1707 = vrot.slane %v1700, %v1706
        %v1708 = vcombine.low %v1629, %v1633
        %v1710 = vunpack.c.l.s4 1983009808
        %v1711 = vunpack.c.0.s8 %v1710
        %v1712 = vlaneseq
        %v1713 = vshrl.u32 %v1712, 7
        %v1714 = vsub.s32 %v1711, %v1713
        %v1715 = vrot.slane %v1708, %v1714
        %v1716 = vcombine.low %v1691, %v1699
        %v1718 = vunpack.c.l.s4 1934713408
        %v1719 = vunpack.c.0.s8 %v1718
        %v1720 = vlaneseq
        %v1721 = vshrl.u32 %v1720, 7
        %v1722 = vsub.s32 %v1719, %v1721
        %v1723 = vrot.slane %v1716, %v1722
        %v1724 = vcombine.low %v1707, %v1715
        %v1726 = vunpack.c.l.s4 1934713408
        %v1727 = vunpack.c.0.s8 %v1726
        %v1728 = vlaneseq
        %v1729 = vshrl.u32 %v1728, 7
        %v1730 = vsub.s32 %v1727, %v1729
        %v1731 = vrot.slane %v1724, %v1730
        %v1732 = vcombine.low %v1723, %v1731
        %v1733 = vcombine.high %v1723, %v1731
        %v1736 = vpack.i.b16 %v1732, %v1682
        %v1737 = vshrl.u32 %v1682, 16
        %v1738 = vshrl.u32 %v1732, 16
        %v1739 = vpack.i.b16 %v1738, %v1737
        %v1742 = vpack.i.b16 %v1733, %v1683
        %v1743 = vshrl.u32 %v1683, 16
        %v1744 = vshrl.u32 %v1733, 16
        %v1745 = vpack.i.b16 %v1744, %v1743
        %1748 = vrot.lane.b32.xlu0 %v1160, 96
        %v1749 = vpop.permute.xlu0 %1748
        %1750 = vrot.lane.b32.xlu0 %v1163, 96
        %v1751 = vpop.permute.xlu0 %1750
        %1754 = vrot.lane.b32.xlu0 %v1160, 64
        %v1755 = vpop.permute.xlu0 %1754
        %1756 = vrot.lane.b32.xlu0 %v1163, 64
        %v1757 = vpop.permute.xlu0 %1756
        %1760 = vrot.lane.b32.xlu0 %v1160, 32
        %v1761 = vpop.permute.xlu0 %1760
        %1762 = vrot.lane.b32.xlu0 %v1163, 32
        %v1763 = vpop.permute.xlu0 %1762
        %v1766 = vcombine.low %v1160, %v1755
        %v1767 = vcombine.high %v1160, %v1755
        %v1769 = vunpack.c.l.s4 1983009808
        %v1770 = vunpack.c.0.s8 %v1769
        %v1771 = vlaneseq
        %v1772 = vshrl.u32 %v1771, 7
        %v1773 = vsub.s32 %v1770, %v1772
        %v1774 = vrot.slane %v1766, %v1773
        %v1776 = vunpack.c.l.s4 1983009808
        %v1777 = vunpack.c.0.s8 %v1776
        %v1778 = vlaneseq
        %v1779 = vshrl.u32 %v1778, 7
        %v1780 = vsub.s32 %v1777, %v1779
        %v1781 = vrot.slane %v1767, %v1780
        %v1782 = vcombine.low %v1749, %v1761
        %v1783 = vcombine.high %v1749, %v1761
        %v1785 = vunpack.c.l.s4 1983009808
        %v1786 = vunpack.c.0.s8 %v1785
        %v1787 = vlaneseq
        %v1788 = vshrl.u32 %v1787, 7
        %v1789 = vsub.s32 %v1786, %v1788
        %v1790 = vrot.slane %v1782, %v1789
        %v1792 = vunpack.c.l.s4 1983009808
        %v1793 = vunpack.c.0.s8 %v1792
        %v1794 = vlaneseq
        %v1795 = vshrl.u32 %v1794, 7
        %v1796 = vsub.s32 %v1793, %v1795
        %v1797 = vrot.slane %v1783, %v1796
        %v1798 = vcombine.low %v1774, %v1790
        %v1799 = vcombine.high %v1774, %v1790
        %v1801 = vunpack.c.l.s4 1934713408
        %v1802 = vunpack.c.0.s8 %v1801
        %v1803 = vlaneseq
        %v1804 = vshrl.u32 %v1803, 7
        %v1805 = vsub.s32 %v1802, %v1804
        %v1806 = vrot.slane %v1798, %v1805
        %v1808 = vunpack.c.l.s4 1934713408
        %v1809 = vunpack.c.0.s8 %v1808
        %v1810 = vlaneseq
        %v1811 = vshrl.u32 %v1810, 7
        %v1812 = vsub.s32 %v1809, %v1811
        %v1813 = vrot.slane %v1799, %v1812
        %v1814 = vcombine.low %v1781, %v1797
        %v1815 = vcombine.high %v1781, %v1797
        %v1817 = vunpack.c.l.s4 1934713408
        %v1818 = vunpack.c.0.s8 %v1817
        %v1819 = vlaneseq
        %v1820 = vshrl.u32 %v1819, 7
        %v1821 = vsub.s32 %v1818, %v1820
        %v1822 = vrot.slane %v1814, %v1821
        %v1824 = vunpack.c.l.s4 1934713408
        %v1825 = vunpack.c.0.s8 %v1824
        %v1826 = vlaneseq
        %v1827 = vshrl.u32 %v1826, 7
        %v1828 = vsub.s32 %v1825, %v1827
        %v1829 = vrot.slane %v1815, %v1828
        %v1830 = vcombine.high %v1806, 0.0
        %v1831 = vcombine.high %v1813, 0.0
        %v1832 = vcombine.high %v1822, 0.0
        %v1833 = vcombine.high %v1829, 0.0
        %v1834 = vcombine.low %v1163, %v1757
        %v1835 = vcombine.high %v1163, %v1757
        %v1837 = vunpack.c.l.s4 1983009808
        %v1838 = vunpack.c.0.s8 %v1837
        %v1839 = vlaneseq
        %v1840 = vshrl.u32 %v1839, 7
        %v1841 = vsub.s32 %v1838, %v1840
        %v1842 = vrot.slane %v1834, %v1841
        %v1844 = vunpack.c.l.s4 1983009808
        %v1845 = vunpack.c.0.s8 %v1844
        %v1846 = vlaneseq
        %v1847 = vshrl.u32 %v1846, 7
        %v1848 = vsub.s32 %v1845, %v1847
        %v1849 = vrot.slane %v1835, %v1848
        %v1850 = vcombine.low %v1751, %v1763
        %v1851 = vcombine.high %v1751, %v1763
        %v1853 = vunpack.c.l.s4 1983009808
        %v1854 = vunpack.c.0.s8 %v1853
        %v1855 = vlaneseq
        %v1856 = vshrl.u32 %v1855, 7
        %v1857 = vsub.s32 %v1854, %v1856
        %v1858 = vrot.slane %v1850, %v1857
        %v1860 = vunpack.c.l.s4 1983009808
        %v1861 = vunpack.c.0.s8 %v1860
        %v1862 = vlaneseq
        %v1863 = vshrl.u32 %v1862, 7
        %v1864 = vsub.s32 %v1861, %v1863
        %v1865 = vrot.slane %v1851, %v1864
        %v1866 = vcombine.low %v1842, %v1858
        %v1867 = vcombine.high %v1842, %v1858
        %v1869 = vunpack.c.l.s4 1934713408
        %v1870 = vunpack.c.0.s8 %v1869
        %v1871 = vlaneseq
        %v1872 = vshrl.u32 %v1871, 7
        %v1873 = vsub.s32 %v1870, %v1872
        %v1874 = vrot.slane %v1866, %v1873
        %v1876 = vunpack.c.l.s4 1934713408
        %v1877 = vunpack.c.0.s8 %v1876
        %v1878 = vlaneseq
        %v1879 = vshrl.u32 %v1878, 7
        %v1880 = vsub.s32 %v1877, %v1879
        %v1881 = vrot.slane %v1867, %v1880
        %v1882 = vcombine.low %v1849, %v1865
        %v1883 = vcombine.high %v1849, %v1865
        %v1885 = vunpack.c.l.s4 1934713408
        %v1886 = vunpack.c.0.s8 %v1885
        %v1887 = vlaneseq
        %v1888 = vshrl.u32 %v1887, 7
        %v1889 = vsub.s32 %v1886, %v1888
        %v1890 = vrot.slane %v1882, %v1889
        %v1892 = vunpack.c.l.s4 1934713408
        %v1893 = vunpack.c.0.s8 %v1892
        %v1894 = vlaneseq
        %v1895 = vshrl.u32 %v1894, 7
        %v1896 = vsub.s32 %v1893, %v1895
        %v1897 = vrot.slane %v1883, %v1896
        %v1898 = vcombine.high %v1874, 0.0
        %v1899 = vcombine.high %v1881, 0.0
        %v1900 = vcombine.high %v1890, 0.0
        %v1901 = vcombine.high %v1897, 0.0
        %v1902 = vpack.c.bf16 %v1806, %v1806
        %v1903 = vpack.c.bf16 %v1830, %v1830
        %v1904 = vpack.c.bf16 %v1813, %v1813
        %v1905 = vpack.c.bf16 %v1831, %v1831
        %v1906 = vpack.c.bf16 %v1822, %v1822
        %v1907 = vpack.c.bf16 %v1832, %v1832
        %v1908 = vpack.c.bf16 %v1829, %v1829
        %v1909 = vpack.c.bf16 %v1833, %v1833
        %v1910 = vpack.c.bf16 %v1874, %v1874
        %v1911 = vpack.c.bf16 %v1898, %v1898
        %v1912 = vpack.c.bf16 %v1881, %v1881
        %v1913 = vpack.c.bf16 %v1899, %v1899
        %v1914 = vpack.c.bf16 %v1890, %v1890
        %v1915 = vpack.c.bf16 %v1900, %v1900
        %v1916 = vpack.c.bf16 %v1897, %v1897
        %v1917 = vpack.c.bf16 %v1901, %v1901
        %v1918 = vcombine.low %v1902, %v1906
        %v1920 = vunpack.c.l.s4 1983009808
        %v1921 = vunpack.c.0.s8 %v1920
        %v1922 = vlaneseq
        %v1923 = vshrl.u32 %v1922, 7
        %v1924 = vsub.s32 %v1921, %v1923
        %v1925 = vrot.slane %v1918, %v1924
        %v1926 = vcombine.low %v1904, %v1908
        %v1928 = vunpack.c.l.s4 1983009808
        %v1929 = vunpack.c.0.s8 %v1928
        %v1930 = vlaneseq
        %v1931 = vshrl.u32 %v1930, 7
        %v1932 = vsub.s32 %v1929, %v1931
        %v1933 = vrot.slane %v1926, %v1932
        %v1934 = vcombine.low %v1910, %v1914
        %v1936 = vunpack.c.l.s4 1983009808
        %v1937 = vunpack.c.0.s8 %v1936
        %v1938 = vlaneseq
        %v1939 = vshrl.u32 %v1938, 7
        %v1940 = vsub.s32 %v1937, %v1939
        %v1941 = vrot.slane %v1934, %v1940
        %v1942 = vcombine.low %v1912, %v1916
        %v1944 = vunpack.c.l.s4 1983009808
        %v1945 = vunpack.c.0.s8 %v1944
        %v1946 = vlaneseq
        %v1947 = vshrl.u32 %v1946, 7
        %v1948 = vsub.s32 %v1945, %v1947
        %v1949 = vrot.slane %v1942, %v1948
        %v1950 = vcombine.low %v1925, %v1933
        %v1952 = vunpack.c.l.s4 1934713408
        %v1953 = vunpack.c.0.s8 %v1952
        %v1954 = vlaneseq
        %v1955 = vshrl.u32 %v1954, 7
        %v1956 = vsub.s32 %v1953, %v1955
        %v1957 = vrot.slane %v1950, %v1956
        %v1958 = vcombine.low %v1941, %v1949
        %v1960 = vunpack.c.l.s4 1934713408
        %v1961 = vunpack.c.0.s8 %v1960
        %v1962 = vlaneseq
        %v1963 = vshrl.u32 %v1962, 7
        %v1964 = vsub.s32 %v1961, %v1963
        %v1965 = vrot.slane %v1958, %v1964
        %v1966 = vcombine.low %v1957, %v1965
        %v1967 = vcombine.high %v1957, %v1965
        %v1968 = vcombine.low %v1903, %v1907
        %v1970 = vunpack.c.l.s4 1983009808
        %v1971 = vunpack.c.0.s8 %v1970
        %v1972 = vlaneseq
        %v1973 = vshrl.u32 %v1972, 7
        %v1974 = vsub.s32 %v1971, %v1973
        %v1975 = vrot.slane %v1968, %v1974
        %v1976 = vcombine.low %v1905, %v1909
        %v1978 = vunpack.c.l.s4 1983009808
        %v1979 = vunpack.c.0.s8 %v1978
        %v1980 = vlaneseq
        %v1981 = vshrl.u32 %v1980, 7
        %v1982 = vsub.s32 %v1979, %v1981
        %v1983 = vrot.slane %v1976, %v1982
        %v1984 = vcombine.low %v1911, %v1915
        %v1986 = vunpack.c.l.s4 1983009808
        %v1987 = vunpack.c.0.s8 %v1986
        %v1988 = vlaneseq
        %v1989 = vshrl.u32 %v1988, 7
        %v1990 = vsub.s32 %v1987, %v1989
        %v1991 = vrot.slane %v1984, %v1990
        %v1992 = vcombine.low %v1913, %v1917
        %v1994 = vunpack.c.l.s4 1983009808
        %v1995 = vunpack.c.0.s8 %v1994
        %v1996 = vlaneseq
        %v1997 = vshrl.u32 %v1996, 7
        %v1998 = vsub.s32 %v1995, %v1997
        %v1999 = vrot.slane %v1992, %v1998
        %v2000 = vcombine.low %v1975, %v1983
        %v2002 = vunpack.c.l.s4 1934713408
        %v2003 = vunpack.c.0.s8 %v2002
        %v2004 = vlaneseq
        %v2005 = vshrl.u32 %v2004, 7
        %v2006 = vsub.s32 %v2003, %v2005
        %v2007 = vrot.slane %v2000, %v2006
        %v2008 = vcombine.low %v1991, %v1999
        %v2010 = vunpack.c.l.s4 1934713408
        %v2011 = vunpack.c.0.s8 %v2010
        %v2012 = vlaneseq
        %v2013 = vshrl.u32 %v2012, 7
        %v2014 = vsub.s32 %v2011, %v2013
        %v2015 = vrot.slane %v2008, %v2014
        %v2016 = vcombine.low %v2007, %v2015
        %v2017 = vcombine.high %v2007, %v2015
        %v2020 = vpack.i.b16 %v2016, %v1966
        %v2022 = vshrl.u32 %v1966, 16
        %v2023 = vshrl.u32 %v2016, 16
        %v2024 = vpack.i.b16 %v2023, %v2022
        %v2028 = vpack.i.b16 %v2017, %v1967
        %v2030 = vshrl.u32 %v1967, 16
        %v2031 = vshrl.u32 %v2017, 16
        %v2032 = vpack.i.b16 %v2031, %v2030
        %v2034 = vld [vmem:[#allocation2] sm:$0xff]
        %v2035 = vld [vmem:[#allocation2 + $0x8] sm:$0xff]
        %vm2036 = vcmask 261120
        %v2038 = vsel %vm2036, %v1452, 0
        %v2041 = vsel %vm2036, %v1736, 0
        %2043 = vmatprep.subr.bf16.mxu0 0
        %2044 = vmatpush1.bf16.xpose.msra.mxu0 0
        %2045 = vmatprep.subr.bf16.mxu0 0
        %2046 = vmatpush1.bf16.xpose.msra.mxu0 0
        %2047 = vmatprep.subr.bf16.mxu0 0
        %2048 = vmatpush1.bf16.xpose.msra.mxu0 0
        %2049 = vmatprep.subr.bf16.mxu0 0
        %2050 = vmatpush1.bf16.xpose.msra.mxu0 0
        %2051 = vmatprep.subr.bf16.mxu0 0
        %2052 = vmatpush1.bf16.xpose.msra.mxu0 0
        %2053 = vmatprep.subr.bf16.mxu0 0
        %2054 = vmatpush1.bf16.xpose.msra.mxu0 0
        %2055 = vmatprep.subr.bf16.mxu0 0
        %2056 = vmatpush1.bf16.xpose.msra.mxu0 0
        %2057 = vmatprep.subr.bf16.mxu0 0
        %2058 = vmatpush1.bf16.xpose.msra.mxu0 %v2041
        %2059 = vmatprep.subr.bf16.mxu0 0
        %2060 = vmatpush2.bf16.xpose.msra.mxu0 0
        %2061 = vmatprep.subr.bf16.mxu0 0
        %2062 = vmatpush2.bf16.xpose.msra.mxu0 0
        %2063 = vmatprep.subr.bf16.mxu0 0
        %2064 = vmatpush2.bf16.xpose.msra.mxu0 0
        %2065 = vmatprep.subr.bf16.mxu0 0
        %2066 = vmatpush2.bf16.xpose.msra.mxu0 0
        %2067 = vmatprep.subr.bf16.mxu0 0
        %2068 = vmatpush2.bf16.xpose.msra.mxu0 0
        %2069 = vmatprep.subr.bf16.mxu0 0
        %2070 = vmatpush2.bf16.xpose.msra.mxu0 0
        %2071 = vmatprep.subr.bf16.mxu0 0
        %2072 = vmatpush2.bf16.xpose.msra.mxu0 0
        %2073 = vmatprep.subr.bf16.mxu0 0
        %2074 = vmatpush2.bf16.xpose.msra.mxu0 0
        %2075 = vmatprep.mubr.bf16.mxu0 0
        %2076 = vmatmul.mubr.bf16.gmra.mxu0 %v2038
        %v2077 = vpop.f32.mrf.mxu0
        %v2078 = vadd.f32 %v2034, %v2077
        %v2079 = vpop.f32.mrf.mxu0
        %v2080 = vpop.f32.mrf.mxu0
        %v2081 = vadd.f32 %v2035, %v2080
        %v2082 = vpop.f32.mrf.mxu0
        %2083 = vdwg.mxu0
        %v2085 = vsel %vm2036, %v1455, 0
        %v2088 = vsel %vm2036, %v1739, 0
        %2090 = vmatprep.subr.bf16.mxu0 0
        %2091 = vmatpush1.bf16.xpose.msra.mxu0 0
        %2092 = vmatprep.subr.bf16.mxu0 0
        %2093 = vmatpush1.bf16.xpose.msra.mxu0 0
        %2094 = vmatprep.subr.bf16.mxu0 0
        %2095 = vmatpush1.bf16.xpose.msra.mxu0 0
        %2096 = vmatprep.subr.bf16.mxu0 0
        %2097 = vmatpush1.bf16.xpose.msra.mxu0 0
        %2098 = vmatprep.subr.bf16.mxu0 0
        %2099 = vmatpush1.bf16.xpose.msra.mxu0 0
        %2100 = vmatprep.subr.bf16.mxu0 0
        %2101 = vmatpush1.bf16.xpose.msra.mxu0 0
        %2102 = vmatprep.subr.bf16.mxu0 0
        %2103 = vmatpush1.bf16.xpose.msra.mxu0 0
        %2104 = vmatprep.subr.bf16.mxu0 0
        %2105 = vmatpush1.bf16.xpose.msra.mxu0 %v2088
        %2106 = vmatprep.subr.bf16.mxu0 0
        %2107 = vmatpush2.bf16.xpose.msra.mxu0 0
        %2108 = vmatprep.subr.bf16.mxu0 0
        %2109 = vmatpush2.bf16.xpose.msra.mxu0 0
        %2110 = vmatprep.subr.bf16.mxu0 0
        %2111 = vmatpush2.bf16.xpose.msra.mxu0 0
        %2112 = vmatprep.subr.bf16.mxu0 0
        %2113 = vmatpush2.bf16.xpose.msra.mxu0 0
        %2114 = vmatprep.subr.bf16.mxu0 0
        %2115 = vmatpush2.bf16.xpose.msra.mxu0 0
        %2116 = vmatprep.subr.bf16.mxu0 0
        %2117 = vmatpush2.bf16.xpose.msra.mxu0 0
        %2118 = vmatprep.subr.bf16.mxu0 0
        %2119 = vmatpush2.bf16.xpose.msra.mxu0 0
        %2120 = vmatprep.subr.bf16.mxu0 0
        %2121 = vmatpush2.bf16.xpose.msra.mxu0 0
        %2122 = vmatprep.mubr.bf16.mxu0 0
        %2123 = vmatmul.mubr.bf16.gmra.mxu0 %v2085
        %v2124 = vpop.f32.mrf.mxu0
        %v2125 = vadd.f32 %v2034, %v2124
        %v2126 = vpop.f32.mrf.mxu0
        %v2127 = vpop.f32.mrf.mxu0
        %v2128 = vadd.f32 %v2035, %v2127
        %v2129 = vpop.f32.mrf.mxu0
        %2130 = vdwg.mxu0
        %v2132 = vsel %vm2036, %v1458, 0
        %v2135 = vsel %vm2036, %v1742, 0
        %2137 = vmatprep.subr.bf16.mxu0 0
        %2138 = vmatpush1.bf16.xpose.msra.mxu0 0
        %2139 = vmatprep.subr.bf16.mxu0 0
        %2140 = vmatpush1.bf16.xpose.msra.mxu0 0
        %2141 = vmatprep.subr.bf16.mxu0 0
        %2142 = vmatpush1.bf16.xpose.msra.mxu0 0
        %2143 = vmatprep.subr.bf16.mxu0 0
        %2144 = vmatpush1.bf16.xpose.msra.mxu0 0
        %2145 = vmatprep.subr.bf16.mxu0 0
        %2146 = vmatpush1.bf16.xpose.msra.mxu0 0
        %2147 = vmatprep.subr.bf16.mxu0 0
        %2148 = vmatpush1.bf16.xpose.msra.mxu0 0
        %2149 = vmatprep.subr.bf16.mxu0 0
        %2150 = vmatpush1.bf16.xpose.msra.mxu0 0
        %2151 = vmatprep.subr.bf16.mxu0 0
        %2152 = vmatpush1.bf16.xpose.msra.mxu0 %v2135
        %2153 = vmatprep.subr.bf16.mxu0 0
        %2154 = vmatpush2.bf16.xpose.msra.mxu0 0
        %2155 = vmatprep.subr.bf16.mxu0 0
        %2156 = vmatpush2.bf16.xpose.msra.mxu0 0
        %2157 = vmatprep.subr.bf16.mxu0 0
        %2158 = vmatpush2.bf16.xpose.msra.mxu0 0
        %2159 = vmatprep.subr.bf16.mxu0 0
        %2160 = vmatpush2.bf16.xpose.msra.mxu0 0
        %2161 = vmatprep.subr.bf16.mxu0 0
        %2162 = vmatpush2.bf16.xpose.msra.mxu0 0
        %2163 = vmatprep.subr.bf16.mxu0 0
        %2164 = vmatpush2.bf16.xpose.msra.mxu0 0
        %2165 = vmatprep.subr.bf16.mxu0 0
        %2166 = vmatpush2.bf16.xpose.msra.mxu0 0
        %2167 = vmatprep.subr.bf16.mxu0 0
        %2168 = vmatpush2.bf16.xpose.msra.mxu0 0
        %2169 = vmatprep.mubr.bf16.mxu0 0
        %2170 = vmatmul.mubr.bf16.gmra.mxu0 %v2132
        %v2171 = vpop.f32.mrf.mxu0
        %v2172 = vadd.f32 %v2034, %v2171
        %v2173 = vpop.f32.mrf.mxu0
        %v2174 = vpop.f32.mrf.mxu0
        %v2175 = vadd.f32 %v2035, %v2174
        %v2176 = vpop.f32.mrf.mxu0
        %2177 = vdwg.mxu0
        %v2179 = vsel %vm2036, %v1461, 0
        %v2182 = vsel %vm2036, %v1745, 0
        %2184 = vmatprep.subr.bf16.mxu0 0
        %2185 = vmatpush1.bf16.xpose.msra.mxu0 0
        %2186 = vmatprep.subr.bf16.mxu0 0
        %2187 = vmatpush1.bf16.xpose.msra.mxu0 0
        %2188 = vmatprep.subr.bf16.mxu0 0
        %2189 = vmatpush1.bf16.xpose.msra.mxu0 0
        %2190 = vmatprep.subr.bf16.mxu0 0
        %2191 = vmatpush1.bf16.xpose.msra.mxu0 0
        %2192 = vmatprep.subr.bf16.mxu0 0
        %2193 = vmatpush1.bf16.xpose.msra.mxu0 0
        %2194 = vmatprep.subr.bf16.mxu0 0
        %2195 = vmatpush1.bf16.xpose.msra.mxu0 0
        %2196 = vmatprep.subr.bf16.mxu0 0
        %2197 = vmatpush1.bf16.xpose.msra.mxu0 0
        %2198 = vmatprep.subr.bf16.mxu0 0
        %2199 = vmatpush1.bf16.xpose.msra.mxu0 %v2182
        %2200 = vmatprep.subr.bf16.mxu0 0
        %2201 = vmatpush2.bf16.xpose.msra.mxu0 0
        %2202 = vmatprep.subr.bf16.mxu0 0
        %2203 = vmatpush2.bf16.xpose.msra.mxu0 0
        %2204 = vmatprep.subr.bf16.mxu0 0
        %2205 = vmatpush2.bf16.xpose.msra.mxu0 0
        %2206 = vmatprep.subr.bf16.mxu0 0
        %2207 = vmatpush2.bf16.xpose.msra.mxu0 0
        %2208 = vmatprep.subr.bf16.mxu0 0
        %2209 = vmatpush2.bf16.xpose.msra.mxu0 0
        %2210 = vmatprep.subr.bf16.mxu0 0
        %2211 = vmatpush2.bf16.xpose.msra.mxu0 0
        %2212 = vmatprep.subr.bf16.mxu0 0
        %2213 = vmatpush2.bf16.xpose.msra.mxu0 0
        %2214 = vmatprep.subr.bf16.mxu0 0
        %2215 = vmatpush2.bf16.xpose.msra.mxu0 0
        %2216 = vmatprep.mubr.bf16.mxu0 0
        %2217 = vmatmul.mubr.bf16.gmra.mxu0 %v2179
        %v2218 = vpop.f32.mrf.mxu0
        %v2219 = vadd.f32 %v2034, %v2218
        %v2220 = vpop.f32.mrf.mxu0
        %v2221 = vpop.f32.mrf.mxu0
        %v2222 = vadd.f32 %v2035, %v2221
        %v2223 = vpop.f32.mrf.mxu0
        %2224 = vdwg.mxu0
        %vm2225 = vcmask 130048
        %v2226 = vsel %vm2225, %v2078, -inf
        %2227 = vmax.xlane.f32.xlu0 %v2226
        %v2228 = vpop.xlane.xlu0 %2227
        %v2229 = vsel %vm2225, %v2081, -inf
        %2230 = vmax.xlane.f32.xlu0 %v2229
        %v2231 = vpop.xlane.xlu0 %2230
        %v2232 = vsel %vm2225, %v2125, -inf
        %2233 = vmax.xlane.f32.xlu0 %v2232
        %v2234 = vpop.xlane.xlu0 %2233
        %v2235 = vsel %vm2225, %v2128, -inf
        %2236 = vmax.xlane.f32.xlu0 %v2235
        %v2237 = vpop.xlane.xlu0 %2236
        %v2238 = vsel %vm2225, %v2172, -inf
        %2239 = vmax.xlane.f32.xlu0 %v2238
        %v2240 = vpop.xlane.xlu0 %2239
        %v2241 = vsel %vm2225, %v2175, -inf
        %2242 = vmax.xlane.f32.xlu0 %v2241
        %v2243 = vpop.xlane.xlu0 %2242
        %v2244 = vsel %vm2225, %v2219, -inf
        %2245 = vmax.xlane.f32.xlu0 %v2244
        %v2246 = vpop.xlane.xlu0 %2245
        %v2247 = vsel %vm2225, %v2222, -inf
        %2248 = vmax.xlane.f32.xlu0 %v2247
        %v2249 = vpop.xlane.xlu0 %2248
        %v2250 = vsub.f32 %v2078, %v2228
        %v2251 = vsub.f32 %v2081, %v2231
        %v2252 = vsub.f32 %v2125, %v2234
        %v2253 = vsub.f32 %v2128, %v2237
        %v2254 = vsub.f32 %v2172, %v2240
        %v2255 = vsub.f32 %v2175, %v2243
        %v2256 = vsub.f32 %v2219, %v2246
        %v2257 = vsub.f32 %v2222, %v2249
        %v2258 = vmul.f32 %v2250, 1.442695
        %v2259 = vpow.pop %v2258
        %v2260 = vmul.f32 %v2251, 1.442695
        %v2261 = vpow.pop %v2260
        %v2262 = vmul.f32 %v2252, 1.442695
        %v2263 = vpow.pop %v2262
        %v2264 = vmul.f32 %v2253, 1.442695
        %v2265 = vpow.pop %v2264
        %v2266 = vmul.f32 %v2254, 1.442695
        %v2267 = vpow.pop %v2266
        %v2268 = vmul.f32 %v2255, 1.442695
        %v2269 = vpow.pop %v2268
        %v2270 = vmul.f32 %v2256, 1.442695
        %v2271 = vpow.pop %v2270
        %v2272 = vmul.f32 %v2257, 1.442695
        %v2273 = vpow.pop %v2272
        %v2274 = vsel %vm2225, %v2259, 0.0
        %2275 = vadd.xlane.f32.xlu0 %v2274
        %v2276 = vpop.xlane.xlu0 %2275
        %v2277 = vsel %vm2225, %v2261, 0.0
        %2278 = vadd.xlane.f32.xlu0 %v2277
        %v2279 = vpop.xlane.xlu0 %2278
        %v2280 = vsel %vm2225, %v2263, 0.0
        %2281 = vadd.xlane.f32.xlu0 %v2280
        %v2282 = vpop.xlane.xlu0 %2281
        %v2283 = vsel %vm2225, %v2265, 0.0
        %2284 = vadd.xlane.f32.xlu0 %v2283
        %v2285 = vpop.xlane.xlu0 %2284
        %v2286 = vsel %vm2225, %v2267, 0.0
        %2287 = vadd.xlane.f32.xlu0 %v2286
        %v2288 = vpop.xlane.xlu0 %2287
        %v2289 = vsel %vm2225, %v2269, 0.0
        %2290 = vadd.xlane.f32.xlu0 %v2289
        %v2291 = vpop.xlane.xlu0 %2290
        %v2292 = vsel %vm2225, %v2271, 0.0
        %2293 = vadd.xlane.f32.xlu0 %v2292
        %v2294 = vpop.xlane.xlu0 %2293
        %v2295 = vsel %vm2225, %v2273, 0.0
        %2296 = vadd.xlane.f32.xlu0 %v2295
        %v2297 = vpop.xlane.xlu0 %2296
        %v2298 = vrcp.pop %v2276
        %v2299 = vrcp.pop %v2279
        %v2300 = vrcp.pop %v2282
        %v2301 = vrcp.pop %v2285
        %v2302 = vrcp.pop %v2288
        %v2303 = vrcp.pop %v2291
        %v2304 = vrcp.pop %v2294
        %v2305 = vrcp.pop %v2297
        %v2306 = vmul.f32 %v2259, %v2298
        %v2307 = vmul.f32 %v2261, %v2299
        %v2308 = vmul.f32 %v2263, %v2300
        %v2309 = vmul.f32 %v2265, %v2301
        %v2310 = vmul.f32 %v2267, %v2302
        %v2311 = vmul.f32 %v2269, %v2303
        %v2312 = vmul.f32 %v2271, %v2304
        %v2313 = vmul.f32 %v2273, %v2305
        %v2314 = vpack.c.bf16 %v2307, %v2306
        %v2315 = vpack.c.bf16 %v2309, %v2308
        %v2316 = vpack.c.bf16 %v2311, %v2310
        %v2317 = vpack.c.bf16 %v2313, %v2312
        %v2319 = vsel %vm2225, %v2314, 0
        %2321 = vmatprep.subr.bf16.mxu0 0
        %2322 = vmatpush1.bf16.msra.mxu0 0
        %2323 = vmatprep.subr.bf16.mxu0 0
        %2324 = vmatpush1.bf16.msra.mxu0 0
        %2325 = vmatprep.subr.bf16.mxu0 0
        %2326 = vmatpush1.bf16.msra.mxu0 0
        %2327 = vmatprep.subr.bf16.mxu0 0
        %2328 = vmatpush1.bf16.msra.mxu0 0
        %2329 = vmatprep.subr.bf16.mxu0 0
        %2330 = vmatpush1.bf16.msra.mxu0 0
        %2331 = vmatprep.subr.bf16.mxu0 0
        %2332 = vmatpush1.bf16.msra.mxu0 0
        %2333 = vmatprep.subr.bf16.mxu0 0
        %2334 = vmatpush1.bf16.msra.mxu0 0
        %2335 = vmatprep.subr.bf16.mxu0 0
        %2336 = vmatpush1.bf16.msra.mxu0 %v2020
        %2337 = vmatprep.subr.bf16.mxu0 0
        %2338 = vmatpush2.bf16.msra.mxu0 0
        %2339 = vmatprep.subr.bf16.mxu0 0
        %2340 = vmatpush2.bf16.msra.mxu0 0
        %2341 = vmatprep.subr.bf16.mxu0 0
        %2342 = vmatpush2.bf16.msra.mxu0 0
        %2343 = vmatprep.subr.bf16.mxu0 0
        %2344 = vmatpush2.bf16.msra.mxu0 0
        %2345 = vmatprep.subr.bf16.mxu0 0
        %2346 = vmatpush2.bf16.msra.mxu0 0
        %2347 = vmatprep.subr.bf16.mxu0 0
        %2348 = vmatpush2.bf16.msra.mxu0 0
        %2349 = vmatprep.subr.bf16.mxu0 0
        %2350 = vmatpush2.bf16.msra.mxu0 0
        %2351 = vmatprep.subr.bf16.mxu0 0
        %2352 = vmatpush2.bf16.msra.mxu0 0
        %2353 = vmatprep.mubr.bf16.mxu0 0
        %2354 = vmatmul.mubr.bf16.gmra.mxu0 %v2319
        %v2355 = vpop.f32.mrf.mxu0
        %v2356 = vadd.f32 0.0, %v2355
        %v2357 = vpop.f32.mrf.mxu0
        %v2358 = vpop.f32.mrf.mxu0
        %v2359 = vadd.f32 0.0, %v2358
        %v2360 = vpop.f32.mrf.mxu0
        %2361 = vdwg.mxu0
        %v2363 = vsel %vm2225, %v2315, 0
        %2365 = vmatprep.subr.bf16.mxu0 0
        %2366 = vmatpush1.bf16.msra.mxu0 0
        %2367 = vmatprep.subr.bf16.mxu0 0
        %2368 = vmatpush1.bf16.msra.mxu0 0
        %2369 = vmatprep.subr.bf16.mxu0 0
        %2370 = vmatpush1.bf16.msra.mxu0 0
        %2371 = vmatprep.subr.bf16.mxu0 0
        %2372 = vmatpush1.bf16.msra.mxu0 0
        %2373 = vmatprep.subr.bf16.mxu0 0
        %2374 = vmatpush1.bf16.msra.mxu0 0
        %2375 = vmatprep.subr.bf16.mxu0 0
        %2376 = vmatpush1.bf16.msra.mxu0 0
        %2377 = vmatprep.subr.bf16.mxu0 0
        %2378 = vmatpush1.bf16.msra.mxu0 0
        %2379 = vmatprep.subr.bf16.mxu0 0
        %2380 = vmatpush1.bf16.msra.mxu0 %v2024
        %2381 = vmatprep.subr.bf16.mxu0 0
        %2382 = vmatpush2.bf16.msra.mxu0 0
        %2383 = vmatprep.subr.bf16.mxu0 0
        %2384 = vmatpush2.bf16.msra.mxu0 0
        %2385 = vmatprep.subr.bf16.mxu0 0
        %2386 = vmatpush2.bf16.msra.mxu0 0
        %2387 = vmatprep.subr.bf16.mxu0 0
        %2388 = vmatpush2.bf16.msra.mxu0 0
        %2389 = vmatprep.subr.bf16.mxu0 0
        %2390 = vmatpush2.bf16.msra.mxu0 0
        %2391 = vmatprep.subr.bf16.mxu0 0
        %2392 = vmatpush2.bf16.msra.mxu0 0
        %2393 = vmatprep.subr.bf16.mxu0 0
        %2394 = vmatpush2.bf16.msra.mxu0 0
        %2395 = vmatprep.subr.bf16.mxu0 0
        %2396 = vmatpush2.bf16.msra.mxu0 0
        %2397 = vmatprep.mubr.bf16.mxu0 0
        %2398 = vmatmul.mubr.bf16.gmra.mxu0 %v2363
        %v2399 = vpop.f32.mrf.mxu0
        %v2400 = vadd.f32 0.0, %v2399
        %v2401 = vpop.f32.mrf.mxu0
        %v2402 = vpop.f32.mrf.mxu0
        %v2403 = vadd.f32 0.0, %v2402
        %v2404 = vpop.f32.mrf.mxu0
        %2405 = vdwg.mxu0
        %v2407 = vsel %vm2225, %v2316, 0
        %2409 = vmatprep.subr.bf16.mxu0 0
        %2410 = vmatpush1.bf16.msra.mxu0 0
        %2411 = vmatprep.subr.bf16.mxu0 0
        %2412 = vmatpush1.bf16.msra.mxu0 0
        %2413 = vmatprep.subr.bf16.mxu0 0
        %2414 = vmatpush1.bf16.msra.mxu0 0
        %2415 = vmatprep.subr.bf16.mxu0 0
        %2416 = vmatpush1.bf16.msra.mxu0 0
        %2417 = vmatprep.subr.bf16.mxu0 0
        %2418 = vmatpush1.bf16.msra.mxu0 0
        %2419 = vmatprep.subr.bf16.mxu0 0
        %2420 = vmatpush1.bf16.msra.mxu0 0
        %2421 = vmatprep.subr.bf16.mxu0 0
        %2422 = vmatpush1.bf16.msra.mxu0 0
        %2423 = vmatprep.subr.bf16.mxu0 0
        %2424 = vmatpush1.bf16.msra.mxu0 %v2028
        %2425 = vmatprep.subr.bf16.mxu0 0
        %2426 = vmatpush2.bf16.msra.mxu0 0
        %2427 = vmatprep.subr.bf16.mxu0 0
        %2428 = vmatpush2.bf16.msra.mxu0 0
        %2429 = vmatprep.subr.bf16.mxu0 0
        %2430 = vmatpush2.bf16.msra.mxu0 0
        %2431 = vmatprep.subr.bf16.mxu0 0
        %2432 = vmatpush2.bf16.msra.mxu0 0
        %2433 = vmatprep.subr.bf16.mxu0 0
        %2434 = vmatpush2.bf16.msra.mxu0 0
        %2435 = vmatprep.subr.bf16.mxu0 0
        %2436 = vmatpush2.bf16.msra.mxu0 0
        %2437 = vmatprep.subr.bf16.mxu0 0
        %2438 = vmatpush2.bf16.msra.mxu0 0
        %2439 = vmatprep.subr.bf16.mxu0 0
        %2440 = vmatpush2.bf16.msra.mxu0 0
        %2441 = vmatprep.mubr.bf16.mxu0 0
        %2442 = vmatmul.mubr.bf16.gmra.mxu0 %v2407
        %v2443 = vpop.f32.mrf.mxu0
        %v2444 = vadd.f32 0.0, %v2443
        %v2445 = vpop.f32.mrf.mxu0
        %v2446 = vpop.f32.mrf.mxu0
        %v2447 = vadd.f32 0.0, %v2446
        %v2448 = vpop.f32.mrf.mxu0
        %2449 = vdwg.mxu0
        %v2451 = vsel %vm2225, %v2317, 0
        %2453 = vmatprep.subr.bf16.mxu0 0
        %2454 = vmatpush1.bf16.msra.mxu0 0
        %2455 = vmatprep.subr.bf16.mxu0 0
        %2456 = vmatpush1.bf16.msra.mxu0 0
        %2457 = vmatprep.subr.bf16.mxu0 0
        %2458 = vmatpush1.bf16.msra.mxu0 0
        %2459 = vmatprep.subr.bf16.mxu0 0
        %2460 = vmatpush1.bf16.msra.mxu0 0
        %2461 = vmatprep.subr.bf16.mxu0 0
        %2462 = vmatpush1.bf16.msra.mxu0 0
        %2463 = vmatprep.subr.bf16.mxu0 0
        %2464 = vmatpush1.bf16.msra.mxu0 0
        %2465 = vmatprep.subr.bf16.mxu0 0
        %2466 = vmatpush1.bf16.msra.mxu0 0
        %2467 = vmatprep.subr.bf16.mxu0 0
        %2468 = vmatpush1.bf16.msra.mxu0 %v2032
        %2469 = vmatprep.subr.bf16.mxu0 0
        %2470 = vmatpush2.bf16.msra.mxu0 0
        %2471 = vmatprep.subr.bf16.mxu0 0
        %2472 = vmatpush2.bf16.msra.mxu0 0
        %2473 = vmatprep.subr.bf16.mxu0 0
        %2474 = vmatpush2.bf16.msra.mxu0 0
        %2475 = vmatprep.subr.bf16.mxu0 0
        %2476 = vmatpush2.bf16.msra.mxu0 0
        %2477 = vmatprep.subr.bf16.mxu0 0
        %2478 = vmatpush2.bf16.msra.mxu0 0
        %2479 = vmatprep.subr.bf16.mxu0 0
        %2480 = vmatpush2.bf16.msra.mxu0 0
        %2481 = vmatprep.subr.bf16.mxu0 0
        %2482 = vmatpush2.bf16.msra.mxu0 0
        %2483 = vmatprep.subr.bf16.mxu0 0
        %2484 = vmatpush2.bf16.msra.mxu0 0
        %2485 = vmatprep.mubr.bf16.mxu0 0
        %2486 = vmatmul.mubr.bf16.gmra.mxu0 %v2451
        %v2487 = vpop.f32.mrf.mxu0
        %v2488 = vadd.f32 0.0, %v2487
        %v2489 = vpop.f32.mrf.mxu0
        %v2490 = vpop.f32.mrf.mxu0
        %v2491 = vadd.f32 0.0, %v2490
        %v2492 = vpop.f32.mrf.mxu0
        %2493 = vdwg.mxu0
        %v2494 = vcombine.low %v2356, %v2444
        %v2495 = vcombine.high %v2356, %v2444
        %v2497 = vunpack.c.l.s4 1983009808
        %v2498 = vunpack.c.0.s8 %v2497
        %v2499 = vlaneseq
        %v2500 = vshrl.u32 %v2499, 7
        %v2501 = vsub.s32 %v2498, %v2500
        %v2502 = vrot.slane %v2494, %v2501
        %v2504 = vunpack.c.l.s4 1983009808
        %v2505 = vunpack.c.0.s8 %v2504
        %v2506 = vlaneseq
        %v2507 = vshrl.u32 %v2506, 7
        %v2508 = vsub.s32 %v2505, %v2507
        %v2509 = vrot.slane %v2495, %v2508
        %v2510 = vcombine.low %v2400, %v2488
        %v2511 = vcombine.high %v2400, %v2488
        %v2513 = vunpack.c.l.s4 1983009808
        %v2514 = vunpack.c.0.s8 %v2513
        %v2515 = vlaneseq
        %v2516 = vshrl.u32 %v2515, 7
        %v2517 = vsub.s32 %v2514, %v2516
        %v2518 = vrot.slane %v2510, %v2517
        %v2520 = vunpack.c.l.s4 1983009808
        %v2521 = vunpack.c.0.s8 %v2520
        %v2522 = vlaneseq
        %v2523 = vshrl.u32 %v2522, 7
        %v2524 = vsub.s32 %v2521, %v2523
        %v2525 = vrot.slane %v2511, %v2524
        %v2526 = vcombine.low %v2502, %v2518
        %v2527 = vcombine.high %v2502, %v2518
        %v2529 = vunpack.c.l.s4 1934713408
        %v2530 = vunpack.c.0.s8 %v2529
        %v2531 = vlaneseq
        %v2532 = vshrl.u32 %v2531, 7
        %v2533 = vsub.s32 %v2530, %v2532
        %v2534 = vrot.slane %v2526, %v2533
        %v2536 = vunpack.c.l.s4 1934713408
        %v2537 = vunpack.c.0.s8 %v2536
        %v2538 = vlaneseq
        %v2539 = vshrl.u32 %v2538, 7
        %v2540 = vsub.s32 %v2537, %v2539
        %v2541 = vrot.slane %v2527, %v2540
        %v2542 = vcombine.low %v2509, %v2525
        %v2543 = vcombine.high %v2509, %v2525
        %v2545 = vunpack.c.l.s4 1934713408
        %v2546 = vunpack.c.0.s8 %v2545
        %v2547 = vlaneseq
        %v2548 = vshrl.u32 %v2547, 7
        %v2549 = vsub.s32 %v2546, %v2548
        %v2550 = vrot.slane %v2542, %v2549
        %v2552 = vunpack.c.l.s4 1934713408
        %v2553 = vunpack.c.0.s8 %v2552
        %v2554 = vlaneseq
        %v2555 = vshrl.u32 %v2554, 7
        %v2556 = vsub.s32 %v2553, %v2555
        %v2557 = vrot.slane %v2543, %v2556
        %v2558 = vcombine.high %v2534, 0.0
        %v2559 = vcombine.high %v2541, 0.0
        %v2560 = vcombine.high %v2550, 0.0
        %v2561 = vcombine.high %v2557, 0.0
        %v2562 = vcombine.low %v2359, %v2447
        %v2563 = vcombine.high %v2359, %v2447
        %v2565 = vunpack.c.l.s4 1983009808
        %v2566 = vunpack.c.0.s8 %v2565
        %v2567 = vlaneseq
        %v2568 = vshrl.u32 %v2567, 7
        %v2569 = vsub.s32 %v2566, %v2568
        %v2570 = vrot.slane %v2562, %v2569
        %v2572 = vunpack.c.l.s4 1983009808
        %v2573 = vunpack.c.0.s8 %v2572
        %v2574 = vlaneseq
        %v2575 = vshrl.u32 %v2574, 7
        %v2576 = vsub.s32 %v2573, %v2575
        %v2577 = vrot.slane %v2563, %v2576
        %v2578 = vcombine.low %v2403, %v2491
        %v2579 = vcombine.high %v2403, %v2491
        %v2581 = vunpack.c.l.s4 1983009808
        %v2582 = vunpack.c.0.s8 %v2581
        %v2583 = vlaneseq
        %v2584 = vshrl.u32 %v2583, 7
        %v2585 = vsub.s32 %v2582, %v2584
        %v2586 = vrot.slane %v2578, %v2585
        %v2588 = vunpack.c.l.s4 1983009808
        %v2589 = vunpack.c.0.s8 %v2588
        %v2590 = vlaneseq
        %v2591 = vshrl.u32 %v2590, 7
        %v2592 = vsub.s32 %v2589, %v2591
        %v2593 = vrot.slane %v2579, %v2592
        %v2594 = vcombine.low %v2570, %v2586
        %v2595 = vcombine.high %v2570, %v2586
        %v2597 = vunpack.c.l.s4 1934713408
        %v2598 = vunpack.c.0.s8 %v2597
        %v2599 = vlaneseq
        %v2600 = vshrl.u32 %v2599, 7
        %v2601 = vsub.s32 %v2598, %v2600
        %v2602 = vrot.slane %v2594, %v2601
        %v2604 = vunpack.c.l.s4 1934713408
        %v2605 = vunpack.c.0.s8 %v2604
        %v2606 = vlaneseq
        %v2607 = vshrl.u32 %v2606, 7
        %v2608 = vsub.s32 %v2605, %v2607
        %v2609 = vrot.slane %v2595, %v2608
        %v2610 = vcombine.low %v2577, %v2593
        %v2611 = vcombine.high %v2577, %v2593
        %v2613 = vunpack.c.l.s4 1934713408
        %v2614 = vunpack.c.0.s8 %v2613
        %v2615 = vlaneseq
        %v2616 = vshrl.u32 %v2615, 7
        %v2617 = vsub.s32 %v2614, %v2616
        %v2618 = vrot.slane %v2610, %v2617
        %v2620 = vunpack.c.l.s4 1934713408
        %v2621 = vunpack.c.0.s8 %v2620
        %v2622 = vlaneseq
        %v2623 = vshrl.u32 %v2622, 7
        %v2624 = vsub.s32 %v2621, %v2623
        %v2625 = vrot.slane %v2611, %v2624
        %v2626 = vcombine.high %v2602, 0.0
        %v2627 = vcombine.high %v2609, 0.0
        %v2628 = vcombine.high %v2618, 0.0
        %v2629 = vcombine.high %v2625, 0.0
        %v2630 = vcombine.low %v2534, %v2541
        %v2632 = vunpack.c.l.s4 1983009808
        %v2633 = vunpack.c.0.s8 %v2632
        %v2634 = vlaneseq
        %v2635 = vshrl.u32 %v2634, 7
        %v2636 = vsub.s32 %v2633, %v2635
        %v2637 = vrot.slane %v2630, %v2636
        %v2638 = vcombine.low %v2558, %v2559
        %v2640 = vunpack.c.l.s4 1983009808
        %v2641 = vunpack.c.0.s8 %v2640
        %v2642 = vlaneseq
        %v2643 = vshrl.u32 %v2642, 7
        %v2644 = vsub.s32 %v2641, %v2643
        %v2645 = vrot.slane %v2638, %v2644
        %v2646 = vcombine.low %v2550, %v2557
        %v2648 = vunpack.c.l.s4 1983009808
        %v2649 = vunpack.c.0.s8 %v2648
        %v2650 = vlaneseq
        %v2651 = vshrl.u32 %v2650, 7
        %v2652 = vsub.s32 %v2649, %v2651
        %v2653 = vrot.slane %v2646, %v2652
        %v2654 = vcombine.low %v2560, %v2561
        %v2656 = vunpack.c.l.s4 1983009808
        %v2657 = vunpack.c.0.s8 %v2656
        %v2658 = vlaneseq
        %v2659 = vshrl.u32 %v2658, 7
        %v2660 = vsub.s32 %v2657, %v2659
        %v2661 = vrot.slane %v2654, %v2660
        %v2662 = vcombine.low %v2637, %v2645
        %v2663 = vcombine.high %v2637, %v2645
        %v2665 = vunpack.c.l.s4 1934713408
        %v2666 = vunpack.c.0.s8 %v2665
        %v2667 = vlaneseq
        %v2668 = vshrl.u32 %v2667, 7
        %v2669 = vsub.s32 %v2666, %v2668
        %v2670 = vrot.slane %v2662, %v2669
        %v2672 = vunpack.c.l.s4 1934713408
        %v2673 = vunpack.c.0.s8 %v2672
        %v2674 = vlaneseq
        %v2675 = vshrl.u32 %v2674, 7
        %v2676 = vsub.s32 %v2673, %v2675
        %v2677 = vrot.slane %v2663, %v2676
        %v2678 = vcombine.low %v2653, %v2661
        %v2679 = vcombine.high %v2653, %v2661
        %v2681 = vunpack.c.l.s4 1934713408
        %v2682 = vunpack.c.0.s8 %v2681
        %v2683 = vlaneseq
        %v2684 = vshrl.u32 %v2683, 7
        %v2685 = vsub.s32 %v2682, %v2684
        %v2686 = vrot.slane %v2678, %v2685
        %v2688 = vunpack.c.l.s4 1934713408
        %v2689 = vunpack.c.0.s8 %v2688
        %v2690 = vlaneseq
        %v2691 = vshrl.u32 %v2690, 7
        %v2692 = vsub.s32 %v2689, %v2691
        %v2693 = vrot.slane %v2679, %v2692
        %v2694 = vcombine.low %v2670, %v2686
        %v2695 = vcombine.high %v2670, %v2686
        %v2696 = vcombine.low %v2677, %v2693
        %v2697 = vcombine.high %v2677, %v2693
        %v2698 = vcombine.low %v2602, %v2609
        %v2700 = vunpack.c.l.s4 1983009808
        %v2701 = vunpack.c.0.s8 %v2700
        %v2702 = vlaneseq
        %v2703 = vshrl.u32 %v2702, 7
        %v2704 = vsub.s32 %v2701, %v2703
        %v2705 = vrot.slane %v2698, %v2704
        %v2706 = vcombine.low %v2626, %v2627
        %v2708 = vunpack.c.l.s4 1983009808
        %v2709 = vunpack.c.0.s8 %v2708
        %v2710 = vlaneseq
        %v2711 = vshrl.u32 %v2710, 7
        %v2712 = vsub.s32 %v2709, %v2711
        %v2713 = vrot.slane %v2706, %v2712
        %v2714 = vcombine.low %v2618, %v2625
        %v2716 = vunpack.c.l.s4 1983009808
        %v2717 = vunpack.c.0.s8 %v2716
        %v2718 = vlaneseq
        %v2719 = vshrl.u32 %v2718, 7
        %v2720 = vsub.s32 %v2717, %v2719
        %v2721 = vrot.slane %v2714, %v2720
        %v2722 = vcombine.low %v2628, %v2629
        %v2724 = vunpack.c.l.s4 1983009808
        %v2725 = vunpack.c.0.s8 %v2724
        %v2726 = vlaneseq
        %v2727 = vshrl.u32 %v2726, 7
        %v2728 = vsub.s32 %v2725, %v2727
        %v2729 = vrot.slane %v2722, %v2728
        %v2730 = vcombine.low %v2705, %v2713
        %v2731 = vcombine.high %v2705, %v2713
        %v2733 = vunpack.c.l.s4 1934713408
        %v2734 = vunpack.c.0.s8 %v2733
        %v2735 = vlaneseq
        %v2736 = vshrl.u32 %v2735, 7
        %v2737 = vsub.s32 %v2734, %v2736
        %v2738 = vrot.slane %v2730, %v2737
        %v2740 = vunpack.c.l.s4 1934713408
        %v2741 = vunpack.c.0.s8 %v2740
        %v2742 = vlaneseq
        %v2743 = vshrl.u32 %v2742, 7
        %v2744 = vsub.s32 %v2741, %v2743
        %v2745 = vrot.slane %v2731, %v2744
        %v2746 = vcombine.low %v2721, %v2729
        %v2747 = vcombine.high %v2721, %v2729
        %v2749 = vunpack.c.l.s4 1934713408
        %v2750 = vunpack.c.0.s8 %v2749
        %v2751 = vlaneseq
        %v2752 = vshrl.u32 %v2751, 7
        %v2753 = vsub.s32 %v2750, %v2752
        %v2754 = vrot.slane %v2746, %v2753
        %v2756 = vunpack.c.l.s4 1934713408
        %v2757 = vunpack.c.0.s8 %v2756
        %v2758 = vlaneseq
        %v2759 = vshrl.u32 %v2758, 7
        %v2760 = vsub.s32 %v2757, %v2759
        %v2761 = vrot.slane %v2747, %v2760
        %v2762 = vcombine.low %v2738, %v2754
        %v2763 = vcombine.high %v2738, %v2754
        %v2764 = vcombine.low %v2745, %v2761
        %v2765 = vcombine.high %v2745, %v2761
        %2768 = vrot.lane.b32.xlu0 %v2695, 32
        %v2769 = vpop.permute.xlu0 %2768
        %2770 = vrot.lane.b32.xlu0 %v2763, 32
        %v2771 = vpop.permute.xlu0 %2770
        %2776 = vrot.lane.b32.xlu0 %v2696, 64
        %v2777 = vpop.permute.xlu0 %2776
        %2778 = vrot.lane.b32.xlu0 %v2764, 64
        %v2779 = vpop.permute.xlu0 %2778
        %2784 = vrot.lane.b32.xlu0 %v2697, 96
        %v2785 = vpop.permute.xlu0 %2784
        %2786 = vrot.lane.b32.xlu0 %v2765, 96
        %v2787 = vpop.permute.xlu0 %2786
        %v2790 = vsel %vm2036, %v2694, %v2769
        %v2791 = vsel %vm2036, %v2762, %v2771
        %vm2792 = vcmask 523264
        %v2793 = vsel %vm2792, %v2790, %v2777
        %v2794 = vsel %vm2792, %v2791, %v2779
        %vm2795 = vcmask 785408
        %v2796 = vsel %vm2795, %v2793, %v2785
        %v2797 = vsel %vm2795, %v2794, %v2787
        %2798 = vst [vmem:[#allocation3] sm:$0xff] %v2796
        %2799 = vst [vmem:[#allocation3 + $0x8] sm:$0xff] %v2797
        %2802 = vrot.lane.b32.xlu0 %v1176, 96
        %v2803 = vpop.permute.xlu0 %2802
        %2804 = vrot.lane.b32.xlu0 %v1177, 96
        %v2805 = vpop.permute.xlu0 %2804
        %2808 = vrot.lane.b32.xlu0 %v1176, 64
        %v2809 = vpop.permute.xlu0 %2808
        %2810 = vrot.lane.b32.xlu0 %v1177, 64
        %v2811 = vpop.permute.xlu0 %2810
        %2814 = vrot.lane.b32.xlu0 %v1176, 32
        %v2815 = vpop.permute.xlu0 %2814
        %2816 = vrot.lane.b32.xlu0 %v1177, 32
        %v2817 = vpop.permute.xlu0 %2816
        %v2820 = vcombine.low %v1176, %v2809
        %v2821 = vcombine.high %v1176, %v2809
        %v2823 = vunpack.c.l.s4 1983009808
        %v2824 = vunpack.c.0.s8 %v2823
        %v2825 = vlaneseq
        %v2826 = vshrl.u32 %v2825, 7
        %v2827 = vsub.s32 %v2824, %v2826
        %v2828 = vrot.slane %v2820, %v2827
        %v2830 = vunpack.c.l.s4 1983009808
        %v2831 = vunpack.c.0.s8 %v2830
        %v2832 = vlaneseq
        %v2833 = vshrl.u32 %v2832, 7
        %v2834 = vsub.s32 %v2831, %v2833
        %v2835 = vrot.slane %v2821, %v2834
        %v2836 = vcombine.low %v2803, %v2815
        %v2837 = vcombine.high %v2803, %v2815
        %v2839 = vunpack.c.l.s4 1983009808
        %v2840 = vunpack.c.0.s8 %v2839
        %v2841 = vlaneseq
        %v2842 = vshrl.u32 %v2841, 7
        %v2843 = vsub.s32 %v2840, %v2842
        %v2844 = vrot.slane %v2836, %v2843
        %v2846 = vunpack.c.l.s4 1983009808
        %v2847 = vunpack.c.0.s8 %v2846
        %v2848 = vlaneseq
        %v2849 = vshrl.u32 %v2848, 7
        %v2850 = vsub.s32 %v2847, %v2849
        %v2851 = vrot.slane %v2837, %v2850
        %v2852 = vcombine.low %v2828, %v2844
        %v2853 = vcombine.high %v2828, %v2844
        %v2855 = vunpack.c.l.s4 1934713408
        %v2856 = vunpack.c.0.s8 %v2855
        %v2857 = vlaneseq
        %v2858 = vshrl.u32 %v2857, 7
        %v2859 = vsub.s32 %v2856, %v2858
        %v2860 = vrot.slane %v2852, %v2859
        %v2862 = vunpack.c.l.s4 1934713408
        %v2863 = vunpack.c.0.s8 %v2862
        %v2864 = vlaneseq
        %v2865 = vshrl.u32 %v2864, 7
        %v2866 = vsub.s32 %v2863, %v2865
        %v2867 = vrot.slane %v2853, %v2866
        %v2868 = vcombine.low %v2835, %v2851
        %v2869 = vcombine.high %v2835, %v2851
        %v2871 = vunpack.c.l.s4 1934713408
        %v2872 = vunpack.c.0.s8 %v2871
        %v2873 = vlaneseq
        %v2874 = vshrl.u32 %v2873, 7
        %v2875 = vsub.s32 %v2872, %v2874
        %v2876 = vrot.slane %v2868, %v2875
        %v2878 = vunpack.c.l.s4 1934713408
        %v2879 = vunpack.c.0.s8 %v2878
        %v2880 = vlaneseq
        %v2881 = vshrl.u32 %v2880, 7
        %v2882 = vsub.s32 %v2879, %v2881
        %v2883 = vrot.slane %v2869, %v2882
        %v2884 = vcombine.high %v2860, 0.0
        %v2885 = vcombine.high %v2867, 0.0
        %v2886 = vcombine.high %v2876, 0.0
        %v2887 = vcombine.high %v2883, 0.0
        %v2888 = vcombine.low %v1177, %v2811
        %v2889 = vcombine.high %v1177, %v2811
        %v2891 = vunpack.c.l.s4 1983009808
        %v2892 = vunpack.c.0.s8 %v2891
        %v2893 = vlaneseq
        %v2894 = vshrl.u32 %v2893, 7
        %v2895 = vsub.s32 %v2892, %v2894
        %v2896 = vrot.slane %v2888, %v2895
        %v2898 = vunpack.c.l.s4 1983009808
        %v2899 = vunpack.c.0.s8 %v2898
        %v2900 = vlaneseq
        %v2901 = vshrl.u32 %v2900, 7
        %v2902 = vsub.s32 %v2899, %v2901
        %v2903 = vrot.slane %v2889, %v2902
        %v2904 = vcombine.low %v2805, %v2817
        %v2905 = vcombine.high %v2805, %v2817
        %v2907 = vunpack.c.l.s4 1983009808
        %v2908 = vunpack.c.0.s8 %v2907
        %v2909 = vlaneseq
        %v2910 = vshrl.u32 %v2909, 7
        %v2911 = vsub.s32 %v2908, %v2910
        %v2912 = vrot.slane %v2904, %v2911
        %v2914 = vunpack.c.l.s4 1983009808
        %v2915 = vunpack.c.0.s8 %v2914
        %v2916 = vlaneseq
        %v2917 = vshrl.u32 %v2916, 7
        %v2918 = vsub.s32 %v2915, %v2917
        %v2919 = vrot.slane %v2905, %v2918
        %v2920 = vcombine.low %v2896, %v2912
        %v2921 = vcombine.high %v2896, %v2912
        %v2923 = vunpack.c.l.s4 1934713408
        %v2924 = vunpack.c.0.s8 %v2923
        %v2925 = vlaneseq
        %v2926 = vshrl.u32 %v2925, 7
        %v2927 = vsub.s32 %v2924, %v2926
        %v2928 = vrot.slane %v2920, %v2927
        %v2930 = vunpack.c.l.s4 1934713408
        %v2931 = vunpack.c.0.s8 %v2930
        %v2932 = vlaneseq
        %v2933 = vshrl.u32 %v2932, 7
        %v2934 = vsub.s32 %v2931, %v2933
        %v2935 = vrot.slane %v2921, %v2934
        %v2936 = vcombine.low %v2903, %v2919
        %v2937 = vcombine.high %v2903, %v2919
        %v2939 = vunpack.c.l.s4 1934713408
        %v2940 = vunpack.c.0.s8 %v2939
        %v2941 = vlaneseq
        %v2942 = vshrl.u32 %v2941, 7
        %v2943 = vsub.s32 %v2940, %v2942
        %v2944 = vrot.slane %v2936, %v2943
        %v2946 = vunpack.c.l.s4 1934713408
        %v2947 = vunpack.c.0.s8 %v2946
        %v2948 = vlaneseq
        %v2949 = vshrl.u32 %v2948, 7
        %v2950 = vsub.s32 %v2947, %v2949
        %v2951 = vrot.slane %v2937, %v2950
        %v2952 = vcombine.high %v2928, 0.0
        %v2953 = vcombine.high %v2935, 0.0
        %v2954 = vcombine.high %v2944, 0.0
        %v2955 = vcombine.high %v2951, 0.0
        %v2956 = vpack.c.bf16 %v2860, %v2860
        %v2957 = vpack.c.bf16 %v2884, %v2884
        %v2958 = vpack.c.bf16 %v2867, %v2867
        %v2959 = vpack.c.bf16 %v2885, %v2885
        %v2960 = vpack.c.bf16 %v2876, %v2876
        %v2961 = vpack.c.bf16 %v2886, %v2886
        %v2962 = vpack.c.bf16 %v2883, %v2883
        %v2963 = vpack.c.bf16 %v2887, %v2887
        %v2964 = vpack.c.bf16 %v2928, %v2928
        %v2965 = vpack.c.bf16 %v2952, %v2952
        %v2966 = vpack.c.bf16 %v2935, %v2935
        %v2967 = vpack.c.bf16 %v2953, %v2953
        %v2968 = vpack.c.bf16 %v2944, %v2944
        %v2969 = vpack.c.bf16 %v2954, %v2954
        %v2970 = vpack.c.bf16 %v2951, %v2951
        %v2971 = vpack.c.bf16 %v2955, %v2955
        %v2972 = vcombine.low %v2956, %v2960
        %v2974 = vunpack.c.l.s4 1983009808
        %v2975 = vunpack.c.0.s8 %v2974
        %v2976 = vlaneseq
        %v2977 = vshrl.u32 %v2976, 7
        %v2978 = vsub.s32 %v2975, %v2977
        %v2979 = vrot.slane %v2972, %v2978
        %v2980 = vcombine.low %v2958, %v2962
        %v2982 = vunpack.c.l.s4 1983009808
        %v2983 = vunpack.c.0.s8 %v2982
        %v2984 = vlaneseq
        %v2985 = vshrl.u32 %v2984, 7
        %v2986 = vsub.s32 %v2983, %v2985
        %v2987 = vrot.slane %v2980, %v2986
        %v2988 = vcombine.low %v2964, %v2968
        %v2990 = vunpack.c.l.s4 1983009808
        %v2991 = vunpack.c.0.s8 %v2990
        %v2992 = vlaneseq
        %v2993 = vshrl.u32 %v2992, 7
        %v2994 = vsub.s32 %v2991, %v2993
        %v2995 = vrot.slane %v2988, %v2994
        %v2996 = vcombine.low %v2966, %v2970
        %v2998 = vunpack.c.l.s4 1983009808
        %v2999 = vunpack.c.0.s8 %v2998
        %v3000 = vlaneseq
        %v3001 = vshrl.u32 %v3000, 7
        %v3002 = vsub.s32 %v2999, %v3001
        %v3003 = vrot.slane %v2996, %v3002
        %v3004 = vcombine.low %v2979, %v2987
        %v3006 = vunpack.c.l.s4 1934713408
        %v3007 = vunpack.c.0.s8 %v3006
        %v3008 = vlaneseq
        %v3009 = vshrl.u32 %v3008, 7
        %v3010 = vsub.s32 %v3007, %v3009
        %v3011 = vrot.slane %v3004, %v3010
        %v3012 = vcombine.low %v2995, %v3003
        %v3014 = vunpack.c.l.s4 1934713408
        %v3015 = vunpack.c.0.s8 %v3014
        %v3016 = vlaneseq
        %v3017 = vshrl.u32 %v3016, 7
        %v3018 = vsub.s32 %v3015, %v3017
        %v3019 = vrot.slane %v3012, %v3018
        %v3020 = vcombine.low %v3011, %v3019
        %v3021 = vcombine.high %v3011, %v3019
        %v3022 = vcombine.low %v2957, %v2961
        %v3024 = vunpack.c.l.s4 1983009808
        %v3025 = vunpack.c.0.s8 %v3024
        %v3026 = vlaneseq
        %v3027 = vshrl.u32 %v3026, 7
        %v3028 = vsub.s32 %v3025, %v3027
        %v3029 = vrot.slane %v3022, %v3028
        %v3030 = vcombine.low %v2959, %v2963
        %v3032 = vunpack.c.l.s4 1983009808
        %v3033 = vunpack.c.0.s8 %v3032
        %v3034 = vlaneseq
        %v3035 = vshrl.u32 %v3034, 7
        %v3036 = vsub.s32 %v3033, %v3035
        %v3037 = vrot.slane %v3030, %v3036
        %v3038 = vcombine.low %v2965, %v2969
        %v3040 = vunpack.c.l.s4 1983009808
        %v3041 = vunpack.c.0.s8 %v3040
        %v3042 = vlaneseq
        %v3043 = vshrl.u32 %v3042, 7
        %v3044 = vsub.s32 %v3041, %v3043
        %v3045 = vrot.slane %v3038, %v3044
        %v3046 = vcombine.low %v2967, %v2971
        %v3048 = vunpack.c.l.s4 1983009808
        %v3049 = vunpack.c.0.s8 %v3048
        %v3050 = vlaneseq
        %v3051 = vshrl.u32 %v3050, 7
        %v3052 = vsub.s32 %v3049, %v3051
        %v3053 = vrot.slane %v3046, %v3052
        %v3054 = vcombine.low %v3029, %v3037
        %v3056 = vunpack.c.l.s4 1934713408
        %v3057 = vunpack.c.0.s8 %v3056
        %v3058 = vlaneseq
        %v3059 = vshrl.u32 %v3058, 7
        %v3060 = vsub.s32 %v3057, %v3059
        %v3061 = vrot.slane %v3054, %v3060
        %v3062 = vcombine.low %v3045, %v3053
        %v3064 = vunpack.c.l.s4 1934713408
        %v3065 = vunpack.c.0.s8 %v3064
        %v3066 = vlaneseq
        %v3067 = vshrl.u32 %v3066, 7
        %v3068 = vsub.s32 %v3065, %v3067
        %v3069 = vrot.slane %v3062, %v3068
        %v3070 = vcombine.low %v3061, %v3069
        %v3071 = vcombine.high %v3061, %v3069
        %v3074 = vpack.i.b16 %v3070, %v3020
        %v3075 = vshrl.u32 %v3020, 16
        %v3076 = vshrl.u32 %v3070, 16
        %v3077 = vpack.i.b16 %v3076, %v3075
        %v3080 = vpack.i.b16 %v3071, %v3021
        %v3081 = vshrl.u32 %v3021, 16
        %v3082 = vshrl.u32 %v3071, 16
        %v3083 = vpack.i.b16 %v3082, %v3081
        %3086 = vrot.lane.b32.xlu0 %v1119, 96
        %v3087 = vpop.permute.xlu0 %3086
        %3088 = vrot.lane.b32.xlu0 %v1123, 96
        %v3089 = vpop.permute.xlu0 %3088
        %3092 = vrot.lane.b32.xlu0 %v1119, 64
        %v3093 = vpop.permute.xlu0 %3092
        %3094 = vrot.lane.b32.xlu0 %v1123, 64
        %v3095 = vpop.permute.xlu0 %3094
        %3098 = vrot.lane.b32.xlu0 %v1119, 32
        %v3099 = vpop.permute.xlu0 %3098
        %3100 = vrot.lane.b32.xlu0 %v1123, 32
        %v3101 = vpop.permute.xlu0 %3100
        %v3104 = vcombine.low %v1119, %v3093
        %v3105 = vcombine.high %v1119, %v3093
        %v3107 = vunpack.c.l.s4 1983009808
        %v3108 = vunpack.c.0.s8 %v3107
        %v3109 = vlaneseq
        %v3110 = vshrl.u32 %v3109, 7
        %v3111 = vsub.s32 %v3108, %v3110
        %v3112 = vrot.slane %v3104, %v3111
        %v3114 = vunpack.c.l.s4 1983009808
        %v3115 = vunpack.c.0.s8 %v3114
        %v3116 = vlaneseq
        %v3117 = vshrl.u32 %v3116, 7
        %v3118 = vsub.s32 %v3115, %v3117
        %v3119 = vrot.slane %v3105, %v3118
        %v3120 = vcombine.low %v3087, %v3099
        %v3121 = vcombine.high %v3087, %v3099
        %v3123 = vunpack.c.l.s4 1983009808
        %v3124 = vunpack.c.0.s8 %v3123
        %v3125 = vlaneseq
        %v3126 = vshrl.u32 %v3125, 7
        %v3127 = vsub.s32 %v3124, %v3126
        %v3128 = vrot.slane %v3120, %v3127
        %v3130 = vunpack.c.l.s4 1983009808
        %v3131 = vunpack.c.0.s8 %v3130
        %v3132 = vlaneseq
        %v3133 = vshrl.u32 %v3132, 7
        %v3134 = vsub.s32 %v3131, %v3133
        %v3135 = vrot.slane %v3121, %v3134
        %v3136 = vcombine.low %v3112, %v3128
        %v3137 = vcombine.high %v3112, %v3128
        %v3139 = vunpack.c.l.s4 1934713408
        %v3140 = vunpack.c.0.s8 %v3139
        %v3141 = vlaneseq
        %v3142 = vshrl.u32 %v3141, 7
        %v3143 = vsub.s32 %v3140, %v3142
        %v3144 = vrot.slane %v3136, %v3143
        %v3146 = vunpack.c.l.s4 1934713408
        %v3147 = vunpack.c.0.s8 %v3146
        %v3148 = vlaneseq
        %v3149 = vshrl.u32 %v3148, 7
        %v3150 = vsub.s32 %v3147, %v3149
        %v3151 = vrot.slane %v3137, %v3150
        %v3152 = vcombine.low %v3119, %v3135
        %v3153 = vcombine.high %v3119, %v3135
        %v3155 = vunpack.c.l.s4 1934713408
        %v3156 = vunpack.c.0.s8 %v3155
        %v3157 = vlaneseq
        %v3158 = vshrl.u32 %v3157, 7
        %v3159 = vsub.s32 %v3156, %v3158
        %v3160 = vrot.slane %v3152, %v3159
        %v3162 = vunpack.c.l.s4 1934713408
        %v3163 = vunpack.c.0.s8 %v3162
        %v3164 = vlaneseq
        %v3165 = vshrl.u32 %v3164, 7
        %v3166 = vsub.s32 %v3163, %v3165
        %v3167 = vrot.slane %v3153, %v3166
        %v3168 = vcombine.high %v3144, 0.0
        %v3169 = vcombine.high %v3151, 0.0
        %v3170 = vcombine.high %v3160, 0.0
        %v3171 = vcombine.high %v3167, 0.0
        %v3172 = vcombine.low %v1123, %v3095
        %v3173 = vcombine.high %v1123, %v3095
        %v3175 = vunpack.c.l.s4 1983009808
        %v3176 = vunpack.c.0.s8 %v3175
        %v3177 = vlaneseq
        %v3178 = vshrl.u32 %v3177, 7
        %v3179 = vsub.s32 %v3176, %v3178
        %v3180 = vrot.slane %v3172, %v3179
        %v3182 = vunpack.c.l.s4 1983009808
        %v3183 = vunpack.c.0.s8 %v3182
        %v3184 = vlaneseq
        %v3185 = vshrl.u32 %v3184, 7
        %v3186 = vsub.s32 %v3183, %v3185
        %v3187 = vrot.slane %v3173, %v3186
        %v3188 = vcombine.low %v3089, %v3101
        %v3189 = vcombine.high %v3089, %v3101
        %v3191 = vunpack.c.l.s4 1983009808
        %v3192 = vunpack.c.0.s8 %v3191
        %v3193 = vlaneseq
        %v3194 = vshrl.u32 %v3193, 7
        %v3195 = vsub.s32 %v3192, %v3194
        %v3196 = vrot.slane %v3188, %v3195
        %v3198 = vunpack.c.l.s4 1983009808
        %v3199 = vunpack.c.0.s8 %v3198
        %v3200 = vlaneseq
        %v3201 = vshrl.u32 %v3200, 7
        %v3202 = vsub.s32 %v3199, %v3201
        %v3203 = vrot.slane %v3189, %v3202
        %v3204 = vcombine.low %v3180, %v3196
        %v3205 = vcombine.high %v3180, %v3196
        %v3207 = vunpack.c.l.s4 1934713408
        %v3208 = vunpack.c.0.s8 %v3207
        %v3209 = vlaneseq
        %v3210 = vshrl.u32 %v3209, 7
        %v3211 = vsub.s32 %v3208, %v3210
        %v3212 = vrot.slane %v3204, %v3211
        %v3214 = vunpack.c.l.s4 1934713408
        %v3215 = vunpack.c.0.s8 %v3214
        %v3216 = vlaneseq
        %v3217 = vshrl.u32 %v3216, 7
        %v3218 = vsub.s32 %v3215, %v3217
        %v3219 = vrot.slane %v3205, %v3218
        %v3220 = vcombine.low %v3187, %v3203
        %v3221 = vcombine.high %v3187, %v3203
        %v3223 = vunpack.c.l.s4 1934713408
        %v3224 = vunpack.c.0.s8 %v3223
        %v3225 = vlaneseq
        %v3226 = vshrl.u32 %v3225, 7
        %v3227 = vsub.s32 %v3224, %v3226
        %v3228 = vrot.slane %v3220, %v3227
        %v3230 = vunpack.c.l.s4 1934713408
        %v3231 = vunpack.c.0.s8 %v3230
        %v3232 = vlaneseq
        %v3233 = vshrl.u32 %v3232, 7
        %v3234 = vsub.s32 %v3231, %v3233
        %v3235 = vrot.slane %v3221, %v3234
        %v3236 = vcombine.high %v3212, 0.0
        %v3237 = vcombine.high %v3219, 0.0
        %v3238 = vcombine.high %v3228, 0.0
        %v3239 = vcombine.high %v3235, 0.0
        %v3240 = vpack.c.bf16 %v3144, %v3144
        %v3241 = vpack.c.bf16 %v3168, %v3168
        %v3242 = vpack.c.bf16 %v3151, %v3151
        %v3243 = vpack.c.bf16 %v3169, %v3169
        %v3244 = vpack.c.bf16 %v3160, %v3160
        %v3245 = vpack.c.bf16 %v3170, %v3170
        %v3246 = vpack.c.bf16 %v3167, %v3167
        %v3247 = vpack.c.bf16 %v3171, %v3171
        %v3248 = vpack.c.bf16 %v3212, %v3212
        %v3249 = vpack.c.bf16 %v3236, %v3236
        %v3250 = vpack.c.bf16 %v3219, %v3219
        %v3251 = vpack.c.bf16 %v3237, %v3237
        %v3252 = vpack.c.bf16 %v3228, %v3228
        %v3253 = vpack.c.bf16 %v3238, %v3238
        %v3254 = vpack.c.bf16 %v3235, %v3235
        %v3255 = vpack.c.bf16 %v3239, %v3239
        %v3256 = vcombine.low %v3240, %v3244
        %v3258 = vunpack.c.l.s4 1983009808
        %v3259 = vunpack.c.0.s8 %v3258
        %v3260 = vlaneseq
        %v3261 = vshrl.u32 %v3260, 7
        %v3262 = vsub.s32 %v3259, %v3261
        %v3263 = vrot.slane %v3256, %v3262
        %v3264 = vcombine.low %v3242, %v3246
        %v3266 = vunpack.c.l.s4 1983009808
        %v3267 = vunpack.c.0.s8 %v3266
        %v3268 = vlaneseq
        %v3269 = vshrl.u32 %v3268, 7
        %v3270 = vsub.s32 %v3267, %v3269
        %v3271 = vrot.slane %v3264, %v3270
        %v3272 = vcombine.low %v3248, %v3252
        %v3274 = vunpack.c.l.s4 1983009808
        %v3275 = vunpack.c.0.s8 %v3274
        %v3276 = vlaneseq
        %v3277 = vshrl.u32 %v3276, 7
        %v3278 = vsub.s32 %v3275, %v3277
        %v3279 = vrot.slane %v3272, %v3278
        %v3280 = vcombine.low %v3250, %v3254
        %v3282 = vunpack.c.l.s4 1983009808
        %v3283 = vunpack.c.0.s8 %v3282
        %v3284 = vlaneseq
        %v3285 = vshrl.u32 %v3284, 7
        %v3286 = vsub.s32 %v3283, %v3285
        %v3287 = vrot.slane %v3280, %v3286
        %v3288 = vcombine.low %v3263, %v3271
        %v3290 = vunpack.c.l.s4 1934713408
        %v3291 = vunpack.c.0.s8 %v3290
        %v3292 = vlaneseq
        %v3293 = vshrl.u32 %v3292, 7
        %v3294 = vsub.s32 %v3291, %v3293
        %v3295 = vrot.slane %v3288, %v3294
        %v3296 = vcombine.low %v3279, %v3287
        %v3298 = vunpack.c.l.s4 1934713408
        %v3299 = vunpack.c.0.s8 %v3298
        %v3300 = vlaneseq
        %v3301 = vshrl.u32 %v3300, 7
        %v3302 = vsub.s32 %v3299, %v3301
        %v3303 = vrot.slane %v3296, %v3302
        %v3304 = vcombine.low %v3295, %v3303
        %v3305 = vcombine.high %v3295, %v3303
        %v3306 = vcombine.low %v3241, %v3245
        %v3308 = vunpack.c.l.s4 1983009808
        %v3309 = vunpack.c.0.s8 %v3308
        %v3310 = vlaneseq
        %v3311 = vshrl.u32 %v3310, 7
        %v3312 = vsub.s32 %v3309, %v3311
        %v3313 = vrot.slane %v3306, %v3312
        %v3314 = vcombine.low %v3243, %v3247
        %v3316 = vunpack.c.l.s4 1983009808
        %v3317 = vunpack.c.0.s8 %v3316
        %v3318 = vlaneseq
        %v3319 = vshrl.u32 %v3318, 7
        %v3320 = vsub.s32 %v3317, %v3319
        %v3321 = vrot.slane %v3314, %v3320
        %v3322 = vcombine.low %v3249, %v3253
        %v3324 = vunpack.c.l.s4 1983009808
        %v3325 = vunpack.c.0.s8 %v3324
        %v3326 = vlaneseq
        %v3327 = vshrl.u32 %v3326, 7
        %v3328 = vsub.s32 %v3325, %v3327
        %v3329 = vrot.slane %v3322, %v3328
        %v3330 = vcombine.low %v3251, %v3255
        %v3332 = vunpack.c.l.s4 1983009808
        %v3333 = vunpack.c.0.s8 %v3332
        %v3334 = vlaneseq
        %v3335 = vshrl.u32 %v3334, 7
        %v3336 = vsub.s32 %v3333, %v3335
        %v3337 = vrot.slane %v3330, %v3336
        %v3338 = vcombine.low %v3313, %v3321
        %v3340 = vunpack.c.l.s4 1934713408
        %v3341 = vunpack.c.0.s8 %v3340
        %v3342 = vlaneseq
        %v3343 = vshrl.u32 %v3342, 7
        %v3344 = vsub.s32 %v3341, %v3343
        %v3345 = vrot.slane %v3338, %v3344
        %v3346 = vcombine.low %v3329, %v3337
        %v3348 = vunpack.c.l.s4 1934713408
        %v3349 = vunpack.c.0.s8 %v3348
        %v3350 = vlaneseq
        %v3351 = vshrl.u32 %v3350, 7
        %v3352 = vsub.s32 %v3349, %v3351
        %v3353 = vrot.slane %v3346, %v3352
        %v3354 = vcombine.low %v3345, %v3353
        %v3355 = vcombine.high %v3345, %v3353
        %v3358 = vpack.i.b16 %v3354, %v3304
        %v3359 = vshrl.u32 %v3304, 16
        %v3360 = vshrl.u32 %v3354, 16
        %v3361 = vpack.i.b16 %v3360, %v3359
        %v3364 = vpack.i.b16 %v3355, %v3305
        %v3365 = vshrl.u32 %v3305, 16
        %v3366 = vshrl.u32 %v3355, 16
        %v3367 = vpack.i.b16 %v3366, %v3365
        %3370 = vrot.lane.b32.xlu0 %v1168, 96
        %v3371 = vpop.permute.xlu0 %3370
        %3372 = vrot.lane.b32.xlu0 %v1171, 96
        %v3373 = vpop.permute.xlu0 %3372
        %3376 = vrot.lane.b32.xlu0 %v1168, 64
        %v3377 = vpop.permute.xlu0 %3376
        %3378 = vrot.lane.b32.xlu0 %v1171, 64
        %v3379 = vpop.permute.xlu0 %3378
        %3382 = vrot.lane.b32.xlu0 %v1168, 32
        %v3383 = vpop.permute.xlu0 %3382
        %3384 = vrot.lane.b32.xlu0 %v1171, 32
        %v3385 = vpop.permute.xlu0 %3384
        %v3388 = vcombine.low %v1168, %v3377
        %v3389 = vcombine.high %v1168, %v3377
        %v3391 = vunpack.c.l.s4 1983009808
        %v3392 = vunpack.c.0.s8 %v3391
        %v3393 = vlaneseq
        %v3394 = vshrl.u32 %v3393, 7
        %v3395 = vsub.s32 %v3392, %v3394
        %v3396 = vrot.slane %v3388, %v3395
        %v3398 = vunpack.c.l.s4 1983009808
        %v3399 = vunpack.c.0.s8 %v3398
        %v3400 = vlaneseq
        %v3401 = vshrl.u32 %v3400, 7
        %v3402 = vsub.s32 %v3399, %v3401
        %v3403 = vrot.slane %v3389, %v3402
        %v3404 = vcombine.low %v3371, %v3383
        %v3405 = vcombine.high %v3371, %v3383
        %v3407 = vunpack.c.l.s4 1983009808
        %v3408 = vunpack.c.0.s8 %v3407
        %v3409 = vlaneseq
        %v3410 = vshrl.u32 %v3409, 7
        %v3411 = vsub.s32 %v3408, %v3410
        %v3412 = vrot.slane %v3404, %v3411
        %v3414 = vunpack.c.l.s4 1983009808
        %v3415 = vunpack.c.0.s8 %v3414
        %v3416 = vlaneseq
        %v3417 = vshrl.u32 %v3416, 7
        %v3418 = vsub.s32 %v3415, %v3417
        %v3419 = vrot.slane %v3405, %v3418
        %v3420 = vcombine.low %v3396, %v3412
        %v3421 = vcombine.high %v3396, %v3412
        %v3423 = vunpack.c.l.s4 1934713408
        %v3424 = vunpack.c.0.s8 %v3423
        %v3425 = vlaneseq
        %v3426 = vshrl.u32 %v3425, 7
        %v3427 = vsub.s32 %v3424, %v3426
        %v3428 = vrot.slane %v3420, %v3427
        %v3430 = vunpack.c.l.s4 1934713408
        %v3431 = vunpack.c.0.s8 %v3430
        %v3432 = vlaneseq
        %v3433 = vshrl.u32 %v3432, 7
        %v3434 = vsub.s32 %v3431, %v3433
        %v3435 = vrot.slane %v3421, %v3434
        %v3436 = vcombine.low %v3403, %v3419
        %v3437 = vcombine.high %v3403, %v3419
        %v3439 = vunpack.c.l.s4 1934713408
        %v3440 = vunpack.c.0.s8 %v3439
        %v3441 = vlaneseq
        %v3442 = vshrl.u32 %v3441, 7
        %v3443 = vsub.s32 %v3440, %v3442
        %v3444 = vrot.slane %v3436, %v3443
        %v3446 = vunpack.c.l.s4 1934713408
        %v3447 = vunpack.c.0.s8 %v3446
        %v3448 = vlaneseq
        %v3449 = vshrl.u32 %v3448, 7
        %v3450 = vsub.s32 %v3447, %v3449
        %v3451 = vrot.slane %v3437, %v3450
        %v3452 = vcombine.high %v3428, 0.0
        %v3453 = vcombine.high %v3435, 0.0
        %v3454 = vcombine.high %v3444, 0.0
        %v3455 = vcombine.high %v3451, 0.0
        %v3456 = vcombine.low %v1171, %v3379
        %v3457 = vcombine.high %v1171, %v3379
        %v3459 = vunpack.c.l.s4 1983009808
        %v3460 = vunpack.c.0.s8 %v3459
        %v3461 = vlaneseq
        %v3462 = vshrl.u32 %v3461, 7
        %v3463 = vsub.s32 %v3460, %v3462
        %v3464 = vrot.slane %v3456, %v3463
        %v3466 = vunpack.c.l.s4 1983009808
        %v3467 = vunpack.c.0.s8 %v3466
        %v3468 = vlaneseq
        %v3469 = vshrl.u32 %v3468, 7
        %v3470 = vsub.s32 %v3467, %v3469
        %v3471 = vrot.slane %v3457, %v3470
        %v3472 = vcombine.low %v3373, %v3385
        %v3473 = vcombine.high %v3373, %v3385
        %v3475 = vunpack.c.l.s4 1983009808
        %v3476 = vunpack.c.0.s8 %v3475
        %v3477 = vlaneseq
        %v3478 = vshrl.u32 %v3477, 7
        %v3479 = vsub.s32 %v3476, %v3478
        %v3480 = vrot.slane %v3472, %v3479
        %v3482 = vunpack.c.l.s4 1983009808
        %v3483 = vunpack.c.0.s8 %v3482
        %v3484 = vlaneseq
        %v3485 = vshrl.u32 %v3484, 7
        %v3486 = vsub.s32 %v3483, %v3485
        %v3487 = vrot.slane %v3473, %v3486
        %v3488 = vcombine.low %v3464, %v3480
        %v3489 = vcombine.high %v3464, %v3480
        %v3491 = vunpack.c.l.s4 1934713408
        %v3492 = vunpack.c.0.s8 %v3491
        %v3493 = vlaneseq
        %v3494 = vshrl.u32 %v3493, 7
        %v3495 = vsub.s32 %v3492, %v3494
        %v3496 = vrot.slane %v3488, %v3495
        %v3498 = vunpack.c.l.s4 1934713408
        %v3499 = vunpack.c.0.s8 %v3498
        %v3500 = vlaneseq
        %v3501 = vshrl.u32 %v3500, 7
        %v3502 = vsub.s32 %v3499, %v3501
        %v3503 = vrot.slane %v3489, %v3502
        %v3504 = vcombine.low %v3471, %v3487
        %v3505 = vcombine.high %v3471, %v3487
        %v3507 = vunpack.c.l.s4 1934713408
        %v3508 = vunpack.c.0.s8 %v3507
        %v3509 = vlaneseq
        %v3510 = vshrl.u32 %v3509, 7
        %v3511 = vsub.s32 %v3508, %v3510
        %v3512 = vrot.slane %v3504, %v3511
        %v3514 = vunpack.c.l.s4 1934713408
        %v3515 = vunpack.c.0.s8 %v3514
        %v3516 = vlaneseq
        %v3517 = vshrl.u32 %v3516, 7
        %v3518 = vsub.s32 %v3515, %v3517
        %v3519 = vrot.slane %v3505, %v3518
        %v3520 = vcombine.high %v3496, 0.0
        %v3521 = vcombine.high %v3503, 0.0
        %v3522 = vcombine.high %v3512, 0.0
        %v3523 = vcombine.high %v3519, 0.0
        %v3524 = vpack.c.bf16 %v3428, %v3428
        %v3525 = vpack.c.bf16 %v3452, %v3452
        %v3526 = vpack.c.bf16 %v3435, %v3435
        %v3527 = vpack.c.bf16 %v3453, %v3453
        %v3528 = vpack.c.bf16 %v3444, %v3444
        %v3529 = vpack.c.bf16 %v3454, %v3454
        %v3530 = vpack.c.bf16 %v3451, %v3451
        %v3531 = vpack.c.bf16 %v3455, %v3455
        %v3532 = vpack.c.bf16 %v3496, %v3496
        %v3533 = vpack.c.bf16 %v3520, %v3520
        %v3534 = vpack.c.bf16 %v3503, %v3503
        %v3535 = vpack.c.bf16 %v3521, %v3521
        %v3536 = vpack.c.bf16 %v3512, %v3512
        %v3537 = vpack.c.bf16 %v3522, %v3522
        %v3538 = vpack.c.bf16 %v3519, %v3519
        %v3539 = vpack.c.bf16 %v3523, %v3523
        %v3540 = vcombine.low %v3524, %v3528
        %v3542 = vunpack.c.l.s4 1983009808
        %v3543 = vunpack.c.0.s8 %v3542
        %v3544 = vlaneseq
        %v3545 = vshrl.u32 %v3544, 7
        %v3546 = vsub.s32 %v3543, %v3545
        %v3547 = vrot.slane %v3540, %v3546
        %v3548 = vcombine.low %v3526, %v3530
        %v3550 = vunpack.c.l.s4 1983009808
        %v3551 = vunpack.c.0.s8 %v3550
        %v3552 = vlaneseq
        %v3553 = vshrl.u32 %v3552, 7
        %v3554 = vsub.s32 %v3551, %v3553
        %v3555 = vrot.slane %v3548, %v3554
        %v3556 = vcombine.low %v3532, %v3536
        %v3558 = vunpack.c.l.s4 1983009808
        %v3559 = vunpack.c.0.s8 %v3558
        %v3560 = vlaneseq
        %v3561 = vshrl.u32 %v3560, 7
        %v3562 = vsub.s32 %v3559, %v3561
        %v3563 = vrot.slane %v3556, %v3562
        %v3564 = vcombine.low %v3534, %v3538
        %v3566 = vunpack.c.l.s4 1983009808
        %v3567 = vunpack.c.0.s8 %v3566
        %v3568 = vlaneseq
        %v3569 = vshrl.u32 %v3568, 7
        %v3570 = vsub.s32 %v3567, %v3569
        %v3571 = vrot.slane %v3564, %v3570
        %v3572 = vcombine.low %v3547, %v3555
        %v3574 = vunpack.c.l.s4 1934713408
        %v3575 = vunpack.c.0.s8 %v3574
        %v3576 = vlaneseq
        %v3577 = vshrl.u32 %v3576, 7
        %v3578 = vsub.s32 %v3575, %v3577
        %v3579 = vrot.slane %v3572, %v3578
        %v3580 = vcombine.low %v3563, %v3571
        %v3582 = vunpack.c.l.s4 1934713408
        %v3583 = vunpack.c.0.s8 %v3582
        %v3584 = vlaneseq
        %v3585 = vshrl.u32 %v3584, 7
        %v3586 = vsub.s32 %v3583, %v3585
        %v3587 = vrot.slane %v3580, %v3586
        %v3588 = vcombine.low %v3579, %v3587
        %v3589 = vcombine.high %v3579, %v3587
        %v3590 = vcombine.low %v3525, %v3529
        %v3592 = vunpack.c.l.s4 1983009808
        %v3593 = vunpack.c.0.s8 %v3592
        %v3594 = vlaneseq
        %v3595 = vshrl.u32 %v3594, 7
        %v3596 = vsub.s32 %v3593, %v3595
        %v3597 = vrot.slane %v3590, %v3596
        %v3598 = vcombine.low %v3527, %v3531
        %v3600 = vunpack.c.l.s4 1983009808
        %v3601 = vunpack.c.0.s8 %v3600
        %v3602 = vlaneseq
        %v3603 = vshrl.u32 %v3602, 7
        %v3604 = vsub.s32 %v3601, %v3603
        %v3605 = vrot.slane %v3598, %v3604
        %v3606 = vcombine.low %v3533, %v3537
        %v3608 = vunpack.c.l.s4 1983009808
        %v3609 = vunpack.c.0.s8 %v3608
        %v3610 = vlaneseq
        %v3611 = vshrl.u32 %v3610, 7
        %v3612 = vsub.s32 %v3609, %v3611
        %v3613 = vrot.slane %v3606, %v3612
        %v3614 = vcombine.low %v3535, %v3539
        %v3616 = vunpack.c.l.s4 1983009808
        %v3617 = vunpack.c.0.s8 %v3616
        %v3618 = vlaneseq
        %v3619 = vshrl.u32 %v3618, 7
        %v3620 = vsub.s32 %v3617, %v3619
        %v3621 = vrot.slane %v3614, %v3620
        %v3622 = vcombine.low %v3597, %v3605
        %v3624 = vunpack.c.l.s4 1934713408
        %v3625 = vunpack.c.0.s8 %v3624
        %v3626 = vlaneseq
        %v3627 = vshrl.u32 %v3626, 7
        %v3628 = vsub.s32 %v3625, %v3627
        %v3629 = vrot.slane %v3622, %v3628
        %v3630 = vcombine.low %v3613, %v3621
        %v3632 = vunpack.c.l.s4 1934713408
        %v3633 = vunpack.c.0.s8 %v3632
        %v3634 = vlaneseq
        %v3635 = vshrl.u32 %v3634, 7
        %v3636 = vsub.s32 %v3633, %v3635
        %v3637 = vrot.slane %v3630, %v3636
        %v3638 = vcombine.low %v3629, %v3637
        %v3639 = vcombine.high %v3629, %v3637
        %v3642 = vpack.i.b16 %v3638, %v3588
        %v3644 = vshrl.u32 %v3588, 16
        %v3645 = vshrl.u32 %v3638, 16
        %v3646 = vpack.i.b16 %v3645, %v3644
        %v3650 = vpack.i.b16 %v3639, %v3589
        %v3652 = vshrl.u32 %v3589, 16
        %v3653 = vshrl.u32 %v3639, 16
        %v3654 = vpack.i.b16 %v3653, %v3652
        %s3656 = scalar_lea.vmem [#allocation2], 16
        %v3657 = vld [vmem:[%s3656] sm:$0xff]
        %v3658 = vld [vmem:[%s3656 + $0x8] sm:$0xff]
        %v3660 = vsel %vm2036, %v3074, 0
        %v3663 = vsel %vm2036, %v3358, 0
        %3665 = vmatprep.subr.bf16.mxu0 0
        %3666 = vmatpush1.bf16.xpose.msra.mxu0 0
        %3667 = vmatprep.subr.bf16.mxu0 0
        %3668 = vmatpush1.bf16.xpose.msra.mxu0 0
        %3669 = vmatprep.subr.bf16.mxu0 0
        %3670 = vmatpush1.bf16.xpose.msra.mxu0 0
        %3671 = vmatprep.subr.bf16.mxu0 0
        %3672 = vmatpush1.bf16.xpose.msra.mxu0 0
        %3673 = vmatprep.subr.bf16.mxu0 0
        %3674 = vmatpush1.bf16.xpose.msra.mxu0 0
        %3675 = vmatprep.subr.bf16.mxu0 0
        %3676 = vmatpush1.bf16.xpose.msra.mxu0 0
        %3677 = vmatprep.subr.bf16.mxu0 0
        %3678 = vmatpush1.bf16.xpose.msra.mxu0 0
        %3679 = vmatprep.subr.bf16.mxu0 0
        %3680 = vmatpush1.bf16.xpose.msra.mxu0 %v3663
        %3681 = vmatprep.subr.bf16.mxu0 0
        %3682 = vmatpush2.bf16.xpose.msra.mxu0 0
        %3683 = vmatprep.subr.bf16.mxu0 0
        %3684 = vmatpush2.bf16.xpose.msra.mxu0 0
        %3685 = vmatprep.subr.bf16.mxu0 0
        %3686 = vmatpush2.bf16.xpose.msra.mxu0 0
        %3687 = vmatprep.subr.bf16.mxu0 0
        %3688 = vmatpush2.bf16.xpose.msra.mxu0 0
        %3689 = vmatprep.subr.bf16.mxu0 0
        %3690 = vmatpush2.bf16.xpose.msra.mxu0 0
        %3691 = vmatprep.subr.bf16.mxu0 0
        %3692 = vmatpush2.bf16.xpose.msra.mxu0 0
        %3693 = vmatprep.subr.bf16.mxu0 0
        %3694 = vmatpush2.bf16.xpose.msra.mxu0 0
        %3695 = vmatprep.subr.bf16.mxu0 0
        %3696 = vmatpush2.bf16.xpose.msra.mxu0 0
        %3697 = vmatprep.mubr.bf16.mxu0 0
        %3698 = vmatmul.mubr.bf16.gmra.mxu0 %v3660
        %v3699 = vpop.f32.mrf.mxu0
        %v3700 = vadd.f32 %v3657, %v3699
        %v3701 = vpop.f32.mrf.mxu0
        %v3702 = vpop.f32.mrf.mxu0
        %v3703 = vadd.f32 %v3658, %v3702
        %v3704 = vpop.f32.mrf.mxu0
        %3705 = vdwg.mxu0
        %v3707 = vsel %vm2036, %v3077, 0
        %v3710 = vsel %vm2036, %v3361, 0
        %3712 = vmatprep.subr.bf16.mxu0 0
        %3713 = vmatpush1.bf16.xpose.msra.mxu0 0
        %3714 = vmatprep.subr.bf16.mxu0 0
        %3715 = vmatpush1.bf16.xpose.msra.mxu0 0
        %3716 = vmatprep.subr.bf16.mxu0 0
        %3717 = vmatpush1.bf16.xpose.msra.mxu0 0
        %3718 = vmatprep.subr.bf16.mxu0 0
        %3719 = vmatpush1.bf16.xpose.msra.mxu0 0
        %3720 = vmatprep.subr.bf16.mxu0 0
        %3721 = vmatpush1.bf16.xpose.msra.mxu0 0
        %3722 = vmatprep.subr.bf16.mxu0 0
        %3723 = vmatpush1.bf16.xpose.msra.mxu0 0
        %3724 = vmatprep.subr.bf16.mxu0 0
        %3725 = vmatpush1.bf16.xpose.msra.mxu0 0
        %3726 = vmatprep.subr.bf16.mxu0 0
        %3727 = vmatpush1.bf16.xpose.msra.mxu0 %v3710
        %3728 = vmatprep.subr.bf16.mxu0 0
        %3729 = vmatpush2.bf16.xpose.msra.mxu0 0
        %3730 = vmatprep.subr.bf16.mxu0 0
        %3731 = vmatpush2.bf16.xpose.msra.mxu0 0
        %3732 = vmatprep.subr.bf16.mxu0 0
        %3733 = vmatpush2.bf16.xpose.msra.mxu0 0
        %3734 = vmatprep.subr.bf16.mxu0 0
        %3735 = vmatpush2.bf16.xpose.msra.mxu0 0
        %3736 = vmatprep.subr.bf16.mxu0 0
        %3737 = vmatpush2.bf16.xpose.msra.mxu0 0
        %3738 = vmatprep.subr.bf16.mxu0 0
        %3739 = vmatpush2.bf16.xpose.msra.mxu0 0
        %3740 = vmatprep.subr.bf16.mxu0 0
        %3741 = vmatpush2.bf16.xpose.msra.mxu0 0
        %3742 = vmatprep.subr.bf16.mxu0 0
        %3743 = vmatpush2.bf16.xpose.msra.mxu0 0
        %3744 = vmatprep.mubr.bf16.mxu0 0
        %3745 = vmatmul.mubr.bf16.gmra.mxu0 %v3707
        %v3746 = vpop.f32.mrf.mxu0
        %v3747 = vadd.f32 %v3657, %v3746
        %v3748 = vpop.f32.mrf.mxu0
        %v3749 = vpop.f32.mrf.mxu0
        %v3750 = vadd.f32 %v3658, %v3749
        %v3751 = vpop.f32.mrf.mxu0
        %3752 = vdwg.mxu0
        %v3754 = vsel %vm2036, %v3080, 0
        %v3757 = vsel %vm2036, %v3364, 0
        %3759 = vmatprep.subr.bf16.mxu0 0
        %3760 = vmatpush1.bf16.xpose.msra.mxu0 0
        %3761 = vmatprep.subr.bf16.mxu0 0
        %3762 = vmatpush1.bf16.xpose.msra.mxu0 0
        %3763 = vmatprep.subr.bf16.mxu0 0
        %3764 = vmatpush1.bf16.xpose.msra.mxu0 0
        %3765 = vmatprep.subr.bf16.mxu0 0
        %3766 = vmatpush1.bf16.xpose.msra.mxu0 0
        %3767 = vmatprep.subr.bf16.mxu0 0
        %3768 = vmatpush1.bf16.xpose.msra.mxu0 0
        %3769 = vmatprep.subr.bf16.mxu0 0
        %3770 = vmatpush1.bf16.xpose.msra.mxu0 0
        %3771 = vmatprep.subr.bf16.mxu0 0
        %3772 = vmatpush1.bf16.xpose.msra.mxu0 0
        %3773 = vmatprep.subr.bf16.mxu0 0
        %3774 = vmatpush1.bf16.xpose.msra.mxu0 %v3757
        %3775 = vmatprep.subr.bf16.mxu0 0
        %3776 = vmatpush2.bf16.xpose.msra.mxu0 0
        %3777 = vmatprep.subr.bf16.mxu0 0
        %3778 = vmatpush2.bf16.xpose.msra.mxu0 0
        %3779 = vmatprep.subr.bf16.mxu0 0
        %3780 = vmatpush2.bf16.xpose.msra.mxu0 0
        %3781 = vmatprep.subr.bf16.mxu0 0
        %3782 = vmatpush2.bf16.xpose.msra.mxu0 0
        %3783 = vmatprep.subr.bf16.mxu0 0
        %3784 = vmatpush2.bf16.xpose.msra.mxu0 0
        %3785 = vmatprep.subr.bf16.mxu0 0
        %3786 = vmatpush2.bf16.xpose.msra.mxu0 0
        %3787 = vmatprep.subr.bf16.mxu0 0
        %3788 = vmatpush2.bf16.xpose.msra.mxu0 0
        %3789 = vmatprep.subr.bf16.mxu0 0
        %3790 = vmatpush2.bf16.xpose.msra.mxu0 0
        %3791 = vmatprep.mubr.bf16.mxu0 0
        %3792 = vmatmul.mubr.bf16.gmra.mxu0 %v3754
        %v3793 = vpop.f32.mrf.mxu0
        %v3794 = vadd.f32 %v3657, %v3793
        %v3795 = vpop.f32.mrf.mxu0
        %v3796 = vpop.f32.mrf.mxu0
        %v3797 = vadd.f32 %v3658, %v3796
        %v3798 = vpop.f32.mrf.mxu0
        %3799 = vdwg.mxu0
        %v3801 = vsel %vm2036, %v3083, 0
        %v3804 = vsel %vm2036, %v3367, 0
        %3806 = vmatprep.subr.bf16.mxu0 0
        %3807 = vmatpush1.bf16.xpose.msra.mxu0 0
        %3808 = vmatprep.subr.bf16.mxu0 0
        %3809 = vmatpush1.bf16.xpose.msra.mxu0 0
        %3810 = vmatprep.subr.bf16.mxu0 0
        %3811 = vmatpush1.bf16.xpose.msra.mxu0 0
        %3812 = vmatprep.subr.bf16.mxu0 0
        %3813 = vmatpush1.bf16.xpose.msra.mxu0 0
        %3814 = vmatprep.subr.bf16.mxu0 0
        %3815 = vmatpush1.bf16.xpose.msra.mxu0 0
        %3816 = vmatprep.subr.bf16.mxu0 0
        %3817 = vmatpush1.bf16.xpose.msra.mxu0 0
        %3818 = vmatprep.subr.bf16.mxu0 0
        %3819 = vmatpush1.bf16.xpose.msra.mxu0 0
        %3820 = vmatprep.subr.bf16.mxu0 0
        %3821 = vmatpush1.bf16.xpose.msra.mxu0 %v3804
        %3822 = vmatprep.subr.bf16.mxu0 0
        %3823 = vmatpush2.bf16.xpose.msra.mxu0 0
        %3824 = vmatprep.subr.bf16.mxu0 0
        %3825 = vmatpush2.bf16.xpose.msra.mxu0 0
        %3826 = vmatprep.subr.bf16.mxu0 0
        %3827 = vmatpush2.bf16.xpose.msra.mxu0 0
        %3828 = vmatprep.subr.bf16.mxu0 0
        %3829 = vmatpush2.bf16.xpose.msra.mxu0 0
        %3830 = vmatprep.subr.bf16.mxu0 0
        %3831 = vmatpush2.bf16.xpose.msra.mxu0 0
        %3832 = vmatprep.subr.bf16.mxu0 0
        %3833 = vmatpush2.bf16.xpose.msra.mxu0 0
        %3834 = vmatprep.subr.bf16.mxu0 0
        %3835 = vmatpush2.bf16.xpose.msra.mxu0 0
        %3836 = vmatprep.subr.bf16.mxu0 0
        %3837 = vmatpush2.bf16.xpose.msra.mxu0 0
        %3838 = vmatprep.mubr.bf16.mxu0 0
        %3839 = vmatmul.mubr.bf16.gmra.mxu0 %v3801
        %v3840 = vpop.f32.mrf.mxu0
        %v3841 = vadd.f32 %v3657, %v3840
        %v3842 = vpop.f32.mrf.mxu0
        %v3843 = vpop.f32.mrf.mxu0
        %v3844 = vadd.f32 %v3658, %v3843
        %v3845 = vpop.f32.mrf.mxu0
        %3846 = vdwg.mxu0
        %v3847 = vsel %vm2225, %v3700, -inf
        %3848 = vmax.xlane.f32.xlu0 %v3847
        %v3849 = vpop.xlane.xlu0 %3848
        %v3850 = vsel %vm2225, %v3703, -inf
        %3851 = vmax.xlane.f32.xlu0 %v3850
        %v3852 = vpop.xlane.xlu0 %3851
        %v3853 = vsel %vm2225, %v3747, -inf
        %3854 = vmax.xlane.f32.xlu0 %v3853
        %v3855 = vpop.xlane.xlu0 %3854
        %v3856 = vsel %vm2225, %v3750, -inf
        %3857 = vmax.xlane.f32.xlu0 %v3856
        %v3858 = vpop.xlane.xlu0 %3857
        %v3859 = vsel %vm2225, %v3794, -inf
        %3860 = vmax.xlane.f32.xlu0 %v3859
        %v3861 = vpop.xlane.xlu0 %3860
        %v3862 = vsel %vm2225, %v3797, -inf
        %3863 = vmax.xlane.f32.xlu0 %v3862
        %v3864 = vpop.xlane.xlu0 %3863
        %v3865 = vsel %vm2225, %v3841, -inf
        %3866 = vmax.xlane.f32.xlu0 %v3865
        %v3867 = vpop.xlane.xlu0 %3866
        %v3868 = vsel %vm2225, %v3844, -inf
        %3869 = vmax.xlane.f32.xlu0 %v3868
        %v3870 = vpop.xlane.xlu0 %3869
        %v3871 = vsub.f32 %v3700, %v3849
        %v3872 = vsub.f32 %v3703, %v3852
        %v3873 = vsub.f32 %v3747, %v3855
        %v3874 = vsub.f32 %v3750, %v3858
        %v3875 = vsub.f32 %v3794, %v3861
        %v3876 = vsub.f32 %v3797, %v3864
        %v3877 = vsub.f32 %v3841, %v3867
        %v3878 = vsub.f32 %v3844, %v3870
        %v3879 = vmul.f32 %v3871, 1.442695
        %v3880 = vpow.pop %v3879
        %v3881 = vmul.f32 %v3872, 1.442695
        %v3882 = vpow.pop %v3881
        %v3883 = vmul.f32 %v3873, 1.442695
        %v3884 = vpow.pop %v3883
        %v3885 = vmul.f32 %v3874, 1.442695
        %v3886 = vpow.pop %v3885
        %v3887 = vmul.f32 %v3875, 1.442695
        %v3888 = vpow.pop %v3887
        %v3889 = vmul.f32 %v3876, 1.442695
        %v3890 = vpow.pop %v3889
        %v3891 = vmul.f32 %v3877, 1.442695
        %v3892 = vpow.pop %v3891
        %v3893 = vmul.f32 %v3878, 1.442695
        %v3894 = vpow.pop %v3893
        %v3895 = vsel %vm2225, %v3880, 0.0
        %3896 = vadd.xlane.f32.xlu0 %v3895
        %v3897 = vpop.xlane.xlu0 %3896
        %v3898 = vsel %vm2225, %v3882, 0.0
        %3899 = vadd.xlane.f32.xlu0 %v3898
        %v3900 = vpop.xlane.xlu0 %3899
        %v3901 = vsel %vm2225, %v3884, 0.0
        %3902 = vadd.xlane.f32.xlu0 %v3901
        %v3903 = vpop.xlane.xlu0 %3902
        %v3904 = vsel %vm2225, %v3886, 0.0
        %3905 = vadd.xlane.f32.xlu0 %v3904
        %v3906 = vpop.xlane.xlu0 %3905
        %v3907 = vsel %vm2225, %v3888, 0.0
        %3908 = vadd.xlane.f32.xlu0 %v3907
        %v3909 = vpop.xlane.xlu0 %3908
        %v3910 = vsel %vm2225, %v3890, 0.0
        %3911 = vadd.xlane.f32.xlu0 %v3910
        %v3912 = vpop.xlane.xlu0 %3911
        %v3913 = vsel %vm2225, %v3892, 0.0
        %3914 = vadd.xlane.f32.xlu0 %v3913
        %v3915 = vpop.xlane.xlu0 %3914
        %v3916 = vsel %vm2225, %v3894, 0.0
        %3917 = vadd.xlane.f32.xlu0 %v3916
        %v3918 = vpop.xlane.xlu0 %3917
        %v3919 = vrcp.pop %v3897
        %v3920 = vrcp.pop %v3900
        %v3921 = vrcp.pop %v3903
        %v3922 = vrcp.pop %v3906
        %v3923 = vrcp.pop %v3909
        %v3924 = vrcp.pop %v3912
        %v3925 = vrcp.pop %v3915
        %v3926 = vrcp.pop %v3918
        %v3927 = vmul.f32 %v3880, %v3919
        %v3928 = vmul.f32 %v3882, %v3920
        %v3929 = vmul.f32 %v3884, %v3921
        %v3930 = vmul.f32 %v3886, %v3922
        %v3931 = vmul.f32 %v3888, %v3923
        %v3932 = vmul.f32 %v3890, %v3924
        %v3933 = vmul.f32 %v3892, %v3925
        %v3934 = vmul.f32 %v3894, %v3926
        %v3935 = vpack.c.bf16 %v3928, %v3927
        %v3936 = vpack.c.bf16 %v3930, %v3929
        %v3937 = vpack.c.bf16 %v3932, %v3931
        %v3938 = vpack.c.bf16 %v3934, %v3933
        %v3940 = vsel %vm2225, %v3935, 0
        %3942 = vmatprep.subr.bf16.mxu0 0
        %3943 = vmatpush1.bf16.msra.mxu0 0
        %3944 = vmatprep.subr.bf16.mxu0 0
        %3945 = vmatpush1.bf16.msra.mxu0 0
        %3946 = vmatprep.subr.bf16.mxu0 0
        %3947 = vmatpush1.bf16.msra.mxu0 0
        %3948 = vmatprep.subr.bf16.mxu0 0
        %3949 = vmatpush1.bf16.msra.mxu0 0
        %3950 = vmatprep.subr.bf16.mxu0 0
        %3951 = vmatpush1.bf16.msra.mxu0 0
        %3952 = vmatprep.subr.bf16.mxu0 0
        %3953 = vmatpush1.bf16.msra.mxu0 0
        %3954 = vmatprep.subr.bf16.mxu0 0
        %3955 = vmatpush1.bf16.msra.mxu0 0
        %3956 = vmatprep.subr.bf16.mxu0 0
        %3957 = vmatpush1.bf16.msra.mxu0 %v3642
        %3958 = vmatprep.subr.bf16.mxu0 0
        %3959 = vmatpush2.bf16.msra.mxu0 0
        %3960 = vmatprep.subr.bf16.mxu0 0
        %3961 = vmatpush2.bf16.msra.mxu0 0
        %3962 = vmatprep.subr.bf16.mxu0 0
        %3963 = vmatpush2.bf16.msra.mxu0 0
        %3964 = vmatprep.subr.bf16.mxu0 0
        %3965 = vmatpush2.bf16.msra.mxu0 0
        %3966 = vmatprep.subr.bf16.mxu0 0
        %3967 = vmatpush2.bf16.msra.mxu0 0
        %3968 = vmatprep.subr.bf16.mxu0 0
        %3969 = vmatpush2.bf16.msra.mxu0 0
        %3970 = vmatprep.subr.bf16.mxu0 0
        %3971 = vmatpush2.bf16.msra.mxu0 0
        %3972 = vmatprep.subr.bf16.mxu0 0
        %3973 = vmatpush2.bf16.msra.mxu0 0
        %3974 = vmatprep.mubr.bf16.mxu0 0
        %3975 = vmatmul.mubr.bf16.gmra.mxu0 %v3940
        %v3976 = vpop.f32.mrf.mxu0
        %v3977 = vadd.f32 0.0, %v3976
        %v3978 = vpop.f32.mrf.mxu0
        %v3979 = vpop.f32.mrf.mxu0
        %v3980 = vadd.f32 0.0, %v3979
        %v3981 = vpop.f32.mrf.mxu0
        %3982 = vdwg.mxu0
        %v3984 = vsel %vm2225, %v3936, 0
        %3986 = vmatprep.subr.bf16.mxu0 0
        %3987 = vmatpush1.bf16.msra.mxu0 0
        %3988 = vmatprep.subr.bf16.mxu0 0
        %3989 = vmatpush1.bf16.msra.mxu0 0
        %3990 = vmatprep.subr.bf16.mxu0 0
        %3991 = vmatpush1.bf16.msra.mxu0 0
        %3992 = vmatprep.subr.bf16.mxu0 0
        %3993 = vmatpush1.bf16.msra.mxu0 0
        %3994 = vmatprep.subr.bf16.mxu0 0
        %3995 = vmatpush1.bf16.msra.mxu0 0
        %3996 = vmatprep.subr.bf16.mxu0 0
        %3997 = vmatpush1.bf16.msra.mxu0 0
        %3998 = vmatprep.subr.bf16.mxu0 0
        %3999 = vmatpush1.bf16.msra.mxu0 0
        %4000 = vmatprep.subr.bf16.mxu0 0
        %4001 = vmatpush1.bf16.msra.mxu0 %v3646
        %4002 = vmatprep.subr.bf16.mxu0 0
        %4003 = vmatpush2.bf16.msra.mxu0 0
        %4004 = vmatprep.subr.bf16.mxu0 0
        %4005 = vmatpush2.bf16.msra.mxu0 0
        %4006 = vmatprep.subr.bf16.mxu0 0
        %4007 = vmatpush2.bf16.msra.mxu0 0
        %4008 = vmatprep.subr.bf16.mxu0 0
        %4009 = vmatpush2.bf16.msra.mxu0 0
        %4010 = vmatprep.subr.bf16.mxu0 0
        %4011 = vmatpush2.bf16.msra.mxu0 0
        %4012 = vmatprep.subr.bf16.mxu0 0
        %4013 = vmatpush2.bf16.msra.mxu0 0
        %4014 = vmatprep.subr.bf16.mxu0 0
        %4015 = vmatpush2.bf16.msra.mxu0 0
        %4016 = vmatprep.subr.bf16.mxu0 0
        %4017 = vmatpush2.bf16.msra.mxu0 0
        %4018 = vmatprep.mubr.bf16.mxu0 0
        %4019 = vmatmul.mubr.bf16.gmra.mxu0 %v3984
        %v4020 = vpop.f32.mrf.mxu0
        %v4021 = vadd.f32 0.0, %v4020
        %v4022 = vpop.f32.mrf.mxu0
        %v4023 = vpop.f32.mrf.mxu0
        %v4024 = vadd.f32 0.0, %v4023
        %v4025 = vpop.f32.mrf.mxu0
        %4026 = vdwg.mxu0
        %v4028 = vsel %vm2225, %v3937, 0
        %4030 = vmatprep.subr.bf16.mxu0 0
        %4031 = vmatpush1.bf16.msra.mxu0 0
        %4032 = vmatprep.subr.bf16.mxu0 0
        %4033 = vmatpush1.bf16.msra.mxu0 0
        %4034 = vmatprep.subr.bf16.mxu0 0
        %4035 = vmatpush1.bf16.msra.mxu0 0
        %4036 = vmatprep.subr.bf16.mxu0 0
        %4037 = vmatpush1.bf16.msra.mxu0 0
        %4038 = vmatprep.subr.bf16.mxu0 0
        %4039 = vmatpush1.bf16.msra.mxu0 0
        %4040 = vmatprep.subr.bf16.mxu0 0
        %4041 = vmatpush1.bf16.msra.mxu0 0
        %4042 = vmatprep.subr.bf16.mxu0 0
        %4043 = vmatpush1.bf16.msra.mxu0 0
        %4044 = vmatprep.subr.bf16.mxu0 0
        %4045 = vmatpush1.bf16.msra.mxu0 %v3650
        %4046 = vmatprep.subr.bf16.mxu0 0
        %4047 = vmatpush2.bf16.msra.mxu0 0
        %4048 = vmatprep.subr.bf16.mxu0 0
        %4049 = vmatpush2.bf16.msra.mxu0 0
        %4050 = vmatprep.subr.bf16.mxu0 0
        %4051 = vmatpush2.bf16.msra.mxu0 0
        %4052 = vmatprep.subr.bf16.mxu0 0
        %4053 = vmatpush2.bf16.msra.mxu0 0
        %4054 = vmatprep.subr.bf16.mxu0 0
        %4055 = vmatpush2.bf16.msra.mxu0 0
        %4056 = vmatprep.subr.bf16.mxu0 0
        %4057 = vmatpush2.bf16.msra.mxu0 0
        %4058 = vmatprep.subr.bf16.mxu0 0
        %4059 = vmatpush2.bf16.msra.mxu0 0
        %4060 = vmatprep.subr.bf16.mxu0 0
        %4061 = vmatpush2.bf16.msra.mxu0 0
        %4062 = vmatprep.mubr.bf16.mxu0 0
        %4063 = vmatmul.mubr.bf16.gmra.mxu0 %v4028
        %v4064 = vpop.f32.mrf.mxu0
        %v4065 = vadd.f32 0.0, %v4064
        %v4066 = vpop.f32.mrf.mxu0
        %v4067 = vpop.f32.mrf.mxu0
        %v4068 = vadd.f32 0.0, %v4067
        %v4069 = vpop.f32.mrf.mxu0
        %4070 = vdwg.mxu0
        %v4072 = vsel %vm2225, %v3938, 0
        %4074 = vmatprep.subr.bf16.mxu0 0
        %4075 = vmatpush1.bf16.msra.mxu0 0
        %4076 = vmatprep.subr.bf16.mxu0 0
        %4077 = vmatpush1.bf16.msra.mxu0 0
        %4078 = vmatprep.subr.bf16.mxu0 0
        %4079 = vmatpush1.bf16.msra.mxu0 0
        %4080 = vmatprep.subr.bf16.mxu0 0
        %4081 = vmatpush1.bf16.msra.mxu0 0
        %4082 = vmatprep.subr.bf16.mxu0 0
        %4083 = vmatpush1.bf16.msra.mxu0 0
        %4084 = vmatprep.subr.bf16.mxu0 0
        %4085 = vmatpush1.bf16.msra.mxu0 0
        %4086 = vmatprep.subr.bf16.mxu0 0
        %4087 = vmatpush1.bf16.msra.mxu0 0
        %4088 = vmatprep.subr.bf16.mxu0 0
        %4089 = vmatpush1.bf16.msra.mxu0 %v3654
        %4090 = vmatprep.subr.bf16.mxu0 0
        %4091 = vmatpush2.bf16.msra.mxu0 0
        %4092 = vmatprep.subr.bf16.mxu0 0
        %4093 = vmatpush2.bf16.msra.mxu0 0
        %4094 = vmatprep.subr.bf16.mxu0 0
        %4095 = vmatpush2.bf16.msra.mxu0 0
        %4096 = vmatprep.subr.bf16.mxu0 0
        %4097 = vmatpush2.bf16.msra.mxu0 0
        %4098 = vmatprep.subr.bf16.mxu0 0
        %4099 = vmatpush2.bf16.msra.mxu0 0
        %4100 = vmatprep.subr.bf16.mxu0 0
        %4101 = vmatpush2.bf16.msra.mxu0 0
        %4102 = vmatprep.subr.bf16.mxu0 0
        %4103 = vmatpush2.bf16.msra.mxu0 0
        %4104 = vmatprep.subr.bf16.mxu0 0
        %4105 = vmatpush2.bf16.msra.mxu0 0
        %4106 = vmatprep.mubr.bf16.mxu0 0
        %4107 = vmatmul.mubr.bf16.gmra.mxu0 %v4072
        %v4108 = vpop.f32.mrf.mxu0
        %v4109 = vadd.f32 0.0, %v4108
        %v4110 = vpop.f32.mrf.mxu0
        %v4111 = vpop.f32.mrf.mxu0
        %v4112 = vadd.f32 0.0, %v4111
        %v4113 = vpop.f32.mrf.mxu0
        %4114 = vdwg.mxu0
        %v4115 = vcombine.low %v3977, %v4065
        %v4116 = vcombine.high %v3977, %v4065
        %v4118 = vunpack.c.l.s4 1983009808
        %v4119 = vunpack.c.0.s8 %v4118
        %v4120 = vlaneseq
        %v4121 = vshrl.u32 %v4120, 7
        %v4122 = vsub.s32 %v4119, %v4121
        %v4123 = vrot.slane %v4115, %v4122
        %v4125 = vunpack.c.l.s4 1983009808
        %v4126 = vunpack.c.0.s8 %v4125
        %v4127 = vlaneseq
        %v4128 = vshrl.u32 %v4127, 7
        %v4129 = vsub.s32 %v4126, %v4128
        %v4130 = vrot.slane %v4116, %v4129
        %v4131 = vcombine.low %v4021, %v4109
        %v4132 = vcombine.high %v4021, %v4109
        %v4134 = vunpack.c.l.s4 1983009808
        %v4135 = vunpack.c.0.s8 %v4134
        %v4136 = vlaneseq
        %v4137 = vshrl.u32 %v4136, 7
        %v4138 = vsub.s32 %v4135, %v4137
        %v4139 = vrot.slane %v4131, %v4138
        %v4141 = vunpack.c.l.s4 1983009808
        %v4142 = vunpack.c.0.s8 %v4141
        %v4143 = vlaneseq
        %v4144 = vshrl.u32 %v4143, 7
        %v4145 = vsub.s32 %v4142, %v4144
        %v4146 = vrot.slane %v4132, %v4145
        %v4147 = vcombine.low %v4123, %v4139
        %v4148 = vcombine.high %v4123, %v4139
        %v4150 = vunpack.c.l.s4 1934713408
        %v4151 = vunpack.c.0.s8 %v4150
        %v4152 = vlaneseq
        %v4153 = vshrl.u32 %v4152, 7
        %v4154 = vsub.s32 %v4151, %v4153
        %v4155 = vrot.slane %v4147, %v4154
        %v4157 = vunpack.c.l.s4 1934713408
        %v4158 = vunpack.c.0.s8 %v4157
        %v4159 = vlaneseq
        %v4160 = vshrl.u32 %v4159, 7
        %v4161 = vsub.s32 %v4158, %v4160
        %v4162 = vrot.slane %v4148, %v4161
        %v4163 = vcombine.low %v4130, %v4146
        %v4164 = vcombine.high %v4130, %v4146
        %v4166 = vunpack.c.l.s4 1934713408
        %v4167 = vunpack.c.0.s8 %v4166
        %v4168 = vlaneseq
        %v4169 = vshrl.u32 %v4168, 7
        %v4170 = vsub.s32 %v4167, %v4169
        %v4171 = vrot.slane %v4163, %v4170
        %v4173 = vunpack.c.l.s4 1934713408
        %v4174 = vunpack.c.0.s8 %v4173
        %v4175 = vlaneseq
        %v4176 = vshrl.u32 %v4175, 7
        %v4177 = vsub.s32 %v4174, %v4176
        %v4178 = vrot.slane %v4164, %v4177
        %v4179 = vcombine.high %v4155, 0.0
        %v4180 = vcombine.high %v4162, 0.0
        %v4181 = vcombine.high %v4171, 0.0
        %v4182 = vcombine.high %v4178, 0.0
        %v4183 = vcombine.low %v3980, %v4068
        %v4184 = vcombine.high %v3980, %v4068
        %v4186 = vunpack.c.l.s4 1983009808
        %v4187 = vunpack.c.0.s8 %v4186
        %v4188 = vlaneseq
        %v4189 = vshrl.u32 %v4188, 7
        %v4190 = vsub.s32 %v4187, %v4189
        %v4191 = vrot.slane %v4183, %v4190
        %v4193 = vunpack.c.l.s4 1983009808
        %v4194 = vunpack.c.0.s8 %v4193
        %v4195 = vlaneseq
        %v4196 = vshrl.u32 %v4195, 7
        %v4197 = vsub.s32 %v4194, %v4196
        %v4198 = vrot.slane %v4184, %v4197
        %v4199 = vcombine.low %v4024, %v4112
        %v4200 = vcombine.high %v4024, %v4112
        %v4202 = vunpack.c.l.s4 1983009808
        %v4203 = vunpack.c.0.s8 %v4202
        %v4204 = vlaneseq
        %v4205 = vshrl.u32 %v4204, 7
        %v4206 = vsub.s32 %v4203, %v4205
        %v4207 = vrot.slane %v4199, %v4206
        %v4209 = vunpack.c.l.s4 1983009808
        %v4210 = vunpack.c.0.s8 %v4209
        %v4211 = vlaneseq
        %v4212 = vshrl.u32 %v4211, 7
        %v4213 = vsub.s32 %v4210, %v4212
        %v4214 = vrot.slane %v4200, %v4213
        %v4215 = vcombine.low %v4191, %v4207
        %v4216 = vcombine.high %v4191, %v4207
        %v4218 = vunpack.c.l.s4 1934713408
        %v4219 = vunpack.c.0.s8 %v4218
        %v4220 = vlaneseq
        %v4221 = vshrl.u32 %v4220, 7
        %v4222 = vsub.s32 %v4219, %v4221
        %v4223 = vrot.slane %v4215, %v4222
        %v4225 = vunpack.c.l.s4 1934713408
        %v4226 = vunpack.c.0.s8 %v4225
        %v4227 = vlaneseq
        %v4228 = vshrl.u32 %v4227, 7
        %v4229 = vsub.s32 %v4226, %v4228
        %v4230 = vrot.slane %v4216, %v4229
        %v4231 = vcombine.low %v4198, %v4214
        %v4232 = vcombine.high %v4198, %v4214
        %v4234 = vunpack.c.l.s4 1934713408
        %v4235 = vunpack.c.0.s8 %v4234
        %v4236 = vlaneseq
        %v4237 = vshrl.u32 %v4236, 7
        %v4238 = vsub.s32 %v4235, %v4237
        %v4239 = vrot.slane %v4231, %v4238
        %v4241 = vunpack.c.l.s4 1934713408
        %v4242 = vunpack.c.0.s8 %v4241
        %v4243 = vlaneseq
        %v4244 = vshrl.u32 %v4243, 7
        %v4245 = vsub.s32 %v4242, %v4244
        %v4246 = vrot.slane %v4232, %v4245
        %v4247 = vcombine.high %v4223, 0.0
        %v4248 = vcombine.high %v4230, 0.0
        %v4249 = vcombine.high %v4239, 0.0
        %v4250 = vcombine.high %v4246, 0.0
        %v4251 = vcombine.low %v4155, %v4162
        %v4253 = vunpack.c.l.s4 1983009808
        %v4254 = vunpack.c.0.s8 %v4253
        %v4255 = vlaneseq
        %v4256 = vshrl.u32 %v4255, 7
        %v4257 = vsub.s32 %v4254, %v4256
        %v4258 = vrot.slane %v4251, %v4257
        %v4259 = vcombine.low %v4179, %v4180
        %v4261 = vunpack.c.l.s4 1983009808
        %v4262 = vunpack.c.0.s8 %v4261
        %v4263 = vlaneseq
        %v4264 = vshrl.u32 %v4263, 7
        %v4265 = vsub.s32 %v4262, %v4264
        %v4266 = vrot.slane %v4259, %v4265
        %v4267 = vcombine.low %v4171, %v4178
        %v4269 = vunpack.c.l.s4 1983009808
        %v4270 = vunpack.c.0.s8 %v4269
        %v4271 = vlaneseq
        %v4272 = vshrl.u32 %v4271, 7
        %v4273 = vsub.s32 %v4270, %v4272
        %v4274 = vrot.slane %v4267, %v4273
        %v4275 = vcombine.low %v4181, %v4182
        %v4277 = vunpack.c.l.s4 1983009808
        %v4278 = vunpack.c.0.s8 %v4277
        %v4279 = vlaneseq
        %v4280 = vshrl.u32 %v4279, 7
        %v4281 = vsub.s32 %v4278, %v4280
        %v4282 = vrot.slane %v4275, %v4281
        %v4283 = vcombine.low %v4258, %v4266
        %v4284 = vcombine.high %v4258, %v4266
        %v4286 = vunpack.c.l.s4 1934713408
        %v4287 = vunpack.c.0.s8 %v4286
        %v4288 = vlaneseq
        %v4289 = vshrl.u32 %v4288, 7
        %v4290 = vsub.s32 %v4287, %v4289
        %v4291 = vrot.slane %v4283, %v4290
        %v4293 = vunpack.c.l.s4 1934713408
        %v4294 = vunpack.c.0.s8 %v4293
        %v4295 = vlaneseq
        %v4296 = vshrl.u32 %v4295, 7
        %v4297 = vsub.s32 %v4294, %v4296
        %v4298 = vrot.slane %v4284, %v4297
        %v4299 = vcombine.low %v4274, %v4282
        %v4300 = vcombine.high %v4274, %v4282
        %v4302 = vunpack.c.l.s4 1934713408
        %v4303 = vunpack.c.0.s8 %v4302
        %v4304 = vlaneseq
        %v4305 = vshrl.u32 %v4304, 7
        %v4306 = vsub.s32 %v4303, %v4305
        %v4307 = vrot.slane %v4299, %v4306
        %v4309 = vunpack.c.l.s4 1934713408
        %v4310 = vunpack.c.0.s8 %v4309
        %v4311 = vlaneseq
        %v4312 = vshrl.u32 %v4311, 7
        %v4313 = vsub.s32 %v4310, %v4312
        %v4314 = vrot.slane %v4300, %v4313
        %v4315 = vcombine.low %v4291, %v4307
        %v4316 = vcombine.high %v4291, %v4307
        %v4317 = vcombine.low %v4298, %v4314
        %v4318 = vcombine.high %v4298, %v4314
        %v4319 = vcombine.low %v4223, %v4230
        %v4321 = vunpack.c.l.s4 1983009808
        %v4322 = vunpack.c.0.s8 %v4321
        %v4323 = vlaneseq
        %v4324 = vshrl.u32 %v4323, 7
        %v4325 = vsub.s32 %v4322, %v4324
        %v4326 = vrot.slane %v4319, %v4325
        %v4327 = vcombine.low %v4247, %v4248
        %v4329 = vunpack.c.l.s4 1983009808
        %v4330 = vunpack.c.0.s8 %v4329
        %v4331 = vlaneseq
        %v4332 = vshrl.u32 %v4331, 7
        %v4333 = vsub.s32 %v4330, %v4332
        %v4334 = vrot.slane %v4327, %v4333
        %v4335 = vcombine.low %v4239, %v4246
        %v4337 = vunpack.c.l.s4 1983009808
        %v4338 = vunpack.c.0.s8 %v4337
        %v4339 = vlaneseq
        %v4340 = vshrl.u32 %v4339, 7
        %v4341 = vsub.s32 %v4338, %v4340
        %v4342 = vrot.slane %v4335, %v4341
        %v4343 = vcombine.low %v4249, %v4250
        %v4345 = vunpack.c.l.s4 1983009808
        %v4346 = vunpack.c.0.s8 %v4345
        %v4347 = vlaneseq
        %v4348 = vshrl.u32 %v4347, 7
        %v4349 = vsub.s32 %v4346, %v4348
        %v4350 = vrot.slane %v4343, %v4349
        %v4351 = vcombine.low %v4326, %v4334
        %v4352 = vcombine.high %v4326, %v4334
        %v4354 = vunpack.c.l.s4 1934713408
        %v4355 = vunpack.c.0.s8 %v4354
        %v4356 = vlaneseq
        %v4357 = vshrl.u32 %v4356, 7
        %v4358 = vsub.s32 %v4355, %v4357
        %v4359 = vrot.slane %v4351, %v4358
        %v4361 = vunpack.c.l.s4 1934713408
        %v4362 = vunpack.c.0.s8 %v4361
        %v4363 = vlaneseq
        %v4364 = vshrl.u32 %v4363, 7
        %v4365 = vsub.s32 %v4362, %v4364
        %v4366 = vrot.slane %v4352, %v4365
        %v4367 = vcombine.low %v4342, %v4350
        %v4368 = vcombine.high %v4342, %v4350
        %v4370 = vunpack.c.l.s4 1934713408
        %v4371 = vunpack.c.0.s8 %v4370
        %v4372 = vlaneseq
        %v4373 = vshrl.u32 %v4372, 7
        %v4374 = vsub.s32 %v4371, %v4373
        %v4375 = vrot.slane %v4367, %v4374
        %v4377 = vunpack.c.l.s4 1934713408
        %v4378 = vunpack.c.0.s8 %v4377
        %v4379 = vlaneseq
        %v4380 = vshrl.u32 %v4379, 7
        %v4381 = vsub.s32 %v4378, %v4380
        %v4382 = vrot.slane %v4368, %v4381
        %v4383 = vcombine.low %v4359, %v4375
        %v4384 = vcombine.high %v4359, %v4375
        %v4385 = vcombine.low %v4366, %v4382
        %v4386 = vcombine.high %v4366, %v4382
        %4389 = vrot.lane.b32.xlu0 %v4316, 32
        %v4390 = vpop.permute.xlu0 %4389
        %4391 = vrot.lane.b32.xlu0 %v4384, 32
        %v4392 = vpop.permute.xlu0 %4391
        %4397 = vrot.lane.b32.xlu0 %v4317, 64
        %v4398 = vpop.permute.xlu0 %4397
        %4399 = vrot.lane.b32.xlu0 %v4385, 64
        %v4400 = vpop.permute.xlu0 %4399
        %4405 = vrot.lane.b32.xlu0 %v4318, 96
        %v4406 = vpop.permute.xlu0 %4405
        %4407 = vrot.lane.b32.xlu0 %v4386, 96
        %v4408 = vpop.permute.xlu0 %4407
        %v4411 = vsel %vm2036, %v4315, %v4390
        %v4412 = vsel %vm2036, %v4383, %v4392
        %v4413 = vsel %vm2792, %v4411, %v4398
        %v4414 = vsel %vm2792, %v4412, %v4400
        %v4415 = vsel %vm2795, %v4413, %v4406
        %v4416 = vsel %vm2795, %v4414, %v4408
        %4417 = vst [vmem:[#allocation3 + $0x10] sm:$0xff] %v4415
        %4418 = vst [vmem:[#allocation3 + $0x18] sm:$0xff] %v4416
        %v4419 = vld [vmem:[#allocation3] sm:$0xff]
        %v4420 = vld [vmem:[#allocation3 + $0x8] sm:$0xff]
        %v4421 = vld [vmem:[#allocation3 + $0x10] sm:$0xff]
        %v4422 = vld [vmem:[#allocation3 + $0x18] sm:$0xff]
        %v4423 = vpack.c.bf16 %v4420, %v4419
        %v4424 = vpack.c.bf16 %v4422, %v4421
        %v4425 = vld [vmem:[%s646] sm:$0xf]
        %v4426 = vld [vmem:[%s646 + $0x4] sm:$0xf]
        %v4427 = vld [vmem:[%s646 + $0x8] sm:$0xf]
        %v4428 = vld [vmem:[%s646 + $0xc] sm:$0xf]
        %v4429 = vld [vmem:[%s646 + $0x10] sm:$0xf]
        %v4430 = vld [vmem:[%s646 + $0x14] sm:$0xf]
        %v4431 = vld [vmem:[%s646 + $0x18] sm:$0xf]
        %v4432 = vld [vmem:[%s646 + $0x1c] sm:$0xf]
        %v4433 = vld [vmem:[%s646 + $0x20] sm:$0xf]
        %v4434 = vld [vmem:[%s646 + $0x24] sm:$0xf]
        %v4435 = vld [vmem:[%s646 + $0x28] sm:$0xf]
        %v4436 = vld [vmem:[%s646 + $0x2c] sm:$0xf]
        %v4437 = vld [vmem:[%s646 + $0x30] sm:$0xf]
        %v4438 = vld [vmem:[%s646 + $0x34] sm:$0xf]
        %v4439 = vld [vmem:[%s646 + $0x38] sm:$0xf]
        %v4440 = vld [vmem:[%s646 + $0x3c] sm:$0xf]
        %v4441 = vld [vmem:[%s761] sm:$0x1]
        %v4443 = vlaneseq
        %v4444 = vshrl.u32 %v4443, 7
        %v4445 = vsub.s32 0, %v4444
        %v4446 = vrot.slane %v4441, %v4445
        %v4464 = vunpack.c.l.b16 %v4425
        %v4465 = vunpack.c.l.b16 %v4426
        %v4466 = vunpack.c.l.b16 %v4427
        %v4467 = vunpack.c.l.b16 %v4428
        %v4468 = vunpack.c.l.b16 %v4429
        %v4469 = vunpack.c.l.b16 %v4430
        %v4470 = vunpack.c.l.b16 %v4431
        %v4471 = vunpack.c.l.b16 %v4432
        %v4472 = vunpack.c.l.b16 %v4433
        %v4473 = vunpack.c.l.b16 %v4434
        %v4474 = vunpack.c.l.b16 %v4435
        %v4475 = vunpack.c.l.b16 %v4436
        %v4476 = vunpack.c.l.b16 %v4437
        %v4477 = vunpack.c.l.b16 %v4438
        %v4478 = vunpack.c.l.b16 %v4439
        %v4479 = vunpack.c.l.b16 %v4440
        %v4480 = vpack.c.b16 %v4465, %v4464
        %v4481 = vpack.c.b16 %v4467, %v4466
        %v4482 = vpack.c.b16 %v4469, %v4468
        %v4483 = vpack.c.b16 %v4471, %v4470
        %v4484 = vpack.c.b16 %v4473, %v4472
        %v4485 = vpack.c.b16 %v4475, %v4474
        %v4486 = vpack.c.b16 %v4477, %v4476
        %v4487 = vpack.c.b16 %v4479, %v4478
        %4496 = vmatprep.subr.bf16.mxu0 0
        %4497 = vmatpush1.bf16.msra.mxu0 %v4487
        %4498 = vmatprep.subr.bf16.mxu0 0
        %4499 = vmatpush1.bf16.msra.mxu0 %v4486
        %4500 = vmatprep.subr.bf16.mxu0 0
        %4501 = vmatpush1.bf16.msra.mxu0 %v4485
        %4502 = vmatprep.subr.bf16.mxu0 0
        %4503 = vmatpush1.bf16.msra.mxu0 %v4484
        %4504 = vmatprep.subr.bf16.mxu0 0
        %4505 = vmatpush1.bf16.msra.mxu0 %v4483
        %4506 = vmatprep.subr.bf16.mxu0 0
        %4507 = vmatpush1.bf16.msra.mxu0 %v4482
        %4508 = vmatprep.subr.bf16.mxu0 0
        %4509 = vmatpush1.bf16.msra.mxu0 %v4481
        %4510 = vmatprep.subr.bf16.mxu0 0
        %4511 = vmatpush1.bf16.msra.mxu0 %v4480
        %4512 = vmatprep.subr.bf16.mxu0 0
        %4513 = vmatpush2.bf16.msra.mxu0 0
        %4514 = vmatprep.subr.bf16.mxu0 0
        %4515 = vmatpush2.bf16.msra.mxu0 0
        %4516 = vmatprep.subr.bf16.mxu0 0
        %4517 = vmatpush2.bf16.msra.mxu0 0
        %4518 = vmatprep.subr.bf16.mxu0 0
        %4519 = vmatpush2.bf16.msra.mxu0 0
        %4520 = vmatprep.subr.bf16.mxu0 0
        %4521 = vmatpush2.bf16.msra.mxu0 0
        %4522 = vmatprep.subr.bf16.mxu0 0
        %4523 = vmatpush2.bf16.msra.mxu0 0
        %4524 = vmatprep.subr.bf16.mxu0 0
        %4525 = vmatpush2.bf16.msra.mxu0 0
        %4526 = vmatprep.subr.bf16.mxu0 0
        %4527 = vmatpush2.bf16.msra.mxu0 0
        %4528 = vmatprep.mubr.bf16.mxu0 0
        %4529 = vmatmul.mubr.bf16.gmra.mxu0 %v4423
        %v4530 = vpop.f32.mrf.mxu0
        %v4531 = vadd.f32 %v4446, %v4530
        %v4532 = vpop.f32.mrf.mxu0
        %v4533 = vpop.f32.mrf.mxu0
        %v4534 = vadd.f32 %v4446, %v4533
        %v4535 = vpop.f32.mrf.mxu0
        %4536 = vmatprep.mubr.bf16.mxu0 0
        %4537 = vmatmul.mubr.bf16.gmra.mxu0 %v4424
        %v4538 = vpop.f32.mrf.mxu0
        %v4539 = vadd.f32 %v4446, %v4538
        %v4540 = vpop.f32.mrf.mxu0
        %v4541 = vpop.f32.mrf.mxu0
        %v4542 = vadd.f32 %v4446, %v4541
        %v4543 = vpop.f32.mrf.mxu0
        %4544 = vdwg.mxu0
        %v4545 = vadd.f32 %v822, %v4531
        %v4546 = vadd.f32 %v823, %v4534
        %v4547 = vadd.f32 %v824, %v4539
        %v4548 = vadd.f32 %v825, %v4542
        %v4549 = vld [vmem:[%s764] sm:$0x1]
        %v4550 = vld [vmem:[%s767] sm:$0x1]
        %4551 = vadd.xlane.f32.xlu0 %v4545
        %v4552 = vpop.xlane.xlu0 %4551
        %4553 = vadd.xlane.f32.xlu0 %v4546
        %v4554 = vpop.xlane.xlu0 %4553
        %4555 = vadd.xlane.f32.xlu0 %v4547
        %v4556 = vpop.xlane.xlu0 %4555
        %4557 = vadd.xlane.f32.xlu0 %v4548
        %v4558 = vpop.xlane.xlu0 %4557
        %v4559 = vmul.f32 %v4552, %v836
        %v4560 = vmul.f32 %v4554, %v836
        %v4561 = vmul.f32 %v4556, %v836
        %v4562 = vmul.f32 %v4558, %v836
        %v4563 = vsub.f32 %v4545, %v4559
        %v4564 = vsub.f32 %v4546, %v4560
        %v4565 = vsub.f32 %v4547, %v4561
        %v4566 = vsub.f32 %v4548, %v4562
        %v4567 = vmul.f32 %v4563, %v4563
        %v4568 = vmul.f32 %v4564, %v4564
        %v4569 = vmul.f32 %v4565, %v4565
        %v4570 = vmul.f32 %v4566, %v4566
        %4571 = vadd.xlane.f32.xlu0 %v4567
        %v4572 = vpop.xlane.xlu0 %4571
        %4573 = vadd.xlane.f32.xlu0 %v4568
        %v4574 = vpop.xlane.xlu0 %4573
        %4575 = vadd.xlane.f32.xlu0 %v4569
        %v4576 = vpop.xlane.xlu0 %4575
        %4577 = vadd.xlane.f32.xlu0 %v4570
        %v4578 = vpop.xlane.xlu0 %4577
        %v4579 = vmul.f32 %v4572, %v836
        %v4580 = vmul.f32 %v4574, %v836
        %v4581 = vmul.f32 %v4576, %v836
        %v4582 = vmul.f32 %v4578, %v836
        %v4583 = vadd.f32 %v4579, 1e-12
        %v4584 = vadd.f32 %v4580, 1e-12
        %v4585 = vadd.f32 %v4581, 1e-12
        %v4586 = vadd.f32 %v4582, 1e-12
        %v4587 = vrsqrt.pop %v4583
        %v4588 = vrsqrt.pop %v4584
        %v4589 = vrsqrt.pop %v4585
        %v4590 = vrsqrt.pop %v4586
        %v4591 = vmul.f32 %v4563, %v4587
        %v4592 = vmul.f32 %v4564, %v4588
        %v4593 = vmul.f32 %v4565, %v4589
        %v4594 = vmul.f32 %v4566, %v4590
        %v4596 = vlaneseq
        %v4597 = vshrl.u32 %v4596, 7
        %v4598 = vsub.s32 0, %v4597
        %v4599 = vrot.slane %v4549, %v4598
        %v4601 = vmul.f32 %v4591, %v4599
        %v4602 = vmul.f32 %v4592, %v4599
        %v4603 = vmul.f32 %v4593, %v4599
        %v4604 = vmul.f32 %v4594, %v4599
        %v4606 = vlaneseq
        %v4607 = vshrl.u32 %v4606, 7
        %v4608 = vsub.s32 0, %v4607
        %v4609 = vrot.slane %v4550, %v4608
        %v4611 = vadd.f32 %v4601, %v4609
        %v4612 = vadd.f32 %v4602, %v4609
        %v4613 = vadd.f32 %v4603, %v4609
        %v4614 = vadd.f32 %v4604, %v4609
        %v4615 = vpack.c.bf16 %v4612, %v4611
        %v4616 = vpack.c.bf16 %v4614, %v4613
        %v4617 = vld [vmem:[%s655] sm:$0xff]
        %v4618 = vld [vmem:[%s655 + $0x8] sm:$0xff]
        %v4619 = vld [vmem:[%s655 + $0x10] sm:$0xff]
        %v4620 = vld [vmem:[%s655 + $0x18] sm:$0xff]
        %v4621 = vld [vmem:[%s655 + $0x20] sm:$0xff]
        %v4622 = vld [vmem:[%s655 + $0x28] sm:$0xff]
        %v4623 = vld [vmem:[%s655 + $0x30] sm:$0xff]
        %v4624 = vld [vmem:[%s655 + $0x38] sm:$0xff]
        %v4625 = vld [vmem:[%s655 + $0x40] sm:$0xff]
        %v4626 = vld [vmem:[%s655 + $0x48] sm:$0xff]
        %v4627 = vld [vmem:[%s655 + $0x50] sm:$0xff]
        %v4628 = vld [vmem:[%s655 + $0x58] sm:$0xff]
        %v4629 = vld [vmem:[%s655 + $0x60] sm:$0xff]
        %v4630 = vld [vmem:[%s655 + $0x68] sm:$0xff]
        %v4631 = vld [vmem:[%s655 + $0x70] sm:$0xff]
        %v4632 = vld [vmem:[%s655 + $0x78] sm:$0xff]
        %v4633 = vld [vmem:[%s655 + $0x80] sm:$0xff]
        %v4634 = vld [vmem:[%s655 + $0x88] sm:$0xff]
        %v4635 = vld [vmem:[%s655 + $0x90] sm:$0xff]
        %v4636 = vld [vmem:[%s655 + $0x98] sm:$0xff]
        %v4637 = vld [vmem:[%s655 + $0xa0] sm:$0xff]
        %v4638 = vld [vmem:[%s655 + $0xa8] sm:$0xff]
        %v4639 = vld [vmem:[%s655 + $0xb0] sm:$0xff]
        %v4640 = vld [vmem:[%s655 + $0xb8] sm:$0xff]
        %v4641 = vld [vmem:[%s655 + $0xc0] sm:$0xff]
        %v4642 = vld [vmem:[%s655 + $0xc8] sm:$0xff]
        %v4643 = vld [vmem:[%s655 + $0xd0] sm:$0xff]
        %v4644 = vld [vmem:[%s655 + $0xd8] sm:$0xff]
        %v4645 = vld [vmem:[%s655 + $0xe0] sm:$0xff]
        %v4646 = vld [vmem:[%s655 + $0xe8] sm:$0xff]
        %v4647 = vld [vmem:[%s655 + $0xf0] sm:$0xff]
        %v4648 = vld [vmem:[%s655 + $0xf8] sm:$0xff]
        %v4649 = vld [vmem:[%s771] sm:$0xf]
        %v4651 = vlaneseq
        %v4652 = vshrl.u32 %v4651, 7
        %v4653 = vsub.s32 0, %v4652
        %v4654 = vrot.slane %v4649, %v4653
        %v4655 = vlaneseq
        %v4656 = vshrl.u32 %v4655, 7
        %v4657 = vsub.s32 1, %v4656
        %v4658 = vrot.slane %v4649, %v4657
        %v4659 = vlaneseq
        %v4660 = vshrl.u32 %v4659, 7
        %v4661 = vsub.s32 2, %v4660
        %v4662 = vrot.slane %v4649, %v4661
        %v4663 = vlaneseq
        %v4664 = vshrl.u32 %v4663, 7
        %v4665 = vsub.s32 3, %v4664
        %v4666 = vrot.slane %v4649, %v4665
        %v4703 = vunpack.c.l.b16 %v4617
        %v4704 = vunpack.c.h.b16 %v4617
        %v4705 = vunpack.c.l.b16 %v4618
        %v4706 = vunpack.c.h.b16 %v4618
        %v4707 = vunpack.c.l.b16 %v4619
        %v4708 = vunpack.c.h.b16 %v4619
        %v4709 = vunpack.c.l.b16 %v4620
        %v4710 = vunpack.c.h.b16 %v4620
        %v4711 = vunpack.c.l.b16 %v4621
        %v4712 = vunpack.c.h.b16 %v4621
        %v4713 = vunpack.c.l.b16 %v4622
        %v4714 = vunpack.c.h.b16 %v4622
        %v4715 = vunpack.c.l.b16 %v4623
        %v4716 = vunpack.c.h.b16 %v4623
        %v4717 = vunpack.c.l.b16 %v4624
        %v4718 = vunpack.c.h.b16 %v4624
        %v4719 = vunpack.c.l.b16 %v4625
        %v4720 = vunpack.c.h.b16 %v4625
        %v4721 = vunpack.c.l.b16 %v4626
        %v4722 = vunpack.c.h.b16 %v4626
        %v4723 = vunpack.c.l.b16 %v4627
        %v4724 = vunpack.c.h.b16 %v4627
        %v4725 = vunpack.c.l.b16 %v4628
        %v4726 = vunpack.c.h.b16 %v4628
        %v4727 = vunpack.c.l.b16 %v4629
        %v4728 = vunpack.c.h.b16 %v4629
        %v4729 = vunpack.c.l.b16 %v4630
        %v4730 = vunpack.c.h.b16 %v4630
        %v4731 = vunpack.c.l.b16 %v4631
        %v4732 = vunpack.c.h.b16 %v4631
        %v4733 = vunpack.c.l.b16 %v4632
        %v4734 = vunpack.c.h.b16 %v4632
        %v4735 = vunpack.c.l.b16 %v4633
        %v4736 = vunpack.c.h.b16 %v4633
        %v4737 = vunpack.c.l.b16 %v4634
        %v4738 = vunpack.c.h.b16 %v4634
        %v4739 = vunpack.c.l.b16 %v4635
        %v4740 = vunpack.c.h.b16 %v4635
        %v4741 = vunpack.c.l.b16 %v4636
        %v4742 = vunpack.c.h.b16 %v4636
        %v4743 = vunpack.c.l.b16 %v4637
        %v4744 = vunpack.c.h.b16 %v4637
        %v4745 = vunpack.c.l.b16 %v4638
        %v4746 = vunpack.c.h.b16 %v4638
        %v4747 = vunpack.c.l.b16 %v4639
        %v4748 = vunpack.c.h.b16 %v4639
        %v4749 = vunpack.c.l.b16 %v4640
        %v4750 = vunpack.c.h.b16 %v4640
        %v4751 = vunpack.c.l.b16 %v4641
        %v4752 = vunpack.c.h.b16 %v4641
        %v4753 = vunpack.c.l.b16 %v4642
        %v4754 = vunpack.c.h.b16 %v4642
        %v4755 = vunpack.c.l.b16 %v4643
        %v4756 = vunpack.c.h.b16 %v4643
        %v4757 = vunpack.c.l.b16 %v4644
        %v4758 = vunpack.c.h.b16 %v4644
        %v4759 = vunpack.c.l.b16 %v4645
        %v4760 = vunpack.c.h.b16 %v4645
        %v4761 = vunpack.c.l.b16 %v4646
        %v4762 = vunpack.c.h.b16 %v4646
        %v4763 = vunpack.c.l.b16 %v4647
        %v4764 = vunpack.c.h.b16 %v4647
        %v4765 = vunpack.c.l.b16 %v4648
        %v4766 = vunpack.c.h.b16 %v4648
        %v4767 = vpack.c.b16 %v4707, %v4703
        %v4768 = vpack.c.b16 %v4708, %v4704
        %v4769 = vpack.c.b16 %v4709, %v4705
        %v4770 = vpack.c.b16 %v4710, %v4706
        %v4771 = vpack.c.b16 %v4715, %v4711
        %v4772 = vpack.c.b16 %v4716, %v4712
        %v4773 = vpack.c.b16 %v4717, %v4713
        %v4774 = vpack.c.b16 %v4718, %v4714
        %v4775 = vpack.c.b16 %v4723, %v4719
        %v4776 = vpack.c.b16 %v4724, %v4720
        %v4777 = vpack.c.b16 %v4725, %v4721
        %v4778 = vpack.c.b16 %v4726, %v4722
        %v4779 = vpack.c.b16 %v4731, %v4727
        %v4780 = vpack.c.b16 %v4732, %v4728
        %v4781 = vpack.c.b16 %v4733, %v4729
        %v4782 = vpack.c.b16 %v4734, %v4730
        %v4783 = vpack.c.b16 %v4739, %v4735
        %v4784 = vpack.c.b16 %v4740, %v4736
        %v4785 = vpack.c.b16 %v4741, %v4737
        %v4786 = vpack.c.b16 %v4742, %v4738
        %v4787 = vpack.c.b16 %v4747, %v4743
        %v4788 = vpack.c.b16 %v4748, %v4744
        %v4789 = vpack.c.b16 %v4749, %v4745
        %v4790 = vpack.c.b16 %v4750, %v4746
        %v4791 = vpack.c.b16 %v4755, %v4751
        %v4792 = vpack.c.b16 %v4756, %v4752
        %v4793 = vpack.c.b16 %v4757, %v4753
        %v4794 = vpack.c.b16 %v4758, %v4754
        %v4795 = vpack.c.b16 %v4763, %v4759
        %v4796 = vpack.c.b16 %v4764, %v4760
        %v4797 = vpack.c.b16 %v4765, %v4761
        %v4798 = vpack.c.b16 %v4766, %v4762
        %4831 = vmatprep.subr.bf16.mxu0 %v4796
        %4832 = vmatpush1.bf16.msra.mxu0 %v4795
        %4833 = vmatprep.subr.bf16.mxu0 %v4792
        %4834 = vmatpush1.bf16.msra.mxu0 %v4791
        %4835 = vmatprep.subr.bf16.mxu0 %v4788
        %4836 = vmatpush1.bf16.msra.mxu0 %v4787
        %4837 = vmatprep.subr.bf16.mxu0 %v4784
        %4838 = vmatpush1.bf16.msra.mxu0 %v4783
        %4839 = vmatprep.subr.bf16.mxu0 %v4780
        %4840 = vmatpush1.bf16.msra.mxu0 %v4779
        %4841 = vmatprep.subr.bf16.mxu0 %v4776
        %4842 = vmatpush1.bf16.msra.mxu0 %v4775
        %4843 = vmatprep.subr.bf16.mxu0 %v4772
        %4844 = vmatpush1.bf16.msra.mxu0 %v4771
        %4845 = vmatprep.subr.bf16.mxu0 %v4768
        %4846 = vmatpush1.bf16.msra.mxu0 %v4767
        %4847 = vmatprep.subr.bf16.mxu0 0
        %4848 = vmatpush2.bf16.msra.mxu0 0
        %4849 = vmatprep.subr.bf16.mxu0 0
        %4850 = vmatpush2.bf16.msra.mxu0 0
        %4851 = vmatprep.subr.bf16.mxu0 0
        %4852 = vmatpush2.bf16.msra.mxu0 0
        %4853 = vmatprep.subr.bf16.mxu0 0
        %4854 = vmatpush2.bf16.msra.mxu0 0
        %4855 = vmatprep.subr.bf16.mxu0 0
        %4856 = vmatpush2.bf16.msra.mxu0 0
        %4857 = vmatprep.subr.bf16.mxu0 0
        %4858 = vmatpush2.bf16.msra.mxu0 0
        %4859 = vmatprep.subr.bf16.mxu0 0
        %4860 = vmatpush2.bf16.msra.mxu0 0
        %4861 = vmatprep.subr.bf16.mxu0 0
        %4862 = vmatpush2.bf16.msra.mxu0 0
        %4863 = vmatprep.mubr.bf16.mxu0 0
        %4864 = vmatmul.mubr.bf16.gmra.mxu0 %v4615
        %v4865 = vpop.f32.mrf.mxu0
        %v4866 = vadd.f32 %v4654, %v4865
        %v4867 = vpop.f32.mrf.mxu0
        %v4868 = vadd.f32 %v4658, %v4867
        %v4869 = vpop.f32.mrf.mxu0
        %v4870 = vadd.f32 %v4654, %v4869
        %v4871 = vpop.f32.mrf.mxu0
        %v4872 = vadd.f32 %v4658, %v4871
        %4873 = vmatprep.mubr.bf16.mxu0 0
        %4874 = vmatmul.mubr.bf16.gmra.mxu0 %v4616
        %v4875 = vpop.f32.mrf.mxu0
        %v4876 = vadd.f32 %v4654, %v4875
        %v4877 = vpop.f32.mrf.mxu0
        %v4878 = vadd.f32 %v4658, %v4877
        %v4879 = vpop.f32.mrf.mxu0
        %v4880 = vadd.f32 %v4654, %v4879
        %v4881 = vpop.f32.mrf.mxu0
        %v4882 = vadd.f32 %v4658, %v4881
        %4883 = vdwg.mxu0
        %4884 = vmatprep.subr.bf16.mxu0 %v4798
        %4885 = vmatpush1.bf16.msra.mxu0 %v4797
        %4886 = vmatprep.subr.bf16.mxu0 %v4794
        %4887 = vmatpush1.bf16.msra.mxu0 %v4793
        %4888 = vmatprep.subr.bf16.mxu0 %v4790
        %4889 = vmatpush1.bf16.msra.mxu0 %v4789
        %4890 = vmatprep.subr.bf16.mxu0 %v4786
        %4891 = vmatpush1.bf16.msra.mxu0 %v4785
        %4892 = vmatprep.subr.bf16.mxu0 %v4782
        %4893 = vmatpush1.bf16.msra.mxu0 %v4781
        %4894 = vmatprep.subr.bf16.mxu0 %v4778
        %4895 = vmatpush1.bf16.msra.mxu0 %v4777
        %4896 = vmatprep.subr.bf16.mxu0 %v4774
        %4897 = vmatpush1.bf16.msra.mxu0 %v4773
        %4898 = vmatprep.subr.bf16.mxu0 %v4770
        %4899 = vmatpush1.bf16.msra.mxu0 %v4769
        %4900 = vmatprep.subr.bf16.mxu0 0
        %4901 = vmatpush2.bf16.msra.mxu0 0
        %4902 = vmatprep.subr.bf16.mxu0 0
        %4903 = vmatpush2.bf16.msra.mxu0 0
        %4904 = vmatprep.subr.bf16.mxu0 0
        %4905 = vmatpush2.bf16.msra.mxu0 0
        %4906 = vmatprep.subr.bf16.mxu0 0
        %4907 = vmatpush2.bf16.msra.mxu0 0
        %4908 = vmatprep.subr.bf16.mxu0 0
        %4909 = vmatpush2.bf16.msra.mxu0 0
        %4910 = vmatprep.subr.bf16.mxu0 0
        %4911 = vmatpush2.bf16.msra.mxu0 0
        %4912 = vmatprep.subr.bf16.mxu0 0
        %4913 = vmatpush2.bf16.msra.mxu0 0
        %4914 = vmatprep.subr.bf16.mxu0 0
        %4915 = vmatpush2.bf16.msra.mxu0 0
        %4916 = vmatprep.mubr.bf16.mxu0 0
        %4917 = vmatmul.mubr.bf16.gmra.mxu0 %v4615
        %v4918 = vpop.f32.mrf.mxu0
        %v4919 = vadd.f32 %v4662, %v4918
        %v4920 = vpop.f32.mrf.mxu0
        %v4921 = vadd.f32 %v4666, %v4920
        %v4922 = vpop.f32.mrf.mxu0
        %v4923 = vadd.f32 %v4662, %v4922
        %v4924 = vpop.f32.mrf.mxu0
        %v4925 = vadd.f32 %v4666, %v4924
        %4926 = vmatprep.mubr.bf16.mxu0 0
        %4927 = vmatmul.mubr.bf16.gmra.mxu0 %v4616
        %v4928 = vpop.f32.mrf.mxu0
        %v4929 = vadd.f32 %v4662, %v4928
        %v4930 = vpop.f32.mrf.mxu0
        %v4931 = vadd.f32 %v4666, %v4930
        %v4932 = vpop.f32.mrf.mxu0
        %v4933 = vadd.f32 %v4662, %v4932
        %v4934 = vpop.f32.mrf.mxu0
        %v4935 = vadd.f32 %v4666, %v4934
        %4936 = vdwg.mxu0
        %v4937 = vmul.f32 %v4866, %v4866
        %v4938 = vmul.f32 %v4868, %v4868
        %v4939 = vmul.f32 %v4919, %v4919
        %v4940 = vmul.f32 %v4921, %v4921
        %v4941 = vmul.f32 %v4870, %v4870
        %v4942 = vmul.f32 %v4872, %v4872
        %v4943 = vmul.f32 %v4923, %v4923
        %v4944 = vmul.f32 %v4925, %v4925
        %v4945 = vmul.f32 %v4876, %v4876
        %v4946 = vmul.f32 %v4878, %v4878
        %v4947 = vmul.f32 %v4929, %v4929
        %v4948 = vmul.f32 %v4931, %v4931
        %v4949 = vmul.f32 %v4880, %v4880
        %v4950 = vmul.f32 %v4882, %v4882
        %v4951 = vmul.f32 %v4933, %v4933
        %v4952 = vmul.f32 %v4935, %v4935
        %v4953 = vmul.f32 %v4866, %v4937
        %v4954 = vmul.f32 %v4868, %v4938
        %v4955 = vmul.f32 %v4919, %v4939
        %v4956 = vmul.f32 %v4921, %v4940
        %v4957 = vmul.f32 %v4870, %v4941
        %v4958 = vmul.f32 %v4872, %v4942
        %v4959 = vmul.f32 %v4923, %v4943
        %v4960 = vmul.f32 %v4925, %v4944
        %v4961 = vmul.f32 %v4876, %v4945
        %v4962 = vmul.f32 %v4878, %v4946
        %v4963 = vmul.f32 %v4929, %v4947
        %v4964 = vmul.f32 %v4931, %v4948
        %v4965 = vmul.f32 %v4880, %v4949
        %v4966 = vmul.f32 %v4882, %v4950
        %v4967 = vmul.f32 %v4933, %v4951
        %v4968 = vmul.f32 %v4935, %v4952
        %v4969 = vmul.f32 %v4953, 0.044715
        %v4970 = vmul.f32 %v4954, 0.044715
        %v4971 = vmul.f32 %v4955, 0.044715
        %v4972 = vmul.f32 %v4956, 0.044715
        %v4973 = vmul.f32 %v4957, 0.044715
        %v4974 = vmul.f32 %v4958, 0.044715
        %v4975 = vmul.f32 %v4959, 0.044715
        %v4976 = vmul.f32 %v4960, 0.044715
        %v4977 = vmul.f32 %v4961, 0.044715
        %v4978 = vmul.f32 %v4962, 0.044715
        %v4979 = vmul.f32 %v4963, 0.044715
        %v4980 = vmul.f32 %v4964, 0.044715
        %v4981 = vmul.f32 %v4965, 0.044715
        %v4982 = vmul.f32 %v4966, 0.044715
        %v4983 = vmul.f32 %v4967, 0.044715
        %v4984 = vmul.f32 %v4968, 0.044715
        %v4985 = vadd.f32 %v4866, %v4969
        %v4986 = vadd.f32 %v4868, %v4970
        %v4987 = vadd.f32 %v4919, %v4971
        %v4988 = vadd.f32 %v4921, %v4972
        %v4989 = vadd.f32 %v4870, %v4973
        %v4990 = vadd.f32 %v4872, %v4974
        %v4991 = vadd.f32 %v4923, %v4975
        %v4992 = vadd.f32 %v4925, %v4976
        %v4993 = vadd.f32 %v4876, %v4977
        %v4994 = vadd.f32 %v4878, %v4978
        %v4995 = vadd.f32 %v4929, %v4979
        %v4996 = vadd.f32 %v4931, %v4980
        %v4997 = vadd.f32 %v4880, %v4981
        %v4998 = vadd.f32 %v4882, %v4982
        %v4999 = vadd.f32 %v4933, %v4983
        %v5000 = vadd.f32 %v4935, %v4984
        %v5001 = vmul.f32 %v4985, 0.7978846
        %v5002 = vmul.f32 %v4986, 0.7978846
        %v5003 = vmul.f32 %v4987, 0.7978846
        %v5004 = vmul.f32 %v4988, 0.7978846
        %v5005 = vmul.f32 %v4989, 0.7978846
        %v5006 = vmul.f32 %v4990, 0.7978846
        %v5007 = vmul.f32 %v4991, 0.7978846
        %v5008 = vmul.f32 %v4992, 0.7978846
        %v5009 = vmul.f32 %v4993, 0.7978846
        %v5010 = vmul.f32 %v4994, 0.7978846
        %v5011 = vmul.f32 %v4995, 0.7978846
        %v5012 = vmul.f32 %v4996, 0.7978846
        %v5013 = vmul.f32 %v4997, 0.7978846
        %v5014 = vmul.f32 %v4998, 0.7978846
        %v5015 = vmul.f32 %v4999, 0.7978846
        %v5016 = vmul.f32 %v5000, 0.7978846
        %v5017 = vtanh.pop %v5001
        %v5018 = vtanh.pop %v5002
        %v5019 = vtanh.pop %v5003
        %v5020 = vtanh.pop %v5004
        %v5021 = vtanh.pop %v5005
        %v5022 = vtanh.pop %v5006
        %v5023 = vtanh.pop %v5007
        %v5024 = vtanh.pop %v5008
        %v5025 = vtanh.pop %v5009
        %v5026 = vtanh.pop %v5010
        %v5027 = vtanh.pop %v5011
        %v5028 = vtanh.pop %v5012
        %v5029 = vtanh.pop %v5013
        %v5030 = vtanh.pop %v5014
        %v5031 = vtanh.pop %v5015
        %v5032 = vtanh.pop %v5016
        %v5033 = vadd.f32 %v5017, 1.0
        %v5034 = vadd.f32 %v5018, 1.0
        %v5035 = vadd.f32 %v5019, 1.0
        %v5036 = vadd.f32 %v5020, 1.0
        %v5037 = vadd.f32 %v5021, 1.0
        %v5038 = vadd.f32 %v5022, 1.0
        %v5039 = vadd.f32 %v5023, 1.0
        %v5040 = vadd.f32 %v5024, 1.0
        %v5041 = vadd.f32 %v5025, 1.0
        %v5042 = vadd.f32 %v5026, 1.0
        %v5043 = vadd.f32 %v5027, 1.0
        %v5044 = vadd.f32 %v5028, 1.0
        %v5045 = vadd.f32 %v5029, 1.0
        %v5046 = vadd.f32 %v5030, 1.0
        %v5047 = vadd.f32 %v5031, 1.0
        %v5048 = vadd.f32 %v5032, 1.0
        %v5049 = vmul.f32 %v5033, 0.5
        %v5050 = vmul.f32 %v5034, 0.5
        %v5051 = vmul.f32 %v5035, 0.5
        %v5052 = vmul.f32 %v5036, 0.5
        %v5053 = vmul.f32 %v5037, 0.5
        %v5054 = vmul.f32 %v5038, 0.5
        %v5055 = vmul.f32 %v5039, 0.5
        %v5056 = vmul.f32 %v5040, 0.5
        %v5057 = vmul.f32 %v5041, 0.5
        %v5058 = vmul.f32 %v5042, 0.5
        %v5059 = vmul.f32 %v5043, 0.5
        %v5060 = vmul.f32 %v5044, 0.5
        %v5061 = vmul.f32 %v5045, 0.5
        %v5062 = vmul.f32 %v5046, 0.5
        %v5063 = vmul.f32 %v5047, 0.5
        %v5064 = vmul.f32 %v5048, 0.5
        %v5065 = vmul.f32 %v4866, %v5049
        %v5066 = vmul.f32 %v4868, %v5050
        %v5067 = vmul.f32 %v4919, %v5051
        %v5068 = vmul.f32 %v4921, %v5052
        %v5069 = vmul.f32 %v4870, %v5053
        %v5070 = vmul.f32 %v4872, %v5054
        %v5071 = vmul.f32 %v4923, %v5055
        %v5072 = vmul.f32 %v4925, %v5056
        %v5073 = vmul.f32 %v4876, %v5057
        %v5074 = vmul.f32 %v4878, %v5058
        %v5075 = vmul.f32 %v4929, %v5059
        %v5076 = vmul.f32 %v4931, %v5060
        %v5077 = vmul.f32 %v4880, %v5061
        %v5078 = vmul.f32 %v4882, %v5062
        %v5079 = vmul.f32 %v4933, %v5063
        %v5080 = vmul.f32 %v4935, %v5064
        %v5081 = vpack.c.bf16 %v5069, %v5065
        %v5082 = vpack.c.bf16 %v5070, %v5066
        %v5083 = vpack.c.bf16 %v5071, %v5067
        %v5084 = vpack.c.bf16 %v5072, %v5068
        %v5085 = vpack.c.bf16 %v5077, %v5073
        %v5086 = vpack.c.bf16 %v5078, %v5074
        %v5087 = vpack.c.bf16 %v5079, %v5075
        %v5088 = vpack.c.bf16 %v5080, %v5076
        %v5089 = vld [vmem:[%s664] sm:$0xf]
        %v5090 = vld [vmem:[%s664 + $0x4] sm:$0xf]
        %v5091 = vld [vmem:[%s664 + $0x8] sm:$0xf]
        %v5092 = vld [vmem:[%s664 + $0xc] sm:$0xf]
        %v5093 = vld [vmem:[%s664 + $0x10] sm:$0xf]
        %v5094 = vld [vmem:[%s664 + $0x14] sm:$0xf]
        %v5095 = vld [vmem:[%s664 + $0x18] sm:$0xf]
        %v5096 = vld [vmem:[%s664 + $0x1c] sm:$0xf]
        %v5097 = vld [vmem:[%s664 + $0x20] sm:$0xf]
        %v5098 = vld [vmem:[%s664 + $0x24] sm:$0xf]
        %v5099 = vld [vmem:[%s664 + $0x28] sm:$0xf]
        %v5100 = vld [vmem:[%s664 + $0x2c] sm:$0xf]
        %v5101 = vld [vmem:[%s664 + $0x30] sm:$0xf]
        %v5102 = vld [vmem:[%s664 + $0x34] sm:$0xf]
        %v5103 = vld [vmem:[%s664 + $0x38] sm:$0xf]
        %v5104 = vld [vmem:[%s664 + $0x3c] sm:$0xf]
        %v5105 = vld [vmem:[%s664 + $0x40] sm:$0xf]
        %v5106 = vld [vmem:[%s664 + $0x44] sm:$0xf]
        %v5107 = vld [vmem:[%s664 + $0x48] sm:$0xf]
        %v5108 = vld [vmem:[%s664 + $0x4c] sm:$0xf]
        %v5109 = vld [vmem:[%s664 + $0x50] sm:$0xf]
        %v5110 = vld [vmem:[%s664 + $0x54] sm:$0xf]
        %v5111 = vld [vmem:[%s664 + $0x58] sm:$0xf]
        %v5112 = vld [vmem:[%s664 + $0x5c] sm:$0xf]
        %v5113 = vld [vmem:[%s664 + $0x60] sm:$0xf]
        %v5114 = vld [vmem:[%s664 + $0x64] sm:$0xf]
        %v5115 = vld [vmem:[%s664 + $0x68] sm:$0xf]
        %v5116 = vld [vmem:[%s664 + $0x6c] sm:$0xf]
        %v5117 = vld [vmem:[%s664 + $0x70] sm:$0xf]
        %v5118 = vld [vmem:[%s664 + $0x74] sm:$0xf]
        %v5119 = vld [vmem:[%s664 + $0x78] sm:$0xf]
        %v5120 = vld [vmem:[%s664 + $0x7c] sm:$0xf]
        %v5121 = vld [vmem:[%s664 + $0x80] sm:$0xf]
        %v5122 = vld [vmem:[%s664 + $0x84] sm:$0xf]
        %v5123 = vld [vmem:[%s664 + $0x88] sm:$0xf]
        %v5124 = vld [vmem:[%s664 + $0x8c] sm:$0xf]
        %v5125 = vld [vmem:[%s664 + $0x90] sm:$0xf]
        %v5126 = vld [vmem:[%s664 + $0x94] sm:$0xf]
        %v5127 = vld [vmem:[%s664 + $0x98] sm:$0xf]
        %v5128 = vld [vmem:[%s664 + $0x9c] sm:$0xf]
        %v5129 = vld [vmem:[%s664 + $0xa0] sm:$0xf]
        %v5130 = vld [vmem:[%s664 + $0xa4] sm:$0xf]
        %v5131 = vld [vmem:[%s664 + $0xa8] sm:$0xf]
        %v5132 = vld [vmem:[%s664 + $0xac] sm:$0xf]
        %v5133 = vld [vmem:[%s664 + $0xb0] sm:$0xf]
        %v5134 = vld [vmem:[%s664 + $0xb4] sm:$0xf]
        %v5135 = vld [vmem:[%s664 + $0xb8] sm:$0xf]
        %v5136 = vld [vmem:[%s664 + $0xbc] sm:$0xf]
        %v5137 = vld [vmem:[%s664 + $0xc0] sm:$0xf]
        %v5138 = vld [vmem:[%s664 + $0xc4] sm:$0xf]
        %v5139 = vld [vmem:[%s664 + $0xc8] sm:$0xf]
        %v5140 = vld [vmem:[%s664 + $0xcc] sm:$0xf]
        %v5141 = vld [vmem:[%s664 + $0xd0] sm:$0xf]
        %v5142 = vld [vmem:[%s664 + $0xd4] sm:$0xf]
        %v5143 = vld [vmem:[%s664 + $0xd8] sm:$0xf]
        %v5144 = vld [vmem:[%s664 + $0xdc] sm:$0xf]
        %v5145 = vld [vmem:[%s664 + $0xe0] sm:$0xf]
        %v5146 = vld [vmem:[%s664 + $0xe4] sm:$0xf]
        %v5147 = vld [vmem:[%s664 + $0xe8] sm:$0xf]
        %v5148 = vld [vmem:[%s664 + $0xec] sm:$0xf]
        %v5149 = vld [vmem:[%s664 + $0xf0] sm:$0xf]
        %v5150 = vld [vmem:[%s664 + $0xf4] sm:$0xf]
        %v5151 = vld [vmem:[%s664 + $0xf8] sm:$0xf]
        %v5152 = vld [vmem:[%s664 + $0xfc] sm:$0xf]
        %v5153 = vld [vmem:[%s774] sm:$0x1]
        %v5155 = vlaneseq
        %v5156 = vshrl.u32 %v5155, 7
        %v5157 = vsub.s32 0, %v5156
        %v5158 = vrot.slane %v5153, %v5157
        %v5224 = vunpack.c.l.b16 %v5089
        %v5225 = vunpack.c.l.b16 %v5090
        %v5226 = vunpack.c.l.b16 %v5091
        %v5227 = vunpack.c.l.b16 %v5092
        %v5228 = vunpack.c.l.b16 %v5093
        %v5229 = vunpack.c.l.b16 %v5094
        %v5230 = vunpack.c.l.b16 %v5095
        %v5231 = vunpack.c.l.b16 %v5096
        %v5232 = vunpack.c.l.b16 %v5097
        %v5233 = vunpack.c.l.b16 %v5098
        %v5234 = vunpack.c.l.b16 %v5099
        %v5235 = vunpack.c.l.b16 %v5100
        %v5236 = vunpack.c.l.b16 %v5101
        %v5237 = vunpack.c.l.b16 %v5102
        %v5238 = vunpack.c.l.b16 %v5103
        %v5239 = vunpack.c.l.b16 %v5104
        %v5240 = vunpack.c.l.b16 %v5105
        %v5241 = vunpack.c.l.b16 %v5106
        %v5242 = vunpack.c.l.b16 %v5107
        %v5243 = vunpack.c.l.b16 %v5108
        %v5244 = vunpack.c.l.b16 %v5109
        %v5245 = vunpack.c.l.b16 %v5110
        %v5246 = vunpack.c.l.b16 %v5111
        %v5247 = vunpack.c.l.b16 %v5112
        %v5248 = vunpack.c.l.b16 %v5113
        %v5249 = vunpack.c.l.b16 %v5114
        %v5250 = vunpack.c.l.b16 %v5115
        %v5251 = vunpack.c.l.b16 %v5116
        %v5252 = vunpack.c.l.b16 %v5117
        %v5253 = vunpack.c.l.b16 %v5118
        %v5254 = vunpack.c.l.b16 %v5119
        %v5255 = vunpack.c.l.b16 %v5120
        %v5256 = vunpack.c.l.b16 %v5121
        %v5257 = vunpack.c.l.b16 %v5122
        %v5258 = vunpack.c.l.b16 %v5123
        %v5259 = vunpack.c.l.b16 %v5124
        %v5260 = vunpack.c.l.b16 %v5125
        %v5261 = vunpack.c.l.b16 %v5126
        %v5262 = vunpack.c.l.b16 %v5127
        %v5263 = vunpack.c.l.b16 %v5128
        %v5264 = vunpack.c.l.b16 %v5129
        %v5265 = vunpack.c.l.b16 %v5130
        %v5266 = vunpack.c.l.b16 %v5131
        %v5267 = vunpack.c.l.b16 %v5132
        %v5268 = vunpack.c.l.b16 %v5133
        %v5269 = vunpack.c.l.b16 %v5134
        %v5270 = vunpack.c.l.b16 %v5135
        %v5271 = vunpack.c.l.b16 %v5136
        %v5272 = vunpack.c.l.b16 %v5137
        %v5273 = vunpack.c.l.b16 %v5138
        %v5274 = vunpack.c.l.b16 %v5139
        %v5275 = vunpack.c.l.b16 %v5140
        %v5276 = vunpack.c.l.b16 %v5141
        %v5277 = vunpack.c.l.b16 %v5142
        %v5278 = vunpack.c.l.b16 %v5143
        %v5279 = vunpack.c.l.b16 %v5144
        %v5280 = vunpack.c.l.b16 %v5145
        %v5281 = vunpack.c.l.b16 %v5146
        %v5282 = vunpack.c.l.b16 %v5147
        %v5283 = vunpack.c.l.b16 %v5148
        %v5284 = vunpack.c.l.b16 %v5149
        %v5285 = vunpack.c.l.b16 %v5150
        %v5286 = vunpack.c.l.b16 %v5151
        %v5287 = vunpack.c.l.b16 %v5152
        %v5288 = vpack.c.b16 %v5225, %v5224
        %v5289 = vpack.c.b16 %v5227, %v5226
        %v5290 = vpack.c.b16 %v5229, %v5228
        %v5291 = vpack.c.b16 %v5231, %v5230
        %v5292 = vpack.c.b16 %v5233, %v5232
        %v5293 = vpack.c.b16 %v5235, %v5234
        %v5294 = vpack.c.b16 %v5237, %v5236
        %v5295 = vpack.c.b16 %v5239, %v5238
        %v5296 = vpack.c.b16 %v5241, %v5240
        %v5297 = vpack.c.b16 %v5243, %v5242
        %v5298 = vpack.c.b16 %v5245, %v5244
        %v5299 = vpack.c.b16 %v5247, %v5246
        %v5300 = vpack.c.b16 %v5249, %v5248
        %v5301 = vpack.c.b16 %v5251, %v5250
        %v5302 = vpack.c.b16 %v5253, %v5252
        %v5303 = vpack.c.b16 %v5255, %v5254
        %v5304 = vpack.c.b16 %v5257, %v5256
        %v5305 = vpack.c.b16 %v5259, %v5258
        %v5306 = vpack.c.b16 %v5261, %v5260
        %v5307 = vpack.c.b16 %v5263, %v5262
        %v5308 = vpack.c.b16 %v5265, %v5264
        %v5309 = vpack.c.b16 %v5267, %v5266
        %v5310 = vpack.c.b16 %v5269, %v5268
        %v5311 = vpack.c.b16 %v5271, %v5270
        %v5312 = vpack.c.b16 %v5273, %v5272
        %v5313 = vpack.c.b16 %v5275, %v5274
        %v5314 = vpack.c.b16 %v5277, %v5276
        %v5315 = vpack.c.b16 %v5279, %v5278
        %v5316 = vpack.c.b16 %v5281, %v5280
        %v5317 = vpack.c.b16 %v5283, %v5282
        %v5318 = vpack.c.b16 %v5285, %v5284
        %v5319 = vpack.c.b16 %v5287, %v5286
        %5352 = vmatprep.subr.bf16.mxu0 0
        %5353 = vmatpush1.bf16.msra.mxu0 %v5295
        %5354 = vmatprep.subr.bf16.mxu0 0
        %5355 = vmatpush1.bf16.msra.mxu0 %v5294
        %5356 = vmatprep.subr.bf16.mxu0 0
        %5357 = vmatpush1.bf16.msra.mxu0 %v5293
        %5358 = vmatprep.subr.bf16.mxu0 0
        %5359 = vmatpush1.bf16.msra.mxu0 %v5292
        %5360 = vmatprep.subr.bf16.mxu0 0
        %5361 = vmatpush1.bf16.msra.mxu0 %v5291
        %5362 = vmatprep.subr.bf16.mxu0 0
        %5363 = vmatpush1.bf16.msra.mxu0 %v5290
        %5364 = vmatprep.subr.bf16.mxu0 0
        %5365 = vmatpush1.bf16.msra.mxu0 %v5289
        %5366 = vmatprep.subr.bf16.mxu0 0
        %5367 = vmatpush1.bf16.msra.mxu0 %v5288
        %5368 = vmatprep.subr.bf16.mxu0 0
        %5369 = vmatpush2.bf16.msra.mxu0 %v5303
        %5370 = vmatprep.subr.bf16.mxu0 0
        %5371 = vmatpush2.bf16.msra.mxu0 %v5302
        %5372 = vmatprep.subr.bf16.mxu0 0
        %5373 = vmatpush2.bf16.msra.mxu0 %v5301
        %5374 = vmatprep.subr.bf16.mxu0 0
        %5375 = vmatpush2.bf16.msra.mxu0 %v5300
        %5376 = vmatprep.subr.bf16.mxu0 0
        %5377 = vmatpush2.bf16.msra.mxu0 %v5299
        %5378 = vmatprep.subr.bf16.mxu0 0
        %5379 = vmatpush2.bf16.msra.mxu0 %v5298
        %5380 = vmatprep.subr.bf16.mxu0 0
        %5381 = vmatpush2.bf16.msra.mxu0 %v5297
        %5382 = vmatprep.subr.bf16.mxu0 0
        %5383 = vmatpush2.bf16.msra.mxu0 %v5296
        %5384 = vmatprep.mubr.bf16.mxu0 %v5082
        %5385 = vmatmul.mubr.bf16.gmra.mxu0 %v5081
        %v5386 = vpop.f32.mrf.mxu0
        %v5387 = vadd.f32 %v5158, %v5386
        %v5388 = vpop.f32.mrf.mxu0
        %v5389 = vpop.f32.mrf.mxu0
        %v5390 = vadd.f32 %v5158, %v5389
        %v5391 = vpop.f32.mrf.mxu0
        %5392 = vmatprep.mubr.bf16.mxu0 %v5086
        %5393 = vmatmul.mubr.bf16.gmra.mxu0 %v5085
        %v5394 = vpop.f32.mrf.mxu0
        %v5395 = vadd.f32 %v5158, %v5394
        %v5396 = vpop.f32.mrf.mxu0
        %v5397 = vpop.f32.mrf.mxu0
        %v5398 = vadd.f32 %v5158, %v5397
        %v5399 = vpop.f32.mrf.mxu0
        %5400 = vdwg.mxu0
        %5401 = vmatprep.subr.bf16.mxu0 0
        %5402 = vmatpush1.bf16.msra.mxu0 %v5311
        %5403 = vmatprep.subr.bf16.mxu0 0
        %5404 = vmatpush1.bf16.msra.mxu0 %v5310
        %5405 = vmatprep.subr.bf16.mxu0 0
        %5406 = vmatpush1.bf16.msra.mxu0 %v5309
        %5407 = vmatprep.subr.bf16.mxu0 0
        %5408 = vmatpush1.bf16.msra.mxu0 %v5308
        %5409 = vmatprep.subr.bf16.mxu0 0
        %5410 = vmatpush1.bf16.msra.mxu0 %v5307
        %5411 = vmatprep.subr.bf16.mxu0 0
        %5412 = vmatpush1.bf16.msra.mxu0 %v5306
        %5413 = vmatprep.subr.bf16.mxu0 0
        %5414 = vmatpush1.bf16.msra.mxu0 %v5305
        %5415 = vmatprep.subr.bf16.mxu0 0
        %5416 = vmatpush1.bf16.msra.mxu0 %v5304
        %5417 = vmatprep.subr.bf16.mxu0 0
        %5418 = vmatpush2.bf16.msra.mxu0 %v5319
        %5419 = vmatprep.subr.bf16.mxu0 0
        %5420 = vmatpush2.bf16.msra.mxu0 %v5318
        %5421 = vmatprep.subr.bf16.mxu0 0
        %5422 = vmatpush2.bf16.msra.mxu0 %v5317
        %5423 = vmatprep.subr.bf16.mxu0 0
        %5424 = vmatpush2.bf16.msra.mxu0 %v5316
        %5425 = vmatprep.subr.bf16.mxu0 0
        %5426 = vmatpush2.bf16.msra.mxu0 %v5315
        %5427 = vmatprep.subr.bf16.mxu0 0
        %5428 = vmatpush2.bf16.msra.mxu0 %v5314
        %5429 = vmatprep.subr.bf16.mxu0 0
        %5430 = vmatpush2.bf16.msra.mxu0 %v5313
        %5431 = vmatprep.subr.bf16.mxu0 0
        %5432 = vmatpush2.bf16.msra.mxu0 %v5312
        %5433 = vmatprep.mubr.bf16.mxu0 %v5084
        %5434 = vmatmul.mubr.bf16.gmra.mxu0 %v5083
        %v5435 = vpop.f32.mrf.mxu0
        %v5436 = vadd.f32 %v5387, %v5435
        %v5437 = vpop.f32.mrf.mxu0
        %v5438 = vpop.f32.mrf.mxu0
        %v5439 = vadd.f32 %v5390, %v5438
        %v5440 = vpop.f32.mrf.mxu0
        %5441 = vmatprep.mubr.bf16.mxu0 %v5088
        %5442 = vmatmul.mubr.bf16.gmra.mxu0 %v5087
        %v5443 = vpop.f32.mrf.mxu0
        %v5444 = vadd.f32 %v5395, %v5443
        %v5445 = vpop.f32.mrf.mxu0
        %v5446 = vpop.f32.mrf.mxu0
        %v5447 = vadd.f32 %v5398, %v5446
        %v5448 = vpop.f32.mrf.mxu0
        %5449 = vdwg.mxu0
        %v5450 = vadd.f32 %v4545, %v5436
        %v5451 = vadd.f32 %v4546, %v5439
        %v5452 = vadd.f32 %v4547, %v5444
        %v5453 = vadd.f32 %v4548, %v5447
        %p5454 = scmp.lt.s32.totalorder %s35, 1
        // Predicated region
        $region109: #{tpu_custom_call.1} parent=83 // pred_check
          %p5455 = pneg %p5454
        $region110: #{tpu_custom_call.1} parent=83 // pred_check_branch
          %5457 = sbr.rel (%p5455) target = $region112
        $region111: #{tpu_custom_call.1} parent=83 // pred_region
          %5458 = vst [vmem:[#allocation13] sm:$0xff] %v5450
          %5459 = vst [vmem:[#allocation13 + $0x8] sm:$0xff] %v5451
          %5460 = vst [vmem:[#allocation13 + $0x10] sm:$0xff] %v5452
          %5461 = vst [vmem:[#allocation13 + $0x18] sm:$0xff] %v5453
        $region112: #{tpu_custom_call.1} parent=83 // pred_fallthru
          _
        %p5462 = scmp.eq.s32.totalorder %s35, 1
        // Predicated region
        $region113: #{tpu_custom_call.1} parent=83 // pred_check
          %p5463 = pneg %p5462
        $region114: #{tpu_custom_call.1} parent=83 // pred_check_branch
          %5465 = sbr.rel (%p5463) target = $region116
        $region115: #{tpu_custom_call.1} parent=83 // pred_region
          %v5466 = vld [vmem:[%s14] sm:$0x1]
          %v5467 = vld [vmem:[%s15] sm:$0x1]
          %5468 = vadd.xlane.f32.xlu0 %v5450
          %v5469 = vpop.xlane.xlu0 %5468
          %5470 = vadd.xlane.f32.xlu0 %v5451
          %v5471 = vpop.xlane.xlu0 %5470
          %5472 = vadd.xlane.f32.xlu0 %v5452
          %v5473 = vpop.xlane.xlu0 %5472
          %5474 = vadd.xlane.f32.xlu0 %v5453
          %v5475 = vpop.xlane.xlu0 %5474
          %v5476 = vmul.f32 %v5469, %v836
          %v5477 = vmul.f32 %v5471, %v836
          %v5478 = vmul.f32 %v5473, %v836
          %v5479 = vmul.f32 %v5475, %v836
          %v5480 = vsub.f32 %v5450, %v5476
          %v5481 = vsub.f32 %v5451, %v5477
          %v5482 = vsub.f32 %v5452, %v5478
          %v5483 = vsub.f32 %v5453, %v5479
          %v5484 = vmul.f32 %v5480, %v5480
          %v5485 = vmul.f32 %v5481, %v5481
          %v5486 = vmul.f32 %v5482, %v5482
          %v5487 = vmul.f32 %v5483, %v5483
          %5488 = vadd.xlane.f32.xlu0 %v5484
          %v5489 = vpop.xlane.xlu0 %5488
          %5490 = vadd.xlane.f32.xlu0 %v5485
          %v5491 = vpop.xlane.xlu0 %5490
          %5492 = vadd.xlane.f32.xlu0 %v5486
          %v5493 = vpop.xlane.xlu0 %5492
          %5494 = vadd.xlane.f32.xlu0 %v5487
          %v5495 = vpop.xlane.xlu0 %5494
          %v5496 = vmul.f32 %v5489, %v836
          %v5497 = vmul.f32 %v5491, %v836
          %v5498 = vmul.f32 %v5493, %v836
          %v5499 = vmul.f32 %v5495, %v836
          %v5500 = vadd.f32 %v5496, 1e-12
          %v5501 = vadd.f32 %v5497, 1e-12
          %v5502 = vadd.f32 %v5498, 1e-12
          %v5503 = vadd.f32 %v5499, 1e-12
          %v5504 = vrsqrt.pop %v5500
          %v5505 = vrsqrt.pop %v5501
          %v5506 = vrsqrt.pop %v5502
          %v5507 = vrsqrt.pop %v5503
          %v5508 = vmul.f32 %v5480, %v5504
          %v5509 = vmul.f32 %v5481, %v5505
          %v5510 = vmul.f32 %v5482, %v5506
          %v5511 = vmul.f32 %v5483, %v5507
          %v5513 = vlaneseq
          %v5514 = vshrl.u32 %v5513, 7
          %v5515 = vsub.s32 0, %v5514
          %v5516 = vrot.slane %v5466, %v5515
          %v5518 = vmul.f32 %v5508, %v5516
          %v5519 = vmul.f32 %v5509, %v5516
          %v5520 = vmul.f32 %v5510, %v5516
          %v5521 = vmul.f32 %v5511, %v5516
          %v5523 = vlaneseq
          %v5524 = vshrl.u32 %v5523, 7
          %v5525 = vsub.s32 0, %v5524
          %v5526 = vrot.slane %v5467, %v5525
          %v5528 = vadd.f32 %v5518, %v5526
          %v5529 = vadd.f32 %v5519, %v5526
          %v5530 = vadd.f32 %v5520, %v5526
          %v5531 = vadd.f32 %v5521, %v5526
          %5532 = vst [vmem:[#allocation13] sm:$0xff] %v5528
          %5533 = vst [vmem:[#allocation13 + $0x8] sm:$0xff] %v5529
          %5534 = vst [vmem:[#allocation13 + $0x10] sm:$0xff] %v5530
          %5535 = vst [vmem:[#allocation13 + $0x18] sm:$0xff] %v5531
        $region116: #{tpu_custom_call.1} parent=83 // pred_fallthru
          _
        // Predicated region
        $region117: #{tpu_custom_call.1} parent=83 // pred_check
          %p5536 = pneg %p444
        $region118: #{tpu_custom_call.1} parent=83 // pred_check_branch
          %5538 = sbr.rel (%p5536) target = $region120
        $region119: #{tpu_custom_call.1} parent=83 // pred_region
          %s5540 = ssub.s32 512, 512
          %5541 = vsyncadd [#allocation6], %s5540
          %s5542 = sshll.u32 [#allocation13], 4
          %s5543 = int_to_ptr.vmem [resolvable:$true] %s5542
          %5548 = dma.vmem_to_hbm [thread:$0]  %s5543, 512, %s16, [#allocation6], 128, 128, 8
        $region120: #{tpu_custom_call.1} parent=83 // pred_fallthru
          _
        // Predicated region
        $region121: #{tpu_custom_call.1} parent=83 // pred_check
          %p5549 = pneg %p444
        $region122: #{tpu_custom_call.1} parent=83 // pred_check_branch
          %5551 = sbr.rel (%p5549) target = $region124
        $region123: #{tpu_custom_call.1} parent=83 // pred_region
          %5552 = dma.done [#allocation6], 512
        $region124: #{tpu_custom_call.1} parent=83 // pred_fallthru
          _
      $region84: #{tpu_custom_call.1} parent=5 // pred_fallthru
        _
      %p5553 = scmp.le.s32.totalorder 2, %s30
      // Predicated region
      $region125: #{tpu_custom_call.1} parent=5 // pred_check
        %p5554 = pneg %p5553
      $region126: #{tpu_custom_call.1} parent=5 // pred_check_branch
        %5556 = sbr.rel (%p5554) target = $region128
      $region127: #{tpu_custom_call.1} parent=5 // pred_region
        %s5557 = ssub.s32 %s30, 2
      $region128: #{tpu_custom_call.1} parent=5 // pred_fallthru
        _
    $region6: #{tpu_custom_call.1} parent=1 // loop_footer
      %s34 = sadd.s32 1, %s30
    $region7: #{tpu_custom_call.1} parent=1 // loop_footer_branch
      %29 = sbr.rel target = $region3
    $region8: #{tpu_custom_call.1} parent=1 // loop_exit
      _
    %5558 = vsyncpa [#allocation5], 1
    %s5559 = scalar_lea.sflag [#allocation5], 1
    %5560 = vsyncpa %s5559, 1
    %5561 = vsyncpa [#allocation8], 1
    %s5562 = scalar_lea.sflag [#allocation8], 1
    %5563 = vsyncpa %s5562, 1
    %5564 = vsyncpa [#allocation11], 1
    %s5565 = scalar_lea.sflag [#allocation11], 1
    %5566 = vsyncpa %s5565, 1
    %5567 = vsyncpa [#allocation6], 1
    %s5568 = scalar_lea.sflag [#allocation6], 1
    %5569 = vsyncpa %s5568, 1

</llo_original>
